<compile_context>
chip_gen: v7x
topology: tpu7x:2x2x1
jax: 0.10.0
libtpu: 0.0.40
codegen_flags: <defaults>
</compile_context>

<pallas_src>
import numpy as np
import jax
import jax.numpy as jnp
from jax.experimental import pallas as pl
from jax.experimental.pallas import tpu as pltpu

NEG_SLOPE = 0.01  # PyTorch nn.LeakyReLU default


def _leaky_relu(x):
    return jnp.where(x > 0, x, NEG_SLOPE * x)


def _pad128(n):
    return ((int(n) + 127) // 128) * 128


def _nbytes(a):
    return int(a.size) * jnp.dtype(a.dtype).itemsize


# ---------------------------------------------------------------------------
# Fused kernel
# ---------------------------------------------------------------------------
def _make_fused_kernel(*, K, L_enc, L_tr, n_steps, B_TILE, N, F_pad, Hp,
                       s_pad, cdt):
    M = B_TILE * N

    def kernel(*refs):
        i = 0
        feats_ref = refs[i]; i += 1
        adj_ref = refs[i]; i += 1
        raw_refs = refs[i:i + 2 * L_enc]; i += 2 * L_enc
        msg_refs = refs[i:i + 2 * L_enc]; i += 2 * L_enc
        tr_refs = refs[i:i + 2 * L_tr]; i += 2 * L_tr
        out_ref = refs[i]; i += 1
        x_scr = refs[i]                                   # (M, Hp) f32 scratch

        t = pl.program_id(1)

        # ---- stage 1 (t == 0): fused K raw encoders, sum-merge folded into
        #      the (linear) last layer -> emits (M, Hp) directly --------------
        @pl.when(t == 0)
        def _():
            h = feats_ref[...].reshape(M, F_pad)
            if L_enc == 1:
                x = (jnp.dot(h, raw_refs[0][...],
                             preferred_element_type=jnp.float32)
                     + raw_refs[1][...])
            else:
                h = (jnp.dot(h, raw_refs[0][...],
                             preferred_element_type=jnp.float32)
                     + raw_refs[1][...])
                h = _leaky_relu(h)
                hk = [h[:, k * s_pad[0]:(k + 1) * s_pad[0]] for k in range(K)]
                for l in range(1, L_enc - 1):          # per-type hidden layers
                    w = raw_refs[2 * l][...]           # (K, in_p, out_p)
                    b = raw_refs[2 * l + 1][...]       # (K, 1, out_p)
                    hk = [_leaky_relu(
                        jnp.dot(hk[k].astype(cdt), w[k],
                                preferred_element_type=jnp.float32) + b[k])
                        for k in range(K)]
                wl = raw_refs[2 * (L_enc - 1)][...]    # (K, in_p, Hp)
                bl = raw_refs[2 * (L_enc - 1) + 1][...]  # (1, Hp)  K-summed bias
                x = jnp.dot(hk[0].astype(cdt), wl[0],
                            preferred_element_type=jnp.float32) + bl
                for k in range(1, K):
                    x = x + jnp.dot(hk[k].astype(cdt), wl[k],
                                    preferred_element_type=jnp.float32)
            x_scr[...] = x

        # ---- stage 2 (every step t): multi-type message passing -------------
        x = x_scr[...]                                    # (M, Hp) f32
        adj = adj_ref[...]                                # (B_TILE, K, N, N)
        h = (jnp.dot(x.astype(cdt), msg_refs[0][0],
                     preferred_element_type=jnp.float32) + msg_refs[1][0])
        if L_enc > 1:
            h = _leaky_relu(h)
        mk = [h[:, k * s_pad[0]:(k + 1) * s_pad[0]] for k in range(K)]
        for l in range(1, L_enc - 1):                     # per-type hidden
            w = msg_refs[2 * l][0]                        # (K, in_p, out_p)
            b = msg_refs[2 * l + 1][0]                    # (K, 1, out_p)
            mk = [_leaky_relu(
                jnp.dot(mk[k].astype(cdt), w[k],
                        preferred_element_type=jnp.float32) + b[k])
                for k in range(K)]
        if L_enc > 1:
            wl = msg_refs[2 * (L_enc - 1)][0]             # (K, in_p, Hp)
            bl = msg_refs[2 * (L_enc - 1) + 1][0]         # (K, 1, Hp)
        agg = x.reshape(B_TILE, N, Hp)                    # residual
        for k in range(K):
            if L_enc > 1:
                m_k = (jnp.dot(mk[k].astype(cdt), wl[k],
                               preferred_element_type=jnp.float32) + bl[k])
            else:
                m_k = mk[k]
            m_k = m_k.reshape(B_TILE, N, Hp).astype(cdt)
            agg = agg + jnp.einsum('bnm,bmh->bnh', adj[:, k], m_k,
                                   preferred_element_type=jnp.float32)
        x_scr[...] = agg.reshape(M, Hp)

        # ---- stage 3 (t == last): transform head, lane-dense store ----------
        @pl.when(t == n_steps - 1)
        def _():
            h = x_scr[...]
            for l in range(L_tr):
                w = tr_refs[2 * l][...]
                b = tr_refs[2 * l + 1][...]
                h = jnp.dot(h.astype(cdt), w,
                            preferred_element_type=jnp.float32) + b
                if l < L_tr - 1:
                    h = _leaky_relu(h)
            out_ref[...] = h.reshape(B_TILE, N, -1).astype(out_ref.dtype)

    return kernel


# ---------------------------------------------------------------------------
# Host-side parameter packing (lane-dense, per-type stacked; no block-diag)
# ---------------------------------------------------------------------------
def _pack_fused_encoders(per_type_layers, in_dims, n_hids, h_size,
                         shared_input, merge_last):
    """Pack K equal-architecture per-type MLPs into fused operands (f32 numpy).

    Layer 0: one wide dot over the (shared or concatenated) input.
    Hidden layers: per-type stacked (K, in_p, out_p).
    Last layer: per-type (K, in_p, Hp); if merge_last the K outputs are summed
    (weights kept per-type, biases pre-summed) -- used for the raw encoders.
    """
    K = len(per_type_layers)
    sizes_t = list(n_hids) + [h_size]
    sizes_p = [_pad128(s) for s in sizes_t]
    L = len(sizes_t)
    if shared_input:
        offs = [0] * K
        in0_total = int(in_dims[0])
    else:
        cs = np.concatenate([[0], np.cumsum(in_dims)]).astype(int)
        offs = list(cs[:-1])
        in0_total = int(cs[-1])
    in0_pad = _pad128(in0_total)
    Hp = _pad128(h_size)

    packed = []
    for l in range(L):
        out_t, out_p = sizes_t[l], sizes_p[l]
        last = (l == L - 1)
        if l == 0:
            if last and merge_last:
                W = np.zeros((in0_pad, Hp), np.float32)
                Bv = np.zeros((1, Hp), np.float32)
                for k in range(K):
                    w, b = per_type_layers[k][l]
                    W[offs[k]:offs[k] + in_dims[k], :out_t] += np.asarray(w, np.float32)
                    Bv[0, :out_t] += np.asarray(b, np.float32).reshape(-1)
            else:
                W = np.zeros((in0_pad, K * out_p), np.float32)
                Bv = np.zeros((1, K * out_p), np.float32)
                for k in range(K):
                    w, b = per_type_layers[k][l]
                    W[offs[k]:offs[k] + in_dims[k],
                      k * out_p:k * out_p + out_t] = np.asarray(w, np.float32)
                    Bv[0, k * out_p:k * out_p + out_t] = np.asarray(b, np.float32).reshape(-1)
        else:
            in_t, in_p = sizes_t[l - 1], sizes_p[l - 1]
            W = np.zeros((K, in_p, out_p), np.float32)
            for k in range(K):
                w, _ = per_type_layers[k][l]
                W[k, :in_t, :out_t] = np.asarray(w, np.float32)
            if last and merge_last:
                Bv = np.zeros((1, out_p), np.float32)
                for k in range(K):
                    _, b = per_type_layers[k][l]
                    Bv[0, :out_t] += np.asarray(b, np.float32).reshape(-1)
            else:
                Bv = np.zeros((K, 1, out_p), np.float32)
                for k in range(K):
                    _, b = per_type_layers[k][l]
                    Bv[k, 0, :out_t] = np.asarray(b, np.float32).reshape(-1)
        packed.append((W, Bv))
    return packed


def _pack_plain_mlp(layers, in_size, n_hids, out_size):
    sizes_in = [in_size] + list(n_hids)
    sizes_out = list(n_hids) + [out_size]
    packed = []
    for l, (w, b) in enumerate(layers):
        W = np.zeros((_pad128(sizes_in[l]), _pad128(sizes_out[l])), np.float32)
        Bv = np.zeros((1, _pad128(sizes_out[l])), np.float32)
        W[:sizes_in[l], :sizes_out[l]] = np.asarray(w, np.float32)
        Bv[0, :sizes_out[l]] = np.asarray(b, np.float32).reshape(-1)
        packed.append((W, Bv))
    return packed


def _pick_b_tile(B, N, K, itemsize):
    divs = [d for d in range(1, B + 1) if B % d == 0]
    cand = [d for d in divs if d * N >= 256]          # fill MXU M dim (256-wide)
    bt = min(cand) if cand else max(divs)
    # keep >= 2 grid steps along batch when possible (v7x has 2 TensorCores)
    while bt > 1 and B // bt < 2:
        bt = max(d for d in divs if d < bt)
    # cap so the double-buffered adjacency block stays well under VMEM budget
    while bt > 1 and 2 * bt * K * N * N * itemsize > (24 << 20):
        bt = max(d for d in divs if d < bt)
    return bt


# ---------------------------------------------------------------------------
# Full fused BatchMGCN forward
# ---------------------------------------------------------------------------
def batch_mgcn_forward(params, node_feats, adj_mats, *, n_hids, h_size,
                       n_output, n_steps, compute_dtype=jnp.bfloat16,
                       b_tile=None):
    assert n_steps >= 1
    B, N, _ = node_feats[0].shape
    K = len(node_feats)
    f_list = [int(nf.shape[2]) for nf in node_feats]
    F_total = int(sum(f_list))
    F_pad = _pad128(F_total)
    Hp = _pad128(h_size)
    out_p = _pad128(n_output)
    sizes_t = list(n_hids) + [h_size]
    s_pad = [_pad128(s) for s in sizes_t]
    L_enc = len(sizes_t)
    L_tr = len(n_hids) + 1
    cdt = jnp.dtype(compute_dtype)

    B_TILE = b_tile if b_tile is not None else _pick_b_tile(B, N, K, cdt.itemsize)
    assert B % B_TILE == 0

    # ---- pack parameters (host side, once). Weights -> compute dtype, biases f32.
    raw_np = _pack_fused_encoders(params["raw"], f_list, n_hids, h_size,
                                  shared_input=False, merge_last=True)
    raw_ops = [(jnp.asarray(W, cdt), jnp.asarray(Bv, jnp.float32))
               for W, Bv in raw_np]

    msg_steps = [_pack_fused_encoders(params["msg"][t], [h_size] * K, n_hids,
                                      h_size, shared_input=True,
                                      merge_last=False)
                 for t in range(n_steps)]
    msg_ops = []
    for l in range(L_enc):
        Ws = np.stack([msg_steps[t][l][0] for t in range(n_steps)], axis=0)
        Bs = np.stack([msg_steps[t][l][1] for t in range(n_steps)], axis=0)
        msg_ops.append((jnp.asarray(Ws, cdt), jnp.asarray(Bs, jnp.float32)))

    tr_np = _pack_plain_mlp(params["transform"], h_size, n_hids, n_output)
    tr_ops = [(jnp.asarray(W, cdt), jnp.asarray(Bv, jnp.float32))
              for W, Bv in tr_np]

    # ---- pack activations / adjacency (lane-dense, compute dtype) ----
    feats_cat = jnp.concatenate(node_feats, axis=-1)
    if F_pad > F_total:
        feats_cat = jnp.pad(feats_cat, ((0, 0), (0, 0), (0, F_pad - F_total)))
    feats_cat = feats_cat.astype(cdt)                     # (B, N, F_pad)
    adj_stack = jnp.stack(adj_mats, axis=1).astype(cdt)   # (B, K, N, N) contiguous

    kernel = _make_fused_kernel(K=K, L_enc=L_enc, L_tr=L_tr, n_steps=n_steps,
                                B_TILE=B_TILE, N=N, F_pad=F_pad, Hp=Hp,
                                s_pad=s_pad, cdt=cdt)

    def _const_spec(arr):                                  # weights fetched once
        z = (0,) * arr.ndim
        return pl.BlockSpec(arr.shape, lambda b, t, _z=z: _z)

    def _step_spec(arr):                                   # one step's slice only
        z = (0,) * (arr.ndim - 1)
        return pl.BlockSpec((1,) + tuple(arr.shape[1:]),
                            lambda b, t, _z=z: (t,) + _z)

    inputs = [feats_cat, adj_stack]
    in_specs = [pl.BlockSpec((B_TILE, N, F_pad), lambda b, t: (b, 0, 0)),
                pl.BlockSpec((B_TILE, K, N, N), lambda b, t: (b, 0, 0, 0))]
    for W, Bv in raw_ops:
        inputs += [W, Bv]; in_specs += [_const_spec(W), _const_spec(Bv)]
    for W, Bv in msg_ops:
        inputs += [W, Bv]; in_specs += [_step_spec(W), _step_spec(Bv)]
    for W, Bv in tr_ops:
        inputs += [W, Bv]; in_specs += [_const_spec(W), _const_spec(Bv)]

    # ---- VMEM budget (explicit, clamped to v7x's 64 MiB physical) ----
    blk_bytes = (B_TILE * N * F_pad * cdt.itemsize
                 + B_TILE * K * N * N * cdt.itemsize
                 + B_TILE * N * out_p * 4)
    per_step_msg = sum(_nbytes(W) // n_steps + _nbytes(Bv) // n_steps
                       for W, Bv in msg_ops)
    const_w = sum(_nbytes(W) + _nbytes(Bv) for W, Bv in raw_ops + tr_ops)
    scratch_bytes = B_TILE * N * Hp * 4
    need = 2 * (blk_bytes + per_step_msg) + 2 * const_w + scratch_bytes
    vmem_limit = int(min(64 << 20, max(32 << 20, 2 * need + (8 << 20))))

    # ---- cost estimate ----
    M_total = B * N
    flops = 0
    for W, _ in raw_ops + msg_ops + tr_ops:
        lead = int(np.prod(W.shape[:-2])) if W.ndim > 2 else 1
        flops += 2 * M_total * lead * int(W.shape[-2]) * int(W.shape[-1])
    flops += 2 * B * n_steps * K * N * N * Hp
    bytes_accessed = (_nbytes(feats_cat) + _nbytes(adj_stack)
                      + B * N * out_p * 4 + const_w
                      + (B // B_TILE) * sum(_nbytes(W) + _nbytes(Bv)
                                            for W, Bv in msg_ops))

    out_padded = pl.pallas_call(
        kernel,
        grid=(B // B_TILE, n_steps),
        in_specs=in_specs,
        out_specs=pl.BlockSpec((B_TILE, N, out_p), lambda b, t: (b, 0, 0)),
        out_shape=jax.ShapeDtypeStruct((B, N, out_p), jnp.float32),
        scratch_shapes=[pltpu.VMEM((B_TILE * N, Hp), jnp.float32)],
        compiler_params=pltpu.CompilerParams(
            dimension_semantics=("parallel", "arbitrary"),
            vmem_limit_bytes=vmem_limit),
        cost_estimate=pl.CostEstimate(flops=int(flops), transcendentals=0,
                                      bytes_accessed=int(bytes_accessed)),
    )(*inputs)
    return out_padded[..., :n_output]


# ---------------------------------------------------------------------------
# Deterministic parameter init (mirrors nn.Linear default U(-1/sqrt(fan_in),.))
# ---------------------------------------------------------------------------
def init_linear(key, fan_in, fan_out):
    kw, kb = jax.random.split(key)
    bound = 1.0 / float(fan_in) ** 0.5
    w = jax.random.uniform(kw, (fan_in, fan_out), jnp.float32, -bound, bound)
    b = jax.random.uniform(kb, (1, fan_out), jnp.float32, -bound, bound)
    return w, b


def init_mlp(key, in_size, n_hids, out_size):
    sizes = [in_size] + list(n_hids) + [out_size]
    layers = []
    for i in range(len(sizes) - 1):
        key, sub = jax.random.split(key)
        layers.append(init_linear(sub, sizes[i], sizes[i + 1]))
    return layers


def init_batch_mgcn(key, n_feats, n_output, n_hids, h_size, n_steps):
    params = {"raw": [], "msg": [], "transform": None}
    for f in n_feats:
        key, sub = jax.random.split(key)
        params["raw"].append(init_mlp(sub, f, n_hids, h_size))
    for _ in range(n_steps):
        step_params = []
        for _ in n_feats:
            key, sub = jax.random.split(key)
            step_params.append(init_mlp(sub, h_size, n_hids, h_size))
        params["msg"].append(step_params)
    key, sub = jax.random.split(key)
    params["transform"] = init_mlp(sub, h_size, n_hids, n_output)
    return params


# ---------------------------------------------------------------------------
# Pure-JAX reference (unpadded, per-type loops) for correctness checks
# ---------------------------------------------------------------------------
def reference_forward(params, node_feats, adj_mats, h_size, n_steps):
    def mlp(x, layers):
        for i, (w, b) in enumerate(layers):
            x = x @ w + b
            if i < len(layers) - 1:
                x = _leaky_relu(x)
        return x

    B, N, _ = node_feats[0].shape
    x = None
    for k, nf in enumerate(node_feats):
        v = mlp(nf.reshape(B * N, -1), params["raw"][k]).reshape(B, N, h_size)
        x = v if x is None else x + v
    for t in range(n_steps):
        agg = x
        for k, adj in enumerate(adj_mats):
            h = mlp(x.reshape(B * N, h_size),
                    params["msg"][t][k]).reshape(B, N, h_size)
            agg = agg + jnp.einsum("bnm,bmh->bnh", adj, h)
        x = agg
    out = mlp(x.reshape(B * N, h_size), params["transform"])
    return out.reshape(B, N, -1)


if __name__ == "__main__":
    # Small, module-consistent shapes
    B, N = 2, 8
    n_feats = [4, 6]          # two node-feature / edge types
    n_hids = [32, 16]
    h_size = 16
    n_output = 8
    n_steps = 2

    key = jax.random.PRNGKey(0)
    key, kp = jax.random.split(key)
    params = init_batch_mgcn(kp, n_feats, n_output, n_hids, h_size, n_steps)

    node_feats = []
    for f in n_feats:
        key, sub = jax.random.split(key)
        node_feats.append(jax.random.normal(sub, (B, N, f), jnp.float32))
    adj_mats = []
    for _ in n_feats:
        key, sub = jax.random.split(key)
        adj_mats.append(jax.random.uniform(sub, (B, N, N), jnp.float32))

    with jax.default_matmul_precision("highest"):
        ref = jax.block_until_ready(
            reference_forward(params, node_feats, adj_mats, h_size, n_steps))
    ref_scale = float(jnp.max(jnp.abs(ref))) + 1e-6

    # f32 compute mode: tight correctness check of the packing / fusion.
    out_f32 = jax.block_until_ready(
        batch_mgcn_forward(params, node_feats, adj_mats, n_hids=n_hids,
                           h_size=h_size, n_output=n_output, n_steps=n_steps,
                           compute_dtype=jnp.float32))
    assert out_f32.shape == (B, N, n_output), out_f32.shape
    err_f32 = float(jnp.max(jnp.abs(out_f32 - ref))) / ref_scale
    assert err_f32 < 1e-4, f"f32 rel err {err_f32}"

    # bf16 compute mode (production path): looser tolerance.
    out_bf16 = jax.block_until_ready(
        batch_mgcn_forward(params, node_feats, adj_mats, n_hids=n_hids,
                           h_size=h_size, n_output=n_output, n_steps=n_steps,
                           compute_dtype=jnp.bfloat16))
    assert out_bf16.shape == (B, N, n_output), out_bf16.shape
    err_bf16 = float(jnp.max(jnp.abs(out_bf16 - ref))) / ref_scale
    assert err_bf16 < 3e-2, f"bf16 rel err {err_bf16}"

    print("KERNEL_OK")
</pallas_src>

<mosaic_0001>
module attributes {stable_mosaic.version = 11 : i64} {
  func.func @kernel(%arg0: i32, %arg1: i32, %arg2: memref<1x8x128xf32, #tpu.memory_space<vmem>>, %arg3: memref<1x2x8x8xf32, #tpu.memory_space<vmem>>, %arg4: memref<128x256xf32, #tpu.memory_space<vmem>>, %arg5: memref<1x256xf32, #tpu.memory_space<vmem>>, %arg6: memref<2x128x128xf32, #tpu.memory_space<vmem>>, %arg7: memref<2x1x128xf32, #tpu.memory_space<vmem>>, %arg8: memref<2x128x128xf32, #tpu.memory_space<vmem>>, %arg9: memref<1x128xf32, #tpu.memory_space<vmem>>, %arg10: memref<1x128x256xf32, #tpu.memory_space<vmem>>, %arg11: memref<1x1x256xf32, #tpu.memory_space<vmem>>, %arg12: memref<1x2x128x128xf32, #tpu.memory_space<vmem>>, %arg13: memref<1x2x1x128xf32, #tpu.memory_space<vmem>>, %arg14: memref<1x2x128x128xf32, #tpu.memory_space<vmem>>, %arg15: memref<1x2x1x128xf32, #tpu.memory_space<vmem>>, %arg16: memref<128x128xf32, #tpu.memory_space<vmem>>, %arg17: memref<1x128xf32, #tpu.memory_space<vmem>>, %arg18: memref<128x128xf32, #tpu.memory_space<vmem>>, %arg19: memref<1x128xf32, #tpu.memory_space<vmem>>, %arg20: memref<128x128xf32, #tpu.memory_space<vmem>>, %arg21: memref<1x128xf32, #tpu.memory_space<vmem>>, %arg22: memref<1x8x128xf32, #tpu.memory_space<vmem>>, %arg23: memref<8x128xf32, #tpu.memory_space<vmem>>) attributes {dimension_semantics = [#tpu.dimension_semantics<parallel>, #tpu.dimension_semantics<arbitrary>], iteration_bounds = array<i64: 2, 2>, scalar_prefetch = 0 : i64, scratch_operands = 1 : i64, tpu.core_type = #tpu.core_type<tc>, window_params = [{transform_indices = @transform_0, window_bounds = array<i64: 1, 8, 128>}, {transform_indices = @transform_1, window_bounds = array<i64: 1, 2, 8, 8>}, {pipeline_mode = #tpu.pipeline_mode<synchronous>, transform_indices = @transform_2, window_bounds = array<i64: 128, 256>}, {pipeline_mode = #tpu.pipeline_mode<synchronous>, transform_indices = @transform_3, window_bounds = array<i64: 1, 256>}, {pipeline_mode = #tpu.pipeline_mode<synchronous>, transform_indices = @transform_4, window_bounds = array<i64: 2, 128, 128>}, {pipeline_mode = #tpu.pipeline_mode<synchronous>, transform_indices = @transform_5, window_bounds = array<i64: 2, 1, 128>}, {pipeline_mode = #tpu.pipeline_mode<synchronous>, transform_indices = @transform_6, window_bounds = array<i64: 2, 128, 128>}, {pipeline_mode = #tpu.pipeline_mode<synchronous>, transform_indices = @transform_7, window_bounds = array<i64: 1, 128>}, {transform_indices = @transform_8, window_bounds = array<i64: 1, 128, 256>}, {transform_indices = @transform_9, window_bounds = array<i64: 1, 1, 256>}, {transform_indices = @transform_10, window_bounds = array<i64: 1, 2, 128, 128>}, {transform_indices = @transform_11, window_bounds = array<i64: 1, 2, 1, 128>}, {transform_indices = @transform_12, window_bounds = array<i64: 1, 2, 128, 128>}, {transform_indices = @transform_13, window_bounds = array<i64: 1, 2, 1, 128>}, {pipeline_mode = #tpu.pipeline_mode<synchronous>, transform_indices = @transform_14, window_bounds = array<i64: 128, 128>}, {pipeline_mode = #tpu.pipeline_mode<synchronous>, transform_indices = @transform_15, window_bounds = array<i64: 1, 128>}, {pipeline_mode = #tpu.pipeline_mode<synchronous>, transform_indices = @transform_16, window_bounds = array<i64: 128, 128>}, {pipeline_mode = #tpu.pipeline_mode<synchronous>, transform_indices = @transform_17, window_bounds = array<i64: 1, 128>}, {pipeline_mode = #tpu.pipeline_mode<synchronous>, transform_indices = @transform_18, window_bounds = array<i64: 128, 128>}, {pipeline_mode = #tpu.pipeline_mode<synchronous>, transform_indices = @transform_19, window_bounds = array<i64: 1, 128>}, {transform_indices = @transform_20, window_bounds = array<i64: 1, 8, 128>}]} {
    %c0_i32 = arith.constant 0 : i32
    %0 = arith.cmpi eq, %arg1, %c0_i32 : i32
    %1 = arith.extui %0 : i1 to i32
    %c0_i32_0 = arith.constant 0 : i32
    %2 = arith.cmpi ne, %1, %c0_i32_0 : i32
    scf.if %2 {
      %c0_43 = arith.constant 0 : index
      %c0_44 = arith.constant 0 : index
      %c0_45 = arith.constant 0 : index
      %81 = vector.load %arg2[%c0_43, %c0_44, %c0_45] : memref<1x8x128xf32, #tpu.memory_space<vmem>>, vector<1x8x128xf32>
      %82 = vector.shape_cast %81 : vector<1x8x128xf32> to vector<8x128xf32>
      %c0_46 = arith.constant 0 : index
      %c0_47 = arith.constant 0 : index
      %83 = vector.load %arg4[%c0_46, %c0_47] : memref<128x256xf32, #tpu.memory_space<vmem>>, vector<128x256xf32>
      %cst_48 = arith.constant dense<0.000000e+00> : vector<8x256xf32>
      %84 = tpu.matmul %82, %83, %cst_48 {dimension_numbers = #tpu.dot_dimension_numbers<[1], [0], [0], [1], [0, 0, 1, 1], [], []>} : vector<8x128xf32>, vector<128x256xf32>, vector<8x256xf32> -> vector<8x256xf32>
      %c0_49 = arith.constant 0 : index
      %c0_50 = arith.constant 0 : index
      %85 = vector.load %arg5[%c0_49, %c0_50] : memref<1x256xf32, #tpu.memory_space<vmem>>, vector<1x256xf32>
      %86 = vector.broadcast %85 : vector<1x256xf32> to vector<8x256xf32>
      %87 = arith.addf %84, %86 : vector<8x256xf32>
      %cst_51 = arith.constant 0.000000e+00 : f32
      %88 = vector.broadcast %cst_51 : f32 to vector<8x256xf32>
      %89 = arith.cmpf ogt, %87, %88 : vector<8x256xf32>
      %cst_52 = arith.constant 0.00999999977 : f32
      %90 = vector.broadcast %cst_52 : f32 to vector<8x256xf32>
      %91 = arith.mulf %90, %87 : vector<8x256xf32>
      %92 = arith.select %89, %87, %91 : vector<8x256xi1>, vector<8x256xf32>
      %93 = vector.extract_strided_slice %92 {offsets = [0, 0], sizes = [8, 128], strides = [1, 1]} : vector<8x256xf32> to vector<8x128xf32>
      %94 = vector.extract_strided_slice %92 {offsets = [0, 128], sizes = [8, 128], strides = [1, 1]} : vector<8x256xf32> to vector<8x128xf32>
      %c0_53 = arith.constant 0 : index
      %c0_54 = arith.constant 0 : index
      %c0_55 = arith.constant 0 : index
      %95 = vector.load %arg6[%c0_53, %c0_54, %c0_55] : memref<2x128x128xf32, #tpu.memory_space<vmem>>, vector<2x128x128xf32>
      %c0_56 = arith.constant 0 : index
      %c0_57 = arith.constant 0 : index
      %c0_58 = arith.constant 0 : index
      %96 = vector.load %arg7[%c0_56, %c0_57, %c0_58] : memref<2x1x128xf32, #tpu.memory_space<vmem>>, vector<2x1x128xf32>
      %97 = vector.extract_strided_slice %95 {offsets = [0, 0, 0], sizes = [1, 128, 128], strides = [1, 1, 1]} : vector<2x128x128xf32> to vector<1x128x128xf32>
      %98 = vector.shape_cast %97 : vector<1x128x128xf32> to vector<128x128xf32>
      %cst_59 = arith.constant dense<0.000000e+00> : vector<8x128xf32>
      %99 = tpu.matmul %93, %98, %cst_59 {dimension_numbers = #tpu.dot_dimension_numbers<[1], [0], [0], [1], [0, 0, 1, 1], [], []>} : vector<8x128xf32>, vector<128x128xf32>, vector<8x128xf32> -> vector<8x128xf32>
      %100 = vector.extract_strided_slice %96 {offsets = [0, 0, 0], sizes = [1, 1, 128], strides = [1, 1, 1]} : vector<2x1x128xf32> to vector<1x1x128xf32>
      %101 = vector.shape_cast %100 : vector<1x1x128xf32> to vector<1x128xf32>
      %102 = vector.broadcast %101 : vector<1x128xf32> to vector<8x128xf32>
      %103 = arith.addf %99, %102 : vector<8x128xf32>
      %cst_60 = arith.constant 0.000000e+00 : f32
      %104 = vector.broadcast %cst_60 : f32 to vector<8x128xf32>
      %105 = arith.cmpf ogt, %103, %104 : vector<8x128xf32>
      %cst_61 = arith.constant 0.00999999977 : f32
      %106 = vector.broadcast %cst_61 : f32 to vector<8x128xf32>
      %107 = arith.mulf %106, %103 : vector<8x128xf32>
      %108 = arith.select %105, %103, %107 : vector<8x128xi1>, vector<8x128xf32>
      %109 = vector.extract_strided_slice %95 {offsets = [1, 0, 0], sizes = [1, 128, 128], strides = [1, 1, 1]} : vector<2x128x128xf32> to vector<1x128x128xf32>
      %110 = vector.shape_cast %109 : vector<1x128x128xf32> to vector<128x128xf32>
      %cst_62 = arith.constant dense<0.000000e+00> : vector<8x128xf32>
      %111 = tpu.matmul %94, %110, %cst_62 {dimension_numbers = #tpu.dot_dimension_numbers<[1], [0], [0], [1], [0, 0, 1, 1], [], []>} : vector<8x128xf32>, vector<128x128xf32>, vector<8x128xf32> -> vector<8x128xf32>
      %112 = vector.extract_strided_slice %96 {offsets = [1, 0, 0], sizes = [1, 1, 128], strides = [1, 1, 1]} : vector<2x1x128xf32> to vector<1x1x128xf32>
      %113 = vector.shape_cast %112 : vector<1x1x128xf32> to vector<1x128xf32>
      %114 = vector.broadcast %113 : vector<1x128xf32> to vector<8x128xf32>
      %115 = arith.addf %111, %114 : vector<8x128xf32>
      %cst_63 = arith.constant 0.000000e+00 : f32
      %116 = vector.broadcast %cst_63 : f32 to vector<8x128xf32>
      %117 = arith.cmpf ogt, %115, %116 : vector<8x128xf32>
      %cst_64 = arith.constant 0.00999999977 : f32
      %118 = vector.broadcast %cst_64 : f32 to vector<8x128xf32>
      %119 = arith.mulf %118, %115 : vector<8x128xf32>
      %120 = arith.select %117, %115, %119 : vector<8x128xi1>, vector<8x128xf32>
      %c0_65 = arith.constant 0 : index
      %c0_66 = arith.constant 0 : index
      %c0_67 = arith.constant 0 : index
      %121 = vector.load %arg8[%c0_65, %c0_66, %c0_67] : memref<2x128x128xf32, #tpu.memory_space<vmem>>, vector<2x128x128xf32>
      %c0_68 = arith.constant 0 : index
      %c0_69 = arith.constant 0 : index
      %122 = vector.load %arg9[%c0_68, %c0_69] : memref<1x128xf32, #tpu.memory_space<vmem>>, vector<1x128xf32>
      %123 = vector.extract_strided_slice %121 {offsets = [0, 0, 0], sizes = [1, 128, 128], strides = [1, 1, 1]} : vector<2x128x128xf32> to vector<1x128x128xf32>
      %124 = vector.shape_cast %123 : vector<1x128x128xf32> to vector<128x128xf32>
      %cst_70 = arith.constant dense<0.000000e+00> : vector<8x128xf32>
      %125 = tpu.matmul %108, %124, %cst_70 {dimension_numbers = #tpu.dot_dimension_numbers<[1], [0], [0], [1], [0, 0, 1, 1], [], []>} : vector<8x128xf32>, vector<128x128xf32>, vector<8x128xf32> -> vector<8x128xf32>
      %126 = vector.broadcast %122 : vector<1x128xf32> to vector<8x128xf32>
      %127 = arith.addf %125, %126 : vector<8x128xf32>
      %128 = vector.extract_strided_slice %121 {offsets = [1, 0, 0], sizes = [1, 128, 128], strides = [1, 1, 1]} : vector<2x128x128xf32> to vector<1x128x128xf32>
      %129 = vector.shape_cast %128 : vector<1x128x128xf32> to vector<128x128xf32>
      %cst_71 = arith.constant dense<0.000000e+00> : vector<8x128xf32>
      %130 = tpu.matmul %120, %129, %cst_71 {dimension_numbers = #tpu.dot_dimension_numbers<[1], [0], [0], [1], [0, 0, 1, 1], [], []>} : vector<8x128xf32>, vector<128x128xf32>, vector<8x128xf32> -> vector<8x128xf32>
      %131 = arith.addf %127, %130 : vector<8x128xf32>
      %c0_72 = arith.constant 0 : index
      %c0_73 = arith.constant 0 : index
      %132 = vector.load %arg23[%c0_72, %c0_73] : memref<8x128xf32, #tpu.memory_space<vmem>>, vector<8x128xf32>
      tpu.vector_store %arg23[%c0_72, %c0_73], %131 {strides = array<i32>} : memref<8x128xf32, #tpu.memory_space<vmem>>, vector<8x128xf32>,
    } else {
    }
    %c0 = arith.constant 0 : index
    %c0_1 = arith.constant 0 : index
    %3 = vector.load %arg23[%c0, %c0_1] : memref<8x128xf32, #tpu.memory_space<vmem>>, vector<8x128xf32>
    %c0_2 = arith.constant 0 : index
    %c0_3 = arith.constant 0 : index
    %c0_4 = arith.constant 0 : index
    %c0_5 = arith.constant 0 : index
    %4 = vector.load %arg3[%c0_2, %c0_3, %c0_4, %c0_5] : memref<1x2x8x8xf32, #tpu.memory_space<vmem>>, vector<1x2x8x8xf32>
    %c0_6 = arith.constant 0 : index
    %c0_7 = arith.constant 0 : index
    %c0_8 = arith.constant 0 : index
    %5 = vector.load %arg10[%c0_6, %c0_7, %c0_8] : memref<1x128x256xf32, #tpu.memory_space<vmem>>, vector<1x128x256xf32>
    %6 = vector.shape_cast %5 : vector<1x128x256xf32> to vector<128x256xf32>
    %cst = arith.constant dense<0.000000e+00> : vector<8x256xf32>
    %7 = tpu.matmul %3, %6, %cst {dimension_numbers = #tpu.dot_dimension_numbers<[1], [0], [0], [1], [0, 0, 1, 1], [], []>} : vector<8x128xf32>, vector<128x256xf32>, vector<8x256xf32> -> vector<8x256xf32>
    %c0_9 = arith.constant 0 : index
    %c0_10 = arith.constant 0 : index
    %c0_11 = arith.constant 0 : index
    %8 = vector.load %arg11[%c0_9, %c0_10, %c0_11] : memref<1x1x256xf32, #tpu.memory_space<vmem>>, vector<1x1x256xf32>
    %9 = vector.shape_cast %8 : vector<1x1x256xf32> to vector<1x256xf32>
    %10 = vector.broadcast %9 : vector<1x256xf32> to vector<8x256xf32>
    %11 = arith.addf %7, %10 : vector<8x256xf32>
    %cst_12 = arith.constant 0.000000e+00 : f32
    %12 = vector.broadcast %cst_12 : f32 to vector<8x256xf32>
    %13 = arith.cmpf ogt, %11, %12 : vector<8x256xf32>
    %cst_13 = arith.constant 0.00999999977 : f32
    %14 = vector.broadcast %cst_13 : f32 to vector<8x256xf32>
    %15 = arith.mulf %14, %11 : vector<8x256xf32>
    %16 = arith.select %13, %11, %15 : vector<8x256xi1>, vector<8x256xf32>
    %17 = vector.extract_strided_slice %16 {offsets = [0, 0], sizes = [8, 128], strides = [1, 1]} : vector<8x256xf32> to vector<8x128xf32>
    %18 = vector.extract_strided_slice %16 {offsets = [0, 128], sizes = [8, 128], strides = [1, 1]} : vector<8x256xf32> to vector<8x128xf32>
    %c0_14 = arith.constant 0 : index
    %c0_15 = arith.constant 0 : index
    %c0_16 = arith.constant 0 : index
    %c0_17 = arith.constant 0 : index
    %19 = vector.load %arg12[%c0_14, %c0_15, %c0_16, %c0_17] : memref<1x2x128x128xf32, #tpu.memory_space<vmem>>, vector<1x2x128x128xf32>
    %20 = vector.shape_cast %19 : vector<1x2x128x128xf32> to vector<2x128x128xf32>
    %c0_18 = arith.constant 0 : index
    %c0_19 = arith.constant 0 : index
    %c0_20 = arith.constant 0 : index
    %c0_21 = arith.constant 0 : index
    %21 = vector.load %arg13[%c0_18, %c0_19, %c0_20, %c0_21] : memref<1x2x1x128xf32, #tpu.memory_space<vmem>>, vector<1x2x1x128xf32>
    %22 = vector.shape_cast %21 : vector<1x2x1x128xf32> to vector<2x1x128xf32>
    %23 = vector.extract_strided_slice %20 {offsets = [0, 0, 0], sizes = [1, 128, 128], strides = [1, 1, 1]} : vector<2x128x128xf32> to vector<1x128x128xf32>
    %24 = vector.shape_cast %23 : vector<1x128x128xf32> to vector<128x128xf32>
    %cst_22 = arith.constant dense<0.000000e+00> : vector<8x128xf32>
    %25 = tpu.matmul %17, %24, %cst_22 {dimension_numbers = #tpu.dot_dimension_numbers<[1], [0], [0], [1], [0, 0, 1, 1], [], []>} : vector<8x128xf32>, vector<128x128xf32>, vector<8x128xf32> -> vector<8x128xf32>
    %26 = vector.extract_strided_slice %22 {offsets = [0, 0, 0], sizes = [1, 1, 128], strides = [1, 1, 1]} : vector<2x1x128xf32> to vector<1x1x128xf32>
    %27 = vector.shape_cast %26 : vector<1x1x128xf32> to vector<1x128xf32>
    %28 = vector.broadcast %27 : vector<1x128xf32> to vector<8x128xf32>
    %29 = arith.addf %25, %28 : vector<8x128xf32>
    %cst_23 = arith.constant 0.000000e+00 : f32
    %30 = vector.broadcast %cst_23 : f32 to vector<8x128xf32>
    %31 = arith.cmpf ogt, %29, %30 : vector<8x128xf32>
    %cst_24 = arith.constant 0.00999999977 : f32
    %32 = vector.broadcast %cst_24 : f32 to vector<8x128xf32>
    %33 = arith.mulf %32, %29 : vector<8x128xf32>
    %34 = arith.select %31, %29, %33 : vector<8x128xi1>, vector<8x128xf32>
    %35 = vector.extract_strided_slice %20 {offsets = [1, 0, 0], sizes = [1, 128, 128], strides = [1, 1, 1]} : vector<2x128x128xf32> to vector<1x128x128xf32>
    %36 = vector.shape_cast %35 : vector<1x128x128xf32> to vector<128x128xf32>
    %cst_25 = arith.constant dense<0.000000e+00> : vector<8x128xf32>
    %37 = tpu.matmul %18, %36, %cst_25 {dimension_numbers = #tpu.dot_dimension_numbers<[1], [0], [0], [1], [0, 0, 1, 1], [], []>} : vector<8x128xf32>, vector<128x128xf32>, vector<8x128xf32> -> vector<8x128xf32>
    %38 = vector.extract_strided_slice %22 {offsets = [1, 0, 0], sizes = [1, 1, 128], strides = [1, 1, 1]} : vector<2x1x128xf32> to vector<1x1x128xf32>
    %39 = vector.shape_cast %38 : vector<1x1x128xf32> to vector<1x128xf32>
    %40 = vector.broadcast %39 : vector<1x128xf32> to vector<8x128xf32>
    %41 = arith.addf %37, %40 : vector<8x128xf32>
    %cst_26 = arith.constant 0.000000e+00 : f32
    %42 = vector.broadcast %cst_26 : f32 to vector<8x128xf32>
    %43 = arith.cmpf ogt, %41, %42 : vector<8x128xf32>
    %cst_27 = arith.constant 0.00999999977 : f32
    %44 = vector.broadcast %cst_27 : f32 to vector<8x128xf32>
    %45 = arith.mulf %44, %41 : vector<8x128xf32>
    %46 = arith.select %43, %41, %45 : vector<8x128xi1>, vector<8x128xf32>
    %c0_28 = arith.constant 0 : index
    %c0_29 = arith.constant 0 : index
    %c0_30 = arith.constant 0 : index
    %c0_31 = arith.constant 0 : index
    %47 = vector.load %arg14[%c0_28, %c0_29, %c0_30, %c0_31] : memref<1x2x128x128xf32, #tpu.memory_space<vmem>>, vector<1x2x128x128xf32>
    %48 = vector.shape_cast %47 : vector<1x2x128x128xf32> to vector<2x128x128xf32>
    %c0_32 = arith.constant 0 : index
    %c0_33 = arith.constant 0 : index
    %c0_34 = arith.constant 0 : index
    %c0_35 = arith.constant 0 : index
    %49 = vector.load %arg15[%c0_32, %c0_33, %c0_34, %c0_35] : memref<1x2x1x128xf32, #tpu.memory_space<vmem>>, vector<1x2x1x128xf32>
    %50 = vector.shape_cast %49 : vector<1x2x1x128xf32> to vector<2x1x128xf32>
    %51 = vector.shape_cast %3 : vector<8x128xf32> to vector<1x8x128xf32>
    %52 = vector.extract_strided_slice %48 {offsets = [0, 0, 0], sizes = [1, 128, 128], strides = [1, 1, 1]} : vector<2x128x128xf32> to vector<1x128x128xf32>
    %53 = vector.shape_cast %52 : vector<1x128x128xf32> to vector<128x128xf32>
    %cst_36 = arith.constant dense<0.000000e+00> : vector<8x128xf32>
    %54 = tpu.matmul %34, %53, %cst_36 {dimension_numbers = #tpu.dot_dimension_numbers<[1], [0], [0], [1], [0, 0, 1, 1], [], []>} : vector<8x128xf32>, vector<128x128xf32>, vector<8x128xf32> -> vector<8x128xf32>
    %55 = vector.extract_strided_slice %50 {offsets = [0, 0, 0], sizes = [1, 1, 128], strides = [1, 1, 1]} : vector<2x1x128xf32> to vector<1x1x128xf32>
    %56 = vector.shape_cast %55 : vector<1x1x128xf32> to vector<1x128xf32>
    %57 = vector.broadcast %56 : vector<1x128xf32> to vector<8x128xf32>
    %58 = arith.addf %54, %57 : vector<8x128xf32>
    %59 = vector.shape_cast %58 : vector<8x128xf32> to vector<1x8x128xf32>
    %60 = vector.extract_strided_slice %4 {offsets = [0, 0, 0, 0], sizes = [1, 1, 8, 8], strides = [1, 1, 1, 1]} : vector<1x2x8x8xf32> to vector<1x1x8x8xf32>
    %61 = vector.shape_cast %60 : vector<1x1x8x8xf32> to vector<1x8x8xf32>
    "tpu.trace_start"() <{level = 10 : i32, message = "bnm,bmh->bnh"}> : () -> ()
    %cst_37 = arith.constant dense<0.000000e+00> : vector<1x8x128xf32>
    %62 = tpu.matmul %61, %59, %cst_37 {dimension_numbers = #tpu.dot_dimension_numbers<[2], [1], [1], [2], [0, 0, 0, 1, 1, 2], [0], [0]>} : vector<1x8x8xf32>, vector<1x8x128xf32>, vector<1x8x128xf32> -> vector<1x8x128xf32>
    "tpu.trace_stop"() : () -> ()
    %63 = arith.addf %51, %62 : vector<1x8x128xf32>
    %64 = vector.extract_strided_slice %48 {offsets = [1, 0, 0], sizes = [1, 128, 128], strides = [1, 1, 1]} : vector<2x128x128xf32> to vector<1x128x128xf32>
    %65 = vector.shape_cast %64 : vector<1x128x128xf32> to vector<128x128xf32>
    %cst_38 = arith.constant dense<0.000000e+00> : vector<8x128xf32>
    %66 = tpu.matmul %46, %65, %cst_38 {dimension_numbers = #tpu.dot_dimension_numbers<[1], [0], [0], [1], [0, 0, 1, 1], [], []>} : vector<8x128xf32>, vector<128x128xf32>, vector<8x128xf32> -> vector<8x128xf32>
    %67 = vector.extract_strided_slice %50 {offsets = [1, 0, 0], sizes = [1, 1, 128], strides = [1, 1, 1]} : vector<2x1x128xf32> to vector<1x1x128xf32>
    %68 = vector.shape_cast %67 : vector<1x1x128xf32> to vector<1x128xf32>
    %69 = vector.broadcast %68 : vector<1x128xf32> to vector<8x128xf32>
    %70 = arith.addf %66, %69 : vector<8x128xf32>
    %71 = vector.shape_cast %70 : vector<8x128xf32> to vector<1x8x128xf32>
    %72 = vector.extract_strided_slice %4 {offsets = [0, 1, 0, 0], sizes = [1, 1, 8, 8], strides = [1, 1, 1, 1]} : vector<1x2x8x8xf32> to vector<1x1x8x8xf32>
    %73 = vector.shape_cast %72 : vector<1x1x8x8xf32> to vector<1x8x8xf32>
    "tpu.trace_start"() <{level = 10 : i32, message = "bnm,bmh->bnh"}> : () -> ()
    %cst_39 = arith.constant dense<0.000000e+00> : vector<1x8x128xf32>
    %74 = tpu.matmul %73, %71, %cst_39 {dimension_numbers = #tpu.dot_dimension_numbers<[2], [1], [1], [2], [0, 0, 0, 1, 1, 2], [0], [0]>} : vector<1x8x8xf32>, vector<1x8x128xf32>, vector<1x8x128xf32> -> vector<1x8x128xf32>
    "tpu.trace_stop"() : () -> ()
    %75 = arith.addf %63, %74 : vector<1x8x128xf32>
    %76 = vector.shape_cast %75 : vector<1x8x128xf32> to vector<8x128xf32>
    %c0_40 = arith.constant 0 : index
    %c0_41 = arith.constant 0 : index
    %77 = vector.load %arg23[%c0_40, %c0_41] : memref<8x128xf32, #tpu.memory_space<vmem>>, vector<8x128xf32>
    tpu.vector_store %arg23[%c0_40, %c0_41], %76 {strides = array<i32>} : memref<8x128xf32, #tpu.memory_space<vmem>>, vector<8x128xf32>,
    %c1_i32 = arith.constant 1 : i32
    %78 = arith.cmpi eq, %arg1, %c1_i32 : i32
    %79 = arith.extui %78 : i1 to i32
    %c0_i32_42 = arith.constant 0 : i32
    %80 = arith.cmpi ne, %79, %c0_i32_42 : i32
    scf.if %80 {
      %c0_43 = arith.constant 0 : index
      %c0_44 = arith.constant 0 : index
      %81 = vector.load %arg23[%c0_43, %c0_44] : memref<8x128xf32, #tpu.memory_space<vmem>>, vector<8x128xf32>
      %c0_45 = arith.constant 0 : index
      %c0_46 = arith.constant 0 : index
      %82 = vector.load %arg16[%c0_45, %c0_46] : memref<128x128xf32, #tpu.memory_space<vmem>>, vector<128x128xf32>
      %c0_47 = arith.constant 0 : index
      %c0_48 = arith.constant 0 : index
      %83 = vector.load %arg17[%c0_47, %c0_48] : memref<1x128xf32, #tpu.memory_space<vmem>>, vector<1x128xf32>
      %cst_49 = arith.constant dense<0.000000e+00> : vector<8x128xf32>
      %84 = tpu.matmul %81, %82, %cst_49 {dimension_numbers = #tpu.dot_dimension_numbers<[1], [0], [0], [1], [0, 0, 1, 1], [], []>} : vector<8x128xf32>, vector<128x128xf32>, vector<8x128xf32> -> vector<8x128xf32>
      %85 = vector.broadcast %83 : vector<1x128xf32> to vector<8x128xf32>
      %86 = arith.addf %84, %85 : vector<8x128xf32>
      %cst_50 = arith.constant 0.000000e+00 : f32
      %87 = vector.broadcast %cst_50 : f32 to vector<8x128xf32>
      %88 = arith.cmpf ogt, %86, %87 : vector<8x128xf32>
      %cst_51 = arith.constant 0.00999999977 : f32
      %89 = vector.broadcast %cst_51 : f32 to vector<8x128xf32>
      %90 = arith.mulf %89, %86 : vector<8x128xf32>
      %91 = arith.select %88, %86, %90 : vector<8x128xi1>, vector<8x128xf32>
      %c0_52 = arith.constant 0 : index
      %c0_53 = arith.constant 0 : index
      %92 = vector.load %arg18[%c0_52, %c0_53] : memref<128x128xf32, #tpu.memory_space<vmem>>, vector<128x128xf32>
      %c0_54 = arith.constant 0 : index
      %c0_55 = arith.constant 0 : index
      %93 = vector.load %arg19[%c0_54, %c0_55] : memref<1x128xf32, #tpu.memory_space<vmem>>, vector<1x128xf32>
      %cst_56 = arith.constant dense<0.000000e+00> : vector<8x128xf32>
      %94 = tpu.matmul %91, %92, %cst_56 {dimension_numbers = #tpu.dot_dimension_numbers<[1], [0], [0], [1], [0, 0, 1, 1], [], []>} : vector<8x128xf32>, vector<128x128xf32>, vector<8x128xf32> -> vector<8x128xf32>
      %95 = vector.broadcast %93 : vector<1x128xf32> to vector<8x128xf32>
      %96 = arith.addf %94, %95 : vector<8x128xf32>
      %cst_57 = arith.constant 0.000000e+00 : f32
      %97 = vector.broadcast %cst_57 : f32 to vector<8x128xf32>
      %98 = arith.cmpf ogt, %96, %97 : vector<8x128xf32>
      %cst_58 = arith.constant 0.00999999977 : f32
      %99 = vector.broadcast %cst_58 : f32 to vector<8x128xf32>
      %100 = arith.mulf %99, %96 : vector<8x128xf32>
      %101 = arith.select %98, %96, %100 : vector<8x128xi1>, vector<8x128xf32>
      %c0_59 = arith.constant 0 : index
      %c0_60 = arith.constant 0 : index
      %102 = vector.load %arg20[%c0_59, %c0_60] : memref<128x128xf32, #tpu.memory_space<vmem>>, vector<128x128xf32>
      %c0_61 = arith.constant 0 : index
      %c0_62 = arith.constant 0 : index
      %103 = vector.load %arg21[%c0_61, %c0_62] : memref<1x128xf32, #tpu.memory_space<vmem>>, vector<1x128xf32>
      %cst_63 = arith.constant dense<0.000000e+00> : vector<8x128xf32>
      %104 = tpu.matmul %101, %102, %cst_63 {dimension_numbers = #tpu.dot_dimension_numbers<[1], [0], [0], [1], [0, 0, 1, 1], [], []>} : vector<8x128xf32>, vector<128x128xf32>, vector<8x128xf32> -> vector<8x128xf32>
      %105 = vector.broadcast %103 : vector<1x128xf32> to vector<8x128xf32>
      %106 = arith.addf %104, %105 : vector<8x128xf32>
      %107 = vector.shape_cast %106 : vector<8x128xf32> to vector<1x8x128xf32>
      %c0_64 = arith.constant 0 : index
      %c0_65 = arith.constant 0 : index
      %c0_66 = arith.constant 0 : index
      %108 = vector.load %arg22[%c0_64, %c0_65, %c0_66] : memref<1x8x128xf32, #tpu.memory_space<vmem>>, vector<1x8x128xf32>
      tpu.vector_store %arg22[%c0_64, %c0_65, %c0_66], %107 {strides = array<i32>} : memref<1x8x128xf32, #tpu.memory_space<vmem>>, vector<1x8x128xf32>,
    } else {
    }
    return
  }
  func.func @transform_0(%arg0: i32, %arg1: i32) -> (i32, i32, i32) {
    %c0_i32 = arith.constant 0 : i32
    %c0_i32_0 = arith.constant 0 : i32
    %c0_i32_1 = arith.constant 0 : i32
    return %arg0, %c0_i32, %c0_i32_0 : i32, i32, i32
  }
  func.func @transform_1(%arg0: i32, %arg1: i32) -> (i32, i32, i32, i32) {
    %c0_i32 = arith.constant 0 : i32
    %c0_i32_0 = arith.constant 0 : i32
    %c0_i32_1 = arith.constant 0 : i32
    %c0_i32_2 = arith.constant 0 : i32
    return %arg0, %c0_i32, %c0_i32_0, %c0_i32_1 : i32, i32, i32, i32
  }
  func.func @transform_2(%arg0: i32, %arg1: i32) -> (i32, i32) {
    %c0_i32 = arith.constant 0 : i32
    %c0_i32_0 = arith.constant 0 : i32
    %c0_i32_1 = arith.constant 0 : i32
    return %c0_i32, %c0_i32_0 : i32, i32
  }
  func.func @transform_3(%arg0: i32, %arg1: i32) -> (i32, i32) {
    %c0_i32 = arith.constant 0 : i32
    %c0_i32_0 = arith.constant 0 : i32
    %c0_i32_1 = arith.constant 0 : i32
    return %c0_i32, %c0_i32_0 : i32, i32
  }
  func.func @transform_4(%arg0: i32, %arg1: i32) -> (i32, i32, i32) {
    %c0_i32 = arith.constant 0 : i32
    %c0_i32_0 = arith.constant 0 : i32
    %c0_i32_1 = arith.constant 0 : i32
    %c0_i32_2 = arith.constant 0 : i32
    return %c0_i32, %c0_i32_0, %c0_i32_1 : i32, i32, i32
  }
  func.func @transform_5(%arg0: i32, %arg1: i32) -> (i32, i32, i32) {
    %c0_i32 = arith.constant 0 : i32
    %c0_i32_0 = arith.constant 0 : i32
    %c0_i32_1 = arith.constant 0 : i32
    %c0_i32_2 = arith.constant 0 : i32
    return %c0_i32, %c0_i32_0, %c0_i32_1 : i32, i32, i32
  }
  func.func @transform_6(%arg0: i32, %arg1: i32) -> (i32, i32, i32) {
    %c0_i32 = arith.constant 0 : i32
    %c0_i32_0 = arith.constant 0 : i32
    %c0_i32_1 = arith.constant 0 : i32
    %c0_i32_2 = arith.constant 0 : i32
    return %c0_i32, %c0_i32_0, %c0_i32_1 : i32, i32, i32
  }
  func.func @transform_7(%arg0: i32, %arg1: i32) -> (i32, i32) {
    %c0_i32 = arith.constant 0 : i32
    %c0_i32_0 = arith.constant 0 : i32
    %c0_i32_1 = arith.constant 0 : i32
    return %c0_i32, %c0_i32_0 : i32, i32
  }
  func.func @transform_8(%arg0: i32, %arg1: i32) -> (i32, i32, i32) {
    %c0_i32 = arith.constant 0 : i32
    %c0_i32_0 = arith.constant 0 : i32
    %c0_i32_1 = arith.constant 0 : i32
    return %arg1, %c0_i32, %c0_i32_0 : i32, i32, i32
  }
  func.func @transform_9(%arg0: i32, %arg1: i32) -> (i32, i32, i32) {
    %c0_i32 = arith.constant 0 : i32
    %c0_i32_0 = arith.constant 0 : i32
    %c0_i32_1 = arith.constant 0 : i32
    return %arg1, %c0_i32, %c0_i32_0 : i32, i32, i32
  }
  func.func @transform_10(%arg0: i32, %arg1: i32) -> (i32, i32, i32, i32) {
    %c0_i32 = arith.constant 0 : i32
    %c0_i32_0 = arith.constant 0 : i32
    %c0_i32_1 = arith.constant 0 : i32
    %c0_i32_2 = arith.constant 0 : i32
    return %arg1, %c0_i32, %c0_i32_0, %c0_i32_1 : i32, i32, i32, i32
  }
  func.func @transform_11(%arg0: i32, %arg1: i32) -> (i32, i32, i32, i32) {
    %c0_i32 = arith.constant 0 : i32
    %c0_i32_0 = arith.constant 0 : i32
    %c0_i32_1 = arith.constant 0 : i32
    %c0_i32_2 = arith.constant 0 : i32
    return %arg1, %c0_i32, %c0_i32_0, %c0_i32_1 : i32, i32, i32, i32
  }
  func.func @transform_12(%arg0: i32, %arg1: i32) -> (i32, i32, i32, i32) {
    %c0_i32 = arith.constant 0 : i32
    %c0_i32_0 = arith.constant 0 : i32
    %c0_i32_1 = arith.constant 0 : i32
    %c0_i32_2 = arith.constant 0 : i32
    return %arg1, %c0_i32, %c0_i32_0, %c0_i32_1 : i32, i32, i32, i32
  }
  func.func @transform_13(%arg0: i32, %arg1: i32) -> (i32, i32, i32, i32) {
    %c0_i32 = arith.constant 0 : i32
    %c0_i32_0 = arith.constant 0 : i32
    %c0_i32_1 = arith.constant 0 : i32
    %c0_i32_2 = arith.constant 0 : i32
    return %arg1, %c0_i32, %c0_i32_0, %c0_i32_1 : i32, i32, i32, i32
  }
  func.func @transform_14(%arg0: i32, %arg1: i32) -> (i32, i32) {
    %c0_i32 = arith.constant 0 : i32
    %c0_i32_0 = arith.constant 0 : i32
    %c0_i32_1 = arith.constant 0 : i32
    return %c0_i32, %c0_i32_0 : i32, i32
  }
  func.func @transform_15(%arg0: i32, %arg1: i32) -> (i32, i32) {
    %c0_i32 = arith.constant 0 : i32
    %c0_i32_0 = arith.constant 0 : i32
    %c0_i32_1 = arith.constant 0 : i32
    return %c0_i32, %c0_i32_0 : i32, i32
  }
  func.func @transform_16(%arg0: i32, %arg1: i32) -> (i32, i32) {
    %c0_i32 = arith.constant 0 : i32
    %c0_i32_0 = arith.constant 0 : i32
    %c0_i32_1 = arith.constant 0 : i32
    return %c0_i32, %c0_i32_0 : i32, i32
  }
  func.func @transform_17(%arg0: i32, %arg1: i32) -> (i32, i32) {
    %c0_i32 = arith.constant 0 : i32
    %c0_i32_0 = arith.constant 0 : i32
    %c0_i32_1 = arith.constant 0 : i32
    return %c0_i32, %c0_i32_0 : i32, i32
  }
  func.func @transform_18(%arg0: i32, %arg1: i32) -> (i32, i32) {
    %c0_i32 = arith.constant 0 : i32
    %c0_i32_0 = arith.constant 0 : i32
    %c0_i32_1 = arith.constant 0 : i32
    return %c0_i32, %c0_i32_0 : i32, i32
  }
  func.func @transform_19(%arg0: i32, %arg1: i32) -> (i32, i32) {
    %c0_i32 = arith.constant 0 : i32
    %c0_i32_0 = arith.constant 0 : i32
    %c0_i32_1 = arith.constant 0 : i32
    return %c0_i32, %c0_i32_0 : i32, i32
  }
  func.func @transform_20(%arg0: i32, %arg1: i32) -> (i32, i32, i32) {
    %c0_i32 = arith.constant 0 : i32
    %c0_i32_0 = arith.constant 0 : i32
    %c0_i32_1 = arith.constant 0 : i32
    return %arg0, %c0_i32, %c0_i32_0 : i32, i32, i32
  }
}

</mosaic_0001>

<llo_original>
// kernel: tpu_custom_call.1
$region0: #{tpu_custom_call.1}
  #allocation0 [shape = 'u32[]', space=smem, size = 0x4, offset = 0x4, fixed_abs, tag = 'smem constant byte address 0x4 - core index']
  #allocation1 [shape = 'u32[144,128]{1,0:T(1,128)}', space=vmem, size = 0x12000, scoped, tag = 'internal scratch']
  #allocation2 [shape = 'f32[8,128]{1,0:T(8,128)}', space=vmem, size = 0x1000, scoped, tag = 'scratch operand']
  %s0 = inlined_call_operand.hbm [shape: f32[2,8,128], index: 0, kind: input, shape index: {}]
  %s1 = inlined_call_operand.hbm [shape: f32[2,2,8,8], index: 1, kind: input, shape index: {}]
  %s2 = inlined_call_operand.hbm [shape: f32[128,256], index: 2, kind: input, shape index: {}]
  %s3 = inlined_call_operand.vmem [shape: f32[1,256], index: 3, kind: input, shape index: {}]
  %s4 = inlined_call_operand.hbm [shape: f32[2,128,128], index: 4, kind: input, shape index: {}]
  %s5 = inlined_call_operand.vmem [shape: f32[2,1,128], index: 5, kind: input, shape index: {}]
  %s6 = inlined_call_operand.hbm [shape: f32[2,128,128], index: 6, kind: input, shape index: {}]
  %s7 = inlined_call_operand.vmem [shape: f32[1,128], index: 7, kind: input, shape index: {}]
  %s8 = inlined_call_operand.hbm [shape: f32[2,128,256], index: 8, kind: input, shape index: {}]
  %s9 = inlined_call_operand.vmem [shape: f32[2,1,256], index: 9, kind: input, shape index: {}]
  %s10 = inlined_call_operand.hbm [shape: f32[2,2,128,128], index: 10, kind: input, shape index: {}]
  %s11 = inlined_call_operand.vmem [shape: f32[2,2,1,128], index: 11, kind: input, shape index: {}]
  %s12 = inlined_call_operand.hbm [shape: f32[2,2,128,128], index: 12, kind: input, shape index: {}]
  %s13 = inlined_call_operand.vmem [shape: f32[2,2,1,128], index: 13, kind: input, shape index: {}]
  %s14 = inlined_call_operand.hbm [shape: f32[128,128], index: 14, kind: input, shape index: {}]
  %s15 = inlined_call_operand.vmem [shape: f32[1,128], index: 15, kind: input, shape index: {}]
  %s16 = inlined_call_operand.hbm [shape: f32[128,128], index: 16, kind: input, shape index: {}]
  %s17 = inlined_call_operand.vmem [shape: f32[1,128], index: 17, kind: input, shape index: {}]
  %s18 = inlined_call_operand.hbm [shape: f32[128,128], index: 18, kind: input, shape index: {}]
  %s19 = inlined_call_operand.vmem [shape: f32[1,128], index: 19, kind: input, shape index: {}]
  %s20 = inlined_call_operand.hbm [shape: f32[2,8,128], index: 20, kind: output, shape index: {}]
  %s21 = sld [smem:[#allocation0]]
  $region165: #{tpu_custom_call.1} parent=0
    _
  %s23 = ssub.s32 1, %s21
  %s24 = scalar_select 0, %s23, %s21
  $region1: #{tpu_custom_call.1} parent=0
    #allocation3 [shape = 'u8[8192]{0}', space=vmem, size = 0x2000, scoped, tag = 'input window, operand 0']
    #allocation4 [shape = 's32[2]{0}', space=sflag, size = 0x8, scoped, tag = 'scoped memory for tpu_custom_call.1']
    #allocation5 [shape = 's32[2]{0}', space=sflag, size = 0x8, scoped, tag = 'scoped memory for tpu_custom_call.1']
    #allocation6 [shape = 'u8[16384]{0}', space=vmem, size = 0x4000, scoped, tag = 'input window, operand 1']
    #allocation7 [shape = 's32[2]{0}', space=sflag, size = 0x8, scoped, tag = 'scoped memory for tpu_custom_call.1']
    #allocation8 [shape = 'u8[131072]{0}', space=vmem, size = 0x20000, scoped, tag = 'input window, operand 2, single buffered']
    #allocation9 [shape = 'u8[131072]{0}', space=vmem, size = 0x20000, scoped, tag = 'input window, operand 4, single buffered']
    #allocation10 [shape = 's32[1]{0}', space=sflag, size = 0x4, scoped, tag = 'scoped memory for tpu_custom_call.1']
    #allocation11 [shape = 'u8[131072]{0}', space=vmem, size = 0x20000, scoped, tag = 'input window, operand 6, single buffered']
    #allocation12 [shape = 'u8[262144]{0}', space=vmem, size = 0x40000, scoped, tag = 'input window, operand 8']
    #allocation13 [shape = 's32[2]{0}', space=sflag, size = 0x8, scoped, tag = 'scoped memory for tpu_custom_call.1']
    #allocation14 [shape = 'u8[262144]{0}', space=vmem, size = 0x40000, scoped, tag = 'input window, operand 10']
    #allocation15 [shape = 'u8[262144]{0}', space=vmem, size = 0x40000, scoped, tag = 'input window, operand 12']
    #allocation16 [shape = 's32[2]{0}', space=sflag, size = 0x8, scoped, tag = 'scoped memory for tpu_custom_call.1']
    #allocation17 [shape = 'u8[65536]{0}', space=vmem, size = 0x10000, scoped, tag = 'input window, operand 14, single buffered']
    #allocation18 [shape = 'u8[65536]{0}', space=vmem, size = 0x10000, scoped, tag = 'input window, operand 16, single buffered']
    #allocation19 [shape = 's32[1]{0}', space=sflag, size = 0x4, scoped, tag = 'scoped memory for tpu_custom_call.1']
    #allocation20 [shape = 'u8[65536]{0}', space=vmem, size = 0x10000, scoped, tag = 'input window, operand 18, single buffered']
    #allocation21 [shape = 'u8[8192]{0}', space=vmem, size = 0x2000, scoped, tag = 'output window, operand 0']
    %25 = vsyncpa [#allocation4], 0
    %s26 = scalar_lea.sflag [#allocation4], 1
    %27 = vsyncpa %s26, 0
    %28 = vsyncpa [#allocation7], 0
    %s29 = scalar_lea.sflag [#allocation7], 1
    %30 = vsyncpa %s29, 0
    %31 = vsyncpa [#allocation10], 0
    %32 = vsyncpa [#allocation13], 0
    %s33 = scalar_lea.sflag [#allocation13], 1
    %34 = vsyncpa %s33, 0
    %35 = vsyncpa [#allocation16], 0
    %s36 = scalar_lea.sflag [#allocation16], 1
    %37 = vsyncpa %s36, 0
    %38 = vsyncpa [#allocation19], 0
    %39 = vsyncpa [#allocation5], 0
    %s40 = scalar_lea.sflag [#allocation5], 1
    %41 = vsyncpa %s40, 0
    loop: start=0, step=1, limit=6
    $region2: #{tpu_custom_call.1} parent=1 // loop_pre_header
      _
    $region3: #{tpu_custom_call.1} parent=1 // loop_header
      %s43 = sphi 0, %s47
      %p44 = scmp.ge.s32.totalorder %s43, 6
      %s50 = sphi 0, %s62
      %s51 = sphi 0, %s58
      %s52 = sphi 0, %s50
      %s53 = sphi 0, %s51
      %s54 = sphi 0, %s52
      %s55 = sphi 0, %s53
      %s65 = sphi 0, %s67
      %s68 = sphi 0, %s65
      %s69 = sphi 0, %s68
      %s85 = sphi 0, %s69
      %s91 = sphi 0, %s93
      %s94 = sphi 0, %s91
      %s95 = sphi 0, %s94
      %s111 = sphi 0, %s95
      %s115 = sphi 0, %s115
      %s117 = sphi 0, %s115
      %s118 = sphi 0, %s117
      %s132 = sphi 0, %s118
      %s136 = sphi 0, %s136
      %s138 = sphi 0, %s136
      %s139 = sphi 0, %s138
      %s153 = sphi 0, %s139
      %s157 = sphi 0, %s157
      %s159 = sphi 0, %s157
      %s160 = sphi 0, %s159
      %s174 = sphi 0, %s160
      %s178 = sphi 0, %s178
      %s180 = sphi 0, %s178
      %s181 = sphi 0, %s180
      %s195 = sphi 0, %s181
      %s199 = sphi 0, %s199
      %s201 = sphi 0, %s199
      %s202 = sphi 0, %s201
      %s216 = sphi 0, %s202
      %s220 = sphi 0, %s220
      %s222 = sphi 0, %s220
      %s223 = sphi 0, %s222
      %s237 = sphi 0, %s223
      %s243 = sphi 0, %s245
      %s246 = sphi 0, %s243
      %s247 = sphi 0, %s246
      %s263 = sphi 0, %s247
      %s269 = sphi 0, %s271
      %s272 = sphi 0, %s269
      %s273 = sphi 0, %s272
      %s289 = sphi 0, %s273
      %s295 = sphi 0, %s297
      %s298 = sphi 0, %s295
      %s299 = sphi 0, %s298
      %s315 = sphi 0, %s299
      %s321 = sphi 0, %s323
      %s324 = sphi 0, %s321
      %s325 = sphi 0, %s324
      %s341 = sphi 0, %s325
      %s347 = sphi 0, %s349
      %s350 = sphi 0, %s347
      %s351 = sphi 0, %s350
      %s367 = sphi 0, %s351
      %s373 = sphi 0, %s375
      %s376 = sphi 0, %s373
      %s377 = sphi 0, %s376
      %s393 = sphi 0, %s377
      %s397 = sphi 0, %s397
      %s399 = sphi 0, %s397
      %s400 = sphi 0, %s399
      %s414 = sphi 0, %s400
      %s418 = sphi 0, %s418
      %s420 = sphi 0, %s418
      %s421 = sphi 0, %s420
      %s435 = sphi 0, %s421
      %s439 = sphi 0, %s439
      %s441 = sphi 0, %s439
      %s442 = sphi 0, %s441
      %s456 = sphi 0, %s442
      %s460 = sphi 0, %s460
      %s462 = sphi 0, %s460
      %s463 = sphi 0, %s462
      %s477 = sphi 0, %s463
      %s481 = sphi 0, %s481
      %s483 = sphi 0, %s481
      %s484 = sphi 0, %s483
      %s498 = sphi 0, %s484
      %s502 = sphi 0, %s502
      %s504 = sphi 0, %s502
      %s505 = sphi 0, %s504
      %s519 = sphi 0, %s505
      %s525 = sphi 0, %s527
      %s528 = sphi 0, %s525
      %s529 = sphi 0, %s528
      %s545 = sphi 0, %s529
    $region4: #{tpu_custom_call.1} parent=1 // loop_header_branch
      %46 = sbr.rel (%p44) target = $region8
    $region5: #{tpu_custom_call.1} parent=1 // loop_body
      %s48 = ssub.s32 %s43, 1
      %s49 = ssub.s32 %s43, 2
      %s56 = sadd.s32 1, %s51
      %p57 = scmp.ge.s32.totalorder %s56, 2
      %s58 = scalar_select %p57, 0, %s56
      %s59 = sadd.s32 1, %s50
      %s60 = scalar_select %p57, %s59, %s50
      %p61 = scmp.ge.s32.totalorder %s60, 2
      %s62 = scalar_select %p61, 0, %s60
      %s63 = ssub.s32 %s50, %s62
      %p64 = scmp.eq.s32.totalorder %s63, 0
      %s66 = sadd.s32 %s65, 1
      %s67 = scalar_select %p64, %s65, %s66
      %p70 = pneg %p64
      %p71 = scmp.eq.s32.totalorder %s43, 3
      %p72 = por %p70, %p71
      %p73 = scmp.ne.s32.totalorder %s65, %s68
      %p74 = scmp.eq.s32.totalorder %s43, 0
      %p75 = por %p73, %p74
      %p76 = scmp.ne.s32.totalorder %s65, %s68
      %p77 = scmp.eq.s32.totalorder %s48, 3
      %p78 = por %p76, %p77
      %p79 = scmp.ne.s32.totalorder %s68, %s69
      %p80 = scmp.eq.s32.totalorder %s48, 0
      %p81 = por %p79, %p80
      %p82 = scmp.ne.s32.totalorder %s68, %s69
      %p83 = scmp.eq.s32.totalorder %s49, 3
      %p84 = por %p82, %p83
      %p86 = scmp.ne.s32.totalorder %s69, %s85
      %p87 = scmp.eq.s32.totalorder %s49, 0
      %p88 = por %p86, %p87
      %s89 = ssub.s32 %s50, %s62
      %p90 = scmp.eq.s32.totalorder %s89, 0
      %s92 = sadd.s32 %s91, 1
      %s93 = scalar_select %p90, %s91, %s92
      %p96 = pneg %p90
      %p97 = scmp.eq.s32.totalorder %s43, 3
      %p98 = por %p96, %p97
      %p99 = scmp.ne.s32.totalorder %s91, %s94
      %p100 = scmp.eq.s32.totalorder %s43, 0
      %p101 = por %p99, %p100
      %p102 = scmp.ne.s32.totalorder %s91, %s94
      %p103 = scmp.eq.s32.totalorder %s48, 3
      %p104 = por %p102, %p103
      %p105 = scmp.ne.s32.totalorder %s94, %s95
      %p106 = scmp.eq.s32.totalorder %s48, 0
      %p107 = por %p105, %p106
      %p108 = scmp.ne.s32.totalorder %s94, %s95
      %p109 = scmp.eq.s32.totalorder %s49, 3
      %p110 = por %p108, %p109
      %p112 = scmp.ne.s32.totalorder %s95, %s111
      %p113 = scmp.eq.s32.totalorder %s49, 0
      %p114 = por %p112, %p113
      %s116 = sadd.s32 %s115, 1
      %p119 = scmp.eq.s32.totalorder %s43, 3
      %p120 = scmp.ne.s32.totalorder %s115, %s117
      %p121 = scmp.eq.s32.totalorder %s43, 0
      %p122 = por %p120, %p121
      %p123 = scmp.ne.s32.totalorder %s115, %s117
      %p124 = scmp.eq.s32.totalorder %s48, 3
      %p125 = por %p123, %p124
      %p126 = scmp.ne.s32.totalorder %s117, %s118
      %p127 = scmp.eq.s32.totalorder %s48, 0
      %p128 = por %p126, %p127
      %p129 = scmp.ne.s32.totalorder %s117, %s118
      %p130 = scmp.eq.s32.totalorder %s49, 3
      %p131 = por %p129, %p130
      %p133 = scmp.ne.s32.totalorder %s118, %s132
      %p134 = scmp.eq.s32.totalorder %s49, 0
      %p135 = por %p133, %p134
      %s137 = sadd.s32 %s136, 1
      %p140 = scmp.eq.s32.totalorder %s43, 3
      %p141 = scmp.ne.s32.totalorder %s136, %s138
      %p142 = scmp.eq.s32.totalorder %s43, 0
      %p143 = por %p141, %p142
      %p144 = scmp.ne.s32.totalorder %s136, %s138
      %p145 = scmp.eq.s32.totalorder %s48, 3
      %p146 = por %p144, %p145
      %p147 = scmp.ne.s32.totalorder %s138, %s139
      %p148 = scmp.eq.s32.totalorder %s48, 0
      %p149 = por %p147, %p148
      %p150 = scmp.ne.s32.totalorder %s138, %s139
      %p151 = scmp.eq.s32.totalorder %s49, 3
      %p152 = por %p150, %p151
      %p154 = scmp.ne.s32.totalorder %s139, %s153
      %p155 = scmp.eq.s32.totalorder %s49, 0
      %p156 = por %p154, %p155
      %s158 = sadd.s32 %s157, 1
      %p161 = scmp.eq.s32.totalorder %s43, 3
      %p162 = scmp.ne.s32.totalorder %s157, %s159
      %p163 = scmp.eq.s32.totalorder %s43, 0
      %p164 = por %p162, %p163
      %p165 = scmp.ne.s32.totalorder %s157, %s159
      %p166 = scmp.eq.s32.totalorder %s48, 3
      %p167 = por %p165, %p166
      %p168 = scmp.ne.s32.totalorder %s159, %s160
      %p169 = scmp.eq.s32.totalorder %s48, 0
      %p170 = por %p168, %p169
      %p171 = scmp.ne.s32.totalorder %s159, %s160
      %p172 = scmp.eq.s32.totalorder %s49, 3
      %p173 = por %p171, %p172
      %p175 = scmp.ne.s32.totalorder %s160, %s174
      %p176 = scmp.eq.s32.totalorder %s49, 0
      %p177 = por %p175, %p176
      %s179 = sadd.s32 %s178, 1
      %p182 = scmp.eq.s32.totalorder %s43, 3
      %p183 = scmp.ne.s32.totalorder %s178, %s180
      %p184 = scmp.eq.s32.totalorder %s43, 0
      %p185 = por %p183, %p184
      %p186 = scmp.ne.s32.totalorder %s178, %s180
      %p187 = scmp.eq.s32.totalorder %s48, 3
      %p188 = por %p186, %p187
      %p189 = scmp.ne.s32.totalorder %s180, %s181
      %p190 = scmp.eq.s32.totalorder %s48, 0
      %p191 = por %p189, %p190
      %p192 = scmp.ne.s32.totalorder %s180, %s181
      %p193 = scmp.eq.s32.totalorder %s49, 3
      %p194 = por %p192, %p193
      %p196 = scmp.ne.s32.totalorder %s181, %s195
      %p197 = scmp.eq.s32.totalorder %s49, 0
      %p198 = por %p196, %p197
      %s200 = sadd.s32 %s199, 1
      %p203 = scmp.eq.s32.totalorder %s43, 3
      %p204 = scmp.ne.s32.totalorder %s199, %s201
      %p205 = scmp.eq.s32.totalorder %s43, 0
      %p206 = por %p204, %p205
      %p207 = scmp.ne.s32.totalorder %s199, %s201
      %p208 = scmp.eq.s32.totalorder %s48, 3
      %p209 = por %p207, %p208
      %p210 = scmp.ne.s32.totalorder %s201, %s202
      %p211 = scmp.eq.s32.totalorder %s48, 0
      %p212 = por %p210, %p211
      %p213 = scmp.ne.s32.totalorder %s201, %s202
      %p214 = scmp.eq.s32.totalorder %s49, 3
      %p215 = por %p213, %p214
      %p217 = scmp.ne.s32.totalorder %s202, %s216
      %p218 = scmp.eq.s32.totalorder %s49, 0
      %p219 = por %p217, %p218
      %s221 = sadd.s32 %s220, 1
      %p224 = scmp.eq.s32.totalorder %s43, 3
      %p225 = scmp.ne.s32.totalorder %s220, %s222
      %p226 = scmp.eq.s32.totalorder %s43, 0
      %p227 = por %p225, %p226
      %p228 = scmp.ne.s32.totalorder %s220, %s222
      %p229 = scmp.eq.s32.totalorder %s48, 3
      %p230 = por %p228, %p229
      %p231 = scmp.ne.s32.totalorder %s222, %s223
      %p232 = scmp.eq.s32.totalorder %s48, 0
      %p233 = por %p231, %p232
      %p234 = scmp.ne.s32.totalorder %s222, %s223
      %p235 = scmp.eq.s32.totalorder %s49, 3
      %p236 = por %p234, %p235
      %p238 = scmp.ne.s32.totalorder %s223, %s237
      %p239 = scmp.eq.s32.totalorder %s49, 0
      %p240 = por %p238, %p239
      %s241 = ssub.s32 %s51, %s58
      %p242 = scmp.eq.s32.totalorder %s241, 0
      %s244 = sadd.s32 %s243, 1
      %s245 = scalar_select %p242, %s243, %s244
      %p248 = pneg %p242
      %p249 = scmp.eq.s32.totalorder %s43, 3
      %p250 = por %p248, %p249
      %p251 = scmp.ne.s32.totalorder %s243, %s246
      %p252 = scmp.eq.s32.totalorder %s43, 0
      %p253 = por %p251, %p252
      %p254 = scmp.ne.s32.totalorder %s243, %s246
      %p255 = scmp.eq.s32.totalorder %s48, 3
      %p256 = por %p254, %p255
      %p257 = scmp.ne.s32.totalorder %s246, %s247
      %p258 = scmp.eq.s32.totalorder %s48, 0
      %p259 = por %p257, %p258
      %p260 = scmp.ne.s32.totalorder %s246, %s247
      %p261 = scmp.eq.s32.totalorder %s49, 3
      %p262 = por %p260, %p261
      %p264 = scmp.ne.s32.totalorder %s247, %s263
      %p265 = scmp.eq.s32.totalorder %s49, 0
      %p266 = por %p264, %p265
      %s267 = ssub.s32 %s51, %s58
      %p268 = scmp.eq.s32.totalorder %s267, 0
      %s270 = sadd.s32 %s269, 1
      %s271 = scalar_select %p268, %s269, %s270
      %p274 = pneg %p268
      %p275 = scmp.eq.s32.totalorder %s43, 3
      %p276 = por %p274, %p275
      %p277 = scmp.ne.s32.totalorder %s269, %s272
      %p278 = scmp.eq.s32.totalorder %s43, 0
      %p279 = por %p277, %p278
      %p280 = scmp.ne.s32.totalorder %s269, %s272
      %p281 = scmp.eq.s32.totalorder %s48, 3
      %p282 = por %p280, %p281
      %p283 = scmp.ne.s32.totalorder %s272, %s273
      %p284 = scmp.eq.s32.totalorder %s48, 0
      %p285 = por %p283, %p284
      %p286 = scmp.ne.s32.totalorder %s272, %s273
      %p287 = scmp.eq.s32.totalorder %s49, 3
      %p288 = por %p286, %p287
      %p290 = scmp.ne.s32.totalorder %s273, %s289
      %p291 = scmp.eq.s32.totalorder %s49, 0
      %p292 = por %p290, %p291
      %s293 = ssub.s32 %s51, %s58
      %p294 = scmp.eq.s32.totalorder %s293, 0
      %s296 = sadd.s32 %s295, 1
      %s297 = scalar_select %p294, %s295, %s296
      %p300 = pneg %p294
      %p301 = scmp.eq.s32.totalorder %s43, 3
      %p302 = por %p300, %p301
      %p303 = scmp.ne.s32.totalorder %s295, %s298
      %p304 = scmp.eq.s32.totalorder %s43, 0
      %p305 = por %p303, %p304
      %p306 = scmp.ne.s32.totalorder %s295, %s298
      %p307 = scmp.eq.s32.totalorder %s48, 3
      %p308 = por %p306, %p307
      %p309 = scmp.ne.s32.totalorder %s298, %s299
      %p310 = scmp.eq.s32.totalorder %s48, 0
      %p311 = por %p309, %p310
      %p312 = scmp.ne.s32.totalorder %s298, %s299
      %p313 = scmp.eq.s32.totalorder %s49, 3
      %p314 = por %p312, %p313
      %p316 = scmp.ne.s32.totalorder %s299, %s315
      %p317 = scmp.eq.s32.totalorder %s49, 0
      %p318 = por %p316, %p317
      %s319 = ssub.s32 %s51, %s58
      %p320 = scmp.eq.s32.totalorder %s319, 0
      %s322 = sadd.s32 %s321, 1
      %s323 = scalar_select %p320, %s321, %s322
      %p326 = pneg %p320
      %p327 = scmp.eq.s32.totalorder %s43, 3
      %p328 = por %p326, %p327
      %p329 = scmp.ne.s32.totalorder %s321, %s324
      %p330 = scmp.eq.s32.totalorder %s43, 0
      %p331 = por %p329, %p330
      %p332 = scmp.ne.s32.totalorder %s321, %s324
      %p333 = scmp.eq.s32.totalorder %s48, 3
      %p334 = por %p332, %p333
      %p335 = scmp.ne.s32.totalorder %s324, %s325
      %p336 = scmp.eq.s32.totalorder %s48, 0
      %p337 = por %p335, %p336
      %p338 = scmp.ne.s32.totalorder %s324, %s325
      %p339 = scmp.eq.s32.totalorder %s49, 3
      %p340 = por %p338, %p339
      %p342 = scmp.ne.s32.totalorder %s325, %s341
      %p343 = scmp.eq.s32.totalorder %s49, 0
      %p344 = por %p342, %p343
      %s345 = ssub.s32 %s51, %s58
      %p346 = scmp.eq.s32.totalorder %s345, 0
      %s348 = sadd.s32 %s347, 1
      %s349 = scalar_select %p346, %s347, %s348
      %p352 = pneg %p346
      %p353 = scmp.eq.s32.totalorder %s43, 3
      %p354 = por %p352, %p353
      %p355 = scmp.ne.s32.totalorder %s347, %s350
      %p356 = scmp.eq.s32.totalorder %s43, 0
      %p357 = por %p355, %p356
      %p358 = scmp.ne.s32.totalorder %s347, %s350
      %p359 = scmp.eq.s32.totalorder %s48, 3
      %p360 = por %p358, %p359
      %p361 = scmp.ne.s32.totalorder %s350, %s351
      %p362 = scmp.eq.s32.totalorder %s48, 0
      %p363 = por %p361, %p362
      %p364 = scmp.ne.s32.totalorder %s350, %s351
      %p365 = scmp.eq.s32.totalorder %s49, 3
      %p366 = por %p364, %p365
      %p368 = scmp.ne.s32.totalorder %s351, %s367
      %p369 = scmp.eq.s32.totalorder %s49, 0
      %p370 = por %p368, %p369
      %s371 = ssub.s32 %s51, %s58
      %p372 = scmp.eq.s32.totalorder %s371, 0
      %s374 = sadd.s32 %s373, 1
      %s375 = scalar_select %p372, %s373, %s374
      %p378 = pneg %p372
      %p379 = scmp.eq.s32.totalorder %s43, 3
      %p380 = por %p378, %p379
      %p381 = scmp.ne.s32.totalorder %s373, %s376
      %p382 = scmp.eq.s32.totalorder %s43, 0
      %p383 = por %p381, %p382
      %p384 = scmp.ne.s32.totalorder %s373, %s376
      %p385 = scmp.eq.s32.totalorder %s48, 3
      %p386 = por %p384, %p385
      %p387 = scmp.ne.s32.totalorder %s376, %s377
      %p388 = scmp.eq.s32.totalorder %s48, 0
      %p389 = por %p387, %p388
      %p390 = scmp.ne.s32.totalorder %s376, %s377
      %p391 = scmp.eq.s32.totalorder %s49, 3
      %p392 = por %p390, %p391
      %p394 = scmp.ne.s32.totalorder %s377, %s393
      %p395 = scmp.eq.s32.totalorder %s49, 0
      %p396 = por %p394, %p395
      %s398 = sadd.s32 %s397, 1
      %p401 = scmp.eq.s32.totalorder %s43, 3
      %p402 = scmp.ne.s32.totalorder %s397, %s399
      %p403 = scmp.eq.s32.totalorder %s43, 0
      %p404 = por %p402, %p403
      %p405 = scmp.ne.s32.totalorder %s397, %s399
      %p406 = scmp.eq.s32.totalorder %s48, 3
      %p407 = por %p405, %p406
      %p408 = scmp.ne.s32.totalorder %s399, %s400
      %p409 = scmp.eq.s32.totalorder %s48, 0
      %p410 = por %p408, %p409
      %p411 = scmp.ne.s32.totalorder %s399, %s400
      %p412 = scmp.eq.s32.totalorder %s49, 3
      %p413 = por %p411, %p412
      %p415 = scmp.ne.s32.totalorder %s400, %s414
      %p416 = scmp.eq.s32.totalorder %s49, 0
      %p417 = por %p415, %p416
      %s419 = sadd.s32 %s418, 1
      %p422 = scmp.eq.s32.totalorder %s43, 3
      %p423 = scmp.ne.s32.totalorder %s418, %s420
      %p424 = scmp.eq.s32.totalorder %s43, 0
      %p425 = por %p423, %p424
      %p426 = scmp.ne.s32.totalorder %s418, %s420
      %p427 = scmp.eq.s32.totalorder %s48, 3
      %p428 = por %p426, %p427
      %p429 = scmp.ne.s32.totalorder %s420, %s421
      %p430 = scmp.eq.s32.totalorder %s48, 0
      %p431 = por %p429, %p430
      %p432 = scmp.ne.s32.totalorder %s420, %s421
      %p433 = scmp.eq.s32.totalorder %s49, 3
      %p434 = por %p432, %p433
      %p436 = scmp.ne.s32.totalorder %s421, %s435
      %p437 = scmp.eq.s32.totalorder %s49, 0
      %p438 = por %p436, %p437
      %s440 = sadd.s32 %s439, 1
      %p443 = scmp.eq.s32.totalorder %s43, 3
      %p444 = scmp.ne.s32.totalorder %s439, %s441
      %p445 = scmp.eq.s32.totalorder %s43, 0
      %p446 = por %p444, %p445
      %p447 = scmp.ne.s32.totalorder %s439, %s441
      %p448 = scmp.eq.s32.totalorder %s48, 3
      %p449 = por %p447, %p448
      %p450 = scmp.ne.s32.totalorder %s441, %s442
      %p451 = scmp.eq.s32.totalorder %s48, 0
      %p452 = por %p450, %p451
      %p453 = scmp.ne.s32.totalorder %s441, %s442
      %p454 = scmp.eq.s32.totalorder %s49, 3
      %p455 = por %p453, %p454
      %p457 = scmp.ne.s32.totalorder %s442, %s456
      %p458 = scmp.eq.s32.totalorder %s49, 0
      %p459 = por %p457, %p458
      %s461 = sadd.s32 %s460, 1
      %p464 = scmp.eq.s32.totalorder %s43, 3
      %p465 = scmp.ne.s32.totalorder %s460, %s462
      %p466 = scmp.eq.s32.totalorder %s43, 0
      %p467 = por %p465, %p466
      %p468 = scmp.ne.s32.totalorder %s460, %s462
      %p469 = scmp.eq.s32.totalorder %s48, 3
      %p470 = por %p468, %p469
      %p471 = scmp.ne.s32.totalorder %s462, %s463
      %p472 = scmp.eq.s32.totalorder %s48, 0
      %p473 = por %p471, %p472
      %p474 = scmp.ne.s32.totalorder %s462, %s463
      %p475 = scmp.eq.s32.totalorder %s49, 3
      %p476 = por %p474, %p475
      %p478 = scmp.ne.s32.totalorder %s463, %s477
      %p479 = scmp.eq.s32.totalorder %s49, 0
      %p480 = por %p478, %p479
      %s482 = sadd.s32 %s481, 1
      %p485 = scmp.eq.s32.totalorder %s43, 3
      %p486 = scmp.ne.s32.totalorder %s481, %s483
      %p487 = scmp.eq.s32.totalorder %s43, 0
      %p488 = por %p486, %p487
      %p489 = scmp.ne.s32.totalorder %s481, %s483
      %p490 = scmp.eq.s32.totalorder %s48, 3
      %p491 = por %p489, %p490
      %p492 = scmp.ne.s32.totalorder %s483, %s484
      %p493 = scmp.eq.s32.totalorder %s48, 0
      %p494 = por %p492, %p493
      %p495 = scmp.ne.s32.totalorder %s483, %s484
      %p496 = scmp.eq.s32.totalorder %s49, 3
      %p497 = por %p495, %p496
      %p499 = scmp.ne.s32.totalorder %s484, %s498
      %p500 = scmp.eq.s32.totalorder %s49, 0
      %p501 = por %p499, %p500
      %s503 = sadd.s32 %s502, 1
      %p506 = scmp.eq.s32.totalorder %s43, 3
      %p507 = scmp.ne.s32.totalorder %s502, %s504
      %p508 = scmp.eq.s32.totalorder %s43, 0
      %p509 = por %p507, %p508
      %p510 = scmp.ne.s32.totalorder %s502, %s504
      %p511 = scmp.eq.s32.totalorder %s48, 3
      %p512 = por %p510, %p511
      %p513 = scmp.ne.s32.totalorder %s504, %s505
      %p514 = scmp.eq.s32.totalorder %s48, 0
      %p515 = por %p513, %p514
      %p516 = scmp.ne.s32.totalorder %s504, %s505
      %p517 = scmp.eq.s32.totalorder %s49, 3
      %p518 = por %p516, %p517
      %p520 = scmp.ne.s32.totalorder %s505, %s519
      %p521 = scmp.eq.s32.totalorder %s49, 0
      %p522 = por %p520, %p521
      %s523 = ssub.s32 %s50, %s62
      %p524 = scmp.eq.s32.totalorder %s523, 0
      %s526 = sadd.s32 %s525, 1
      %s527 = scalar_select %p524, %s525, %s526
      %p530 = pneg %p524
      %p531 = scmp.eq.s32.totalorder %s43, 3
      %p532 = por %p530, %p531
      %p533 = scmp.ne.s32.totalorder %s525, %s528
      %p534 = scmp.eq.s32.totalorder %s43, 0
      %p535 = por %p533, %p534
      %p536 = scmp.ne.s32.totalorder %s525, %s528
      %p537 = scmp.eq.s32.totalorder %s48, 3
      %p538 = por %p536, %p537
      %p539 = scmp.ne.s32.totalorder %s528, %s529
      %p540 = scmp.eq.s32.totalorder %s48, 0
      %p541 = por %p539, %p540
      %p542 = scmp.ne.s32.totalorder %s528, %s529
      %p543 = scmp.eq.s32.totalorder %s49, 3
      %p544 = por %p542, %p543
      %p546 = scmp.ne.s32.totalorder %s529, %s545
      %p547 = scmp.eq.s32.totalorder %s49, 0
      %p548 = por %p546, %p547
      %p549 = scmp.le.s32.totalorder 1, %s43
      %p550 = scmp.lt.s32.totalorder %s43, 5
      %p551 = pnand %p549, %p550
      %p552 = pneg %p551
      // Predicated region
      $region9: #{tpu_custom_call.1} parent=5 // pred_check
        _
      $region10: #{tpu_custom_call.1} parent=5 // pred_check_branch
        %554 = sbr.rel (%p551) target = $region12
      $region11: #{tpu_custom_call.1} parent=5 // pred_region
        %s555 = ssub.s32 %s43, 1
        // Predicated region
        $region13: #{tpu_custom_call.1} parent=11 // pred_check
          %p556 = pneg %p128
        $region14: #{tpu_custom_call.1} parent=11 // pred_check_branch
          %558 = sbr.rel (%p556) target = $region16
        $region15: #{tpu_custom_call.1} parent=11 // pred_region
          %s560 = ssub.s32 4096, 4096
          %561 = vsyncadd [#allocation7], %s560
          %s562 = sshll.u32 [#allocation8], 4
          %s563 = int_to_ptr.vmem [resolvable:$true] %s562
          %568 = dma.hbm_to_vmem [thread:$0]  %s2, 4096, %s563, [#allocation7], 256, 256, 16
        $region16: #{tpu_custom_call.1} parent=11 // pred_fallthru
          _
        // Predicated region
        $region17: #{tpu_custom_call.1} parent=11 // pred_check
          %p569 = pneg %p149
        $region18: #{tpu_custom_call.1} parent=11 // pred_check_branch
          %571 = sbr.rel (%p569) target = $region20
        $region19: #{tpu_custom_call.1} parent=11 // pred_region
          _
        $region20: #{tpu_custom_call.1} parent=11 // pred_fallthru
          _
        // Predicated region
        $region21: #{tpu_custom_call.1} parent=11 // pred_check
          %p572 = pneg %p170
        $region22: #{tpu_custom_call.1} parent=11 // pred_check_branch
          %574 = sbr.rel (%p572) target = $region24
        $region23: #{tpu_custom_call.1} parent=11 // pred_region
          %s576 = ssub.s32 4096, 4096
          %577 = vsyncadd [#allocation10], %s576
          %s578 = sshll.u32 [#allocation9], 4
          %s579 = int_to_ptr.vmem [resolvable:$true] %s578
          %584 = dma.hbm_to_vmem [thread:$0]  %s4, 4096, %s579, [#allocation10], 128, 128, 8
        $region24: #{tpu_custom_call.1} parent=11 // pred_fallthru
          _
        // Predicated region
        $region25: #{tpu_custom_call.1} parent=11 // pred_check
          %p585 = pneg %p191
        $region26: #{tpu_custom_call.1} parent=11 // pred_check_branch
          %587 = sbr.rel (%p585) target = $region28
        $region27: #{tpu_custom_call.1} parent=11 // pred_region
          _
        $region28: #{tpu_custom_call.1} parent=11 // pred_fallthru
          _
        // Predicated region
        $region29: #{tpu_custom_call.1} parent=11 // pred_check
          %p588 = pneg %p212
        $region30: #{tpu_custom_call.1} parent=11 // pred_check_branch
          %590 = sbr.rel (%p588) target = $region32
        $region31: #{tpu_custom_call.1} parent=11 // pred_region
          %s592 = ssub.s32 4096, 4096
          %593 = vsyncadd [#allocation10], %s592
          %s594 = sshll.u32 [#allocation11], 4
          %s595 = int_to_ptr.vmem [resolvable:$true] %s594
          %600 = dma.hbm_to_vmem [thread:$0]  %s6, 4096, %s595, [#allocation10], 128, 128, 8
        $region32: #{tpu_custom_call.1} parent=11 // pred_fallthru
          _
        // Predicated region
        $region33: #{tpu_custom_call.1} parent=11 // pred_check
          %p601 = pneg %p233
        $region34: #{tpu_custom_call.1} parent=11 // pred_check_branch
          %603 = sbr.rel (%p601) target = $region36
        $region35: #{tpu_custom_call.1} parent=11 // pred_region
          _
        $region36: #{tpu_custom_call.1} parent=11 // pred_fallthru
          _
        // Predicated region
        $region37: #{tpu_custom_call.1} parent=11 // pred_check
          %p604 = pneg %p410
        $region38: #{tpu_custom_call.1} parent=11 // pred_check_branch
          %606 = sbr.rel (%p604) target = $region40
        $region39: #{tpu_custom_call.1} parent=11 // pred_region
          %s608 = ssub.s32 2048, 2048
          %609 = vsyncadd [#allocation16], %s608
          %s610 = sshll.u32 [#allocation17], 4
          %s611 = int_to_ptr.vmem [resolvable:$true] %s610
          %616 = dma.hbm_to_vmem [thread:$0]  %s14, 2048, %s611, [#allocation16], 128, 128, 8
        $region40: #{tpu_custom_call.1} parent=11 // pred_fallthru
          _
        // Predicated region
        $region41: #{tpu_custom_call.1} parent=11 // pred_check
          %p617 = pneg %p431
        $region42: #{tpu_custom_call.1} parent=11 // pred_check_branch
          %619 = sbr.rel (%p617) target = $region44
        $region43: #{tpu_custom_call.1} parent=11 // pred_region
          _
        $region44: #{tpu_custom_call.1} parent=11 // pred_fallthru
          _
        // Predicated region
        $region45: #{tpu_custom_call.1} parent=11 // pred_check
          %p620 = pneg %p452
        $region46: #{tpu_custom_call.1} parent=11 // pred_check_branch
          %622 = sbr.rel (%p620) target = $region48
        $region47: #{tpu_custom_call.1} parent=11 // pred_region
          %s624 = ssub.s32 2048, 2048
          %625 = vsyncadd [#allocation19], %s624
          %s626 = sshll.u32 [#allocation18], 4
          %s627 = int_to_ptr.vmem [resolvable:$true] %s626
          %632 = dma.hbm_to_vmem [thread:$0]  %s16, 2048, %s627, [#allocation19], 128, 128, 8
        $region48: #{tpu_custom_call.1} parent=11 // pred_fallthru
          _
        // Predicated region
        $region49: #{tpu_custom_call.1} parent=11 // pred_check
          %p633 = pneg %p473
        $region50: #{tpu_custom_call.1} parent=11 // pred_check_branch
          %635 = sbr.rel (%p633) target = $region52
        $region51: #{tpu_custom_call.1} parent=11 // pred_region
          _
        $region52: #{tpu_custom_call.1} parent=11 // pred_fallthru
          _
        // Predicated region
        $region53: #{tpu_custom_call.1} parent=11 // pred_check
          %p636 = pneg %p494
        $region54: #{tpu_custom_call.1} parent=11 // pred_check_branch
          %638 = sbr.rel (%p636) target = $region56
        $region55: #{tpu_custom_call.1} parent=11 // pred_region
          %s640 = ssub.s32 2048, 2048
          %641 = vsyncadd [#allocation19], %s640
          %s642 = sshll.u32 [#allocation20], 4
          %s643 = int_to_ptr.vmem [resolvable:$true] %s642
          %648 = dma.hbm_to_vmem [thread:$0]  %s18, 2048, %s643, [#allocation19], 128, 128, 8
        $region56: #{tpu_custom_call.1} parent=11 // pred_fallthru
          _
        // Predicated region
        $region57: #{tpu_custom_call.1} parent=11 // pred_check
          %p649 = pneg %p515
        $region58: #{tpu_custom_call.1} parent=11 // pred_check_branch
          %651 = sbr.rel (%p649) target = $region60
        $region59: #{tpu_custom_call.1} parent=11 // pred_region
          _
        $region60: #{tpu_custom_call.1} parent=11 // pred_fallthru
          _
      $region12: #{tpu_custom_call.1} parent=5 // pred_fallthru
        _
      %p652 = scmp.lt.s32.totalorder %s43, 4
      // Predicated region
      $region61: #{tpu_custom_call.1} parent=5 // pred_check
        %p653 = pneg %p652
      $region62: #{tpu_custom_call.1} parent=5 // pred_check_branch
        %655 = sbr.rel (%p653) target = $region64
      $region63: #{tpu_custom_call.1} parent=5 // pred_region
        // Predicated region
        $region65: #{tpu_custom_call.1} parent=63 // pred_check
          %p656 = pneg %p75
        $region66: #{tpu_custom_call.1} parent=63 // pred_check_branch
          %658 = sbr.rel (%p656) target = $region68
        $region67: #{tpu_custom_call.1} parent=63 // pred_region
          %s659 = sand.u32 %s65, 1
          %s660 = scalar_lea.sflag [#allocation4], %s659
          %s661 = sand.u32 %s65, 1
          %s662 = smul.addr %s661, 8
          %s663 = scalar_lea.vmem [#allocation3], %s662
          %s665 = ssub.s32 128, 128
          %666 = vsyncadd %s660, %s665
          %s667 = smul.addr %s50, 128
          %s668 = scalar_lea.hbm %s0, %s667
          %s670 = sshll.u32 %s663, 4
          %s671 = int_to_ptr.vmem [resolvable:$true] %s670
          %673 = dma.hbm_to_vmem [thread:$0]  %s668, 128, %s671, %s660
        $region68: #{tpu_custom_call.1} parent=63 // pred_fallthru
          _
        // Predicated region
        $region69: #{tpu_custom_call.1} parent=63 // pred_check
          %p674 = pneg %p101
        $region70: #{tpu_custom_call.1} parent=63 // pred_check_branch
          %676 = sbr.rel (%p674) target = $region72
        $region71: #{tpu_custom_call.1} parent=63 // pred_region
          %s677 = sand.u32 %s43, 1
          %s678 = scalar_lea.sflag [#allocation7], %s677
          %s679 = sand.u32 %s91, 1
          %s680 = smul.addr %s679, 16
          %s681 = scalar_lea.vmem [#allocation6], %s680
          %s683 = ssub.s32 256, 256
          %684 = vsyncadd %s678, %s683
          %s685 = smul.addr %s50, 2
          %s686 = smul.addr %s685, 128
          %s687 = scalar_lea.hbm %s1, %s686
          %s688 = sshll.u32 %s681, 4
          %s689 = int_to_ptr.vmem [resolvable:$true] %s688
          %694 = dma.hbm_to_vmem [thread:$0]  %s687, 256, %s689, %s678, 128, 128, 8
        $region72: #{tpu_custom_call.1} parent=63 // pred_fallthru
          _
        // Predicated region
        $region73: #{tpu_custom_call.1} parent=63 // pred_check
          %p695 = pneg %p253
        $region74: #{tpu_custom_call.1} parent=63 // pred_check_branch
          %697 = sbr.rel (%p695) target = $region76
        $region75: #{tpu_custom_call.1} parent=63 // pred_region
          %s698 = sand.u32 %s43, 1
          %s699 = scalar_lea.sflag [#allocation13], %s698
          %s700 = sand.u32 %s243, 1
          %s701 = smul.addr %s700, 256
          %s702 = scalar_lea.vmem [#allocation12], %s701
          %s704 = ssub.s32 4096, 4096
          %705 = vsyncadd %s699, %s704
          %s706 = smul.addr %s51, 32
          %s707 = smul.addr %s706, 128
          %s708 = scalar_lea.hbm %s8, %s707
          %s709 = sshll.u32 %s702, 4
          %s710 = int_to_ptr.vmem [resolvable:$true] %s709
          %715 = dma.hbm_to_vmem [thread:$0]  %s708, 4096, %s710, %s699, 256, 256, 16
        $region76: #{tpu_custom_call.1} parent=63 // pred_fallthru
          _
        // Predicated region
        $region77: #{tpu_custom_call.1} parent=63 // pred_check
          %p716 = pneg %p279
        $region78: #{tpu_custom_call.1} parent=63 // pred_check_branch
          %718 = sbr.rel (%p716) target = $region80
        $region79: #{tpu_custom_call.1} parent=63 // pred_region
          %p719 = scmp.lt.s32.totalorder %s51, 1
          %s720 = scalar_select %p719, %s51, 1
          %s721 = smul.addr %s720, 2
          %s722 = scalar_lea.vmem %s9, %s721
        $region80: #{tpu_custom_call.1} parent=63 // pred_fallthru
          _
        // Predicated region
        $region81: #{tpu_custom_call.1} parent=63 // pred_check
          %p723 = pneg %p305
        $region82: #{tpu_custom_call.1} parent=63 // pred_check_branch
          %725 = sbr.rel (%p723) target = $region84
        $region83: #{tpu_custom_call.1} parent=63 // pred_region
          %s726 = sand.u32 %s43, 1
          %s727 = scalar_lea.sflag [#allocation13], %s726
          %s728 = sand.u32 %s295, 1
          %s729 = smul.addr %s728, 256
          %s730 = scalar_lea.vmem [#allocation14], %s729
          %s732 = ssub.s32 4096, 4096
          %733 = vsyncadd %s727, %s732
          %s734 = smul.addr %s51, 32
          %s735 = smul.addr %s734, 128
          %s736 = scalar_lea.hbm %s10, %s735
          %s737 = sshll.u32 %s730, 4
          %s738 = int_to_ptr.vmem [resolvable:$true] %s737
          %743 = dma.hbm_to_vmem [thread:$0]  %s736, 4096, %s738, %s727, 128, 128, 8
        $region84: #{tpu_custom_call.1} parent=63 // pred_fallthru
          _
        // Predicated region
        $region85: #{tpu_custom_call.1} parent=63 // pred_check
          %p744 = pneg %p331
        $region86: #{tpu_custom_call.1} parent=63 // pred_check_branch
          %746 = sbr.rel (%p744) target = $region88
        $region87: #{tpu_custom_call.1} parent=63 // pred_region
          %p747 = scmp.lt.s32.totalorder %s51, 1
          %s748 = scalar_select %p747, %s51, 1
          %s749 = smul.addr %s748, 2
          %s750 = scalar_lea.vmem %s11, %s749
        $region88: #{tpu_custom_call.1} parent=63 // pred_fallthru
          _
        // Predicated region
        $region89: #{tpu_custom_call.1} parent=63 // pred_check
          %p751 = pneg %p357
        $region90: #{tpu_custom_call.1} parent=63 // pred_check_branch
          %753 = sbr.rel (%p751) target = $region92
        $region91: #{tpu_custom_call.1} parent=63 // pred_region
          %s754 = sand.u32 %s43, 1
          %s755 = scalar_lea.sflag [#allocation16], %s754
          %s756 = sand.u32 %s347, 1
          %s757 = smul.addr %s756, 256
          %s758 = scalar_lea.vmem [#allocation15], %s757
          %s760 = ssub.s32 4096, 4096
          %761 = vsyncadd %s755, %s760
          %s762 = smul.addr %s51, 32
          %s763 = smul.addr %s762, 128
          %s764 = scalar_lea.hbm %s12, %s763
          %s765 = sshll.u32 %s758, 4
          %s766 = int_to_ptr.vmem [resolvable:$true] %s765
          %771 = dma.hbm_to_vmem [thread:$0]  %s764, 4096, %s766, %s755, 128, 128, 8
        $region92: #{tpu_custom_call.1} parent=63 // pred_fallthru
          _
        // Predicated region
        $region93: #{tpu_custom_call.1} parent=63 // pred_check
          %p772 = pneg %p383
        $region94: #{tpu_custom_call.1} parent=63 // pred_check_branch
          %774 = sbr.rel (%p772) target = $region96
        $region95: #{tpu_custom_call.1} parent=63 // pred_region
          %p775 = scmp.lt.s32.totalorder %s51, 1
          %s776 = scalar_select %p775, %s51, 1
          %s777 = smul.addr %s776, 2
          %s778 = scalar_lea.vmem %s13, %s777
        $region96: #{tpu_custom_call.1} parent=63 // pred_fallthru
          _
      $region64: #{tpu_custom_call.1} parent=5 // pred_fallthru
        _
      %p779 = scmp.le.s32.totalorder 1, %s43
      %p780 = scmp.lt.s32.totalorder %s43, 5
      %p781 = pnand %p779, %p780
      %p782 = pneg %p781
      // Predicated region
      $region97: #{tpu_custom_call.1} parent=5 // pred_check
        _
      $region98: #{tpu_custom_call.1} parent=5 // pred_check_branch
        %784 = sbr.rel (%p781) target = $region100
      $region99: #{tpu_custom_call.1} parent=5 // pred_region
        %s785 = ssub.s32 %s43, 1
        %s786 = sand.u32 %s68, 1
        %s787 = scalar_lea.sflag [#allocation4], %s786
        %s788 = sand.u32 %s68, 1
        %s789 = smul.addr %s788, 8
        %s790 = scalar_lea.vmem [#allocation3], %s789
        // Predicated region
        $region101: #{tpu_custom_call.1} parent=99 // pred_check
          %p791 = pneg %p81
        $region102: #{tpu_custom_call.1} parent=99 // pred_check_branch
          %793 = sbr.rel (%p791) target = $region104
        $region103: #{tpu_custom_call.1} parent=99 // pred_region
          %794 = dma.done %s787, 128
        $region104: #{tpu_custom_call.1} parent=99 // pred_fallthru
          _
        %s795 = sand.u32 %s48, 1
        %s796 = scalar_lea.sflag [#allocation7], %s795
        %s797 = sand.u32 %s94, 1
        %s798 = smul.addr %s797, 16
        %s799 = scalar_lea.vmem [#allocation6], %s798
        // Predicated region
        $region105: #{tpu_custom_call.1} parent=99 // pred_check
          %p800 = pneg %p107
        $region106: #{tpu_custom_call.1} parent=99 // pred_check_branch
          %802 = sbr.rel (%p800) target = $region108
        $region107: #{tpu_custom_call.1} parent=99 // pred_region
          %803 = dma.done %s796, 256
        $region108: #{tpu_custom_call.1} parent=99 // pred_fallthru
          _
        // Predicated region
        $region109: #{tpu_custom_call.1} parent=99 // pred_check
          %p804 = pneg %p128
        $region110: #{tpu_custom_call.1} parent=99 // pred_check_branch
          %806 = sbr.rel (%p804) target = $region112
        $region111: #{tpu_custom_call.1} parent=99 // pred_region
          %807 = dma.done [#allocation7], 4096
        $region112: #{tpu_custom_call.1} parent=99 // pred_fallthru
          _
        // Predicated region
        $region113: #{tpu_custom_call.1} parent=99 // pred_check
          %p808 = pneg %p170
        $region114: #{tpu_custom_call.1} parent=99 // pred_check_branch
          %810 = sbr.rel (%p808) target = $region116
        $region115: #{tpu_custom_call.1} parent=99 // pred_region
          %811 = dma.done [#allocation10], 4096
        $region116: #{tpu_custom_call.1} parent=99 // pred_fallthru
          _
        // Predicated region
        $region117: #{tpu_custom_call.1} parent=99 // pred_check
          %p812 = pneg %p212
        $region118: #{tpu_custom_call.1} parent=99 // pred_check_branch
          %814 = sbr.rel (%p812) target = $region120
        $region119: #{tpu_custom_call.1} parent=99 // pred_region
          %815 = dma.done [#allocation10], 4096
        $region120: #{tpu_custom_call.1} parent=99 // pred_fallthru
          _
        %s816 = sand.u32 %s48, 1
        %s817 = scalar_lea.sflag [#allocation13], %s816
        %s818 = sand.u32 %s246, 1
        %s819 = smul.addr %s818, 256
        %s820 = scalar_lea.vmem [#allocation12], %s819
        // Predicated region
        $region121: #{tpu_custom_call.1} parent=99 // pred_check
          %p821 = pneg %p259
        $region122: #{tpu_custom_call.1} parent=99 // pred_check_branch
          %823 = sbr.rel (%p821) target = $region124
        $region123: #{tpu_custom_call.1} parent=99 // pred_region
          %824 = dma.done %s817, 4096
        $region124: #{tpu_custom_call.1} parent=99 // pred_fallthru
          _
        %s825 = sand.u32 %s48, 1
        %s826 = scalar_lea.sflag [#allocation13], %s825
        %s827 = sand.u32 %s298, 1
        %s828 = smul.addr %s827, 256
        %s829 = scalar_lea.vmem [#allocation14], %s828
        // Predicated region
        $region125: #{tpu_custom_call.1} parent=99 // pred_check
          %p830 = pneg %p311
        $region126: #{tpu_custom_call.1} parent=99 // pred_check_branch
          %832 = sbr.rel (%p830) target = $region128
        $region127: #{tpu_custom_call.1} parent=99 // pred_region
          %833 = dma.done %s826, 4096
        $region128: #{tpu_custom_call.1} parent=99 // pred_fallthru
          _
        %s834 = sand.u32 %s48, 1
        %s835 = scalar_lea.sflag [#allocation16], %s834
        %s836 = sand.u32 %s350, 1
        %s837 = smul.addr %s836, 256
        %s838 = scalar_lea.vmem [#allocation15], %s837
        // Predicated region
        $region129: #{tpu_custom_call.1} parent=99 // pred_check
          %p839 = pneg %p363
        $region130: #{tpu_custom_call.1} parent=99 // pred_check_branch
          %841 = sbr.rel (%p839) target = $region132
        $region131: #{tpu_custom_call.1} parent=99 // pred_region
          %842 = dma.done %s835, 4096
        $region132: #{tpu_custom_call.1} parent=99 // pred_fallthru
          _
        // Predicated region
        $region133: #{tpu_custom_call.1} parent=99 // pred_check
          %p843 = pneg %p410
        $region134: #{tpu_custom_call.1} parent=99 // pred_check_branch
          %845 = sbr.rel (%p843) target = $region136
        $region135: #{tpu_custom_call.1} parent=99 // pred_region
          %846 = dma.done [#allocation16], 2048
        $region136: #{tpu_custom_call.1} parent=99 // pred_fallthru
          _
        // Predicated region
        $region137: #{tpu_custom_call.1} parent=99 // pred_check
          %p847 = pneg %p452
        $region138: #{tpu_custom_call.1} parent=99 // pred_check_branch
          %849 = sbr.rel (%p847) target = $region140
        $region139: #{tpu_custom_call.1} parent=99 // pred_region
          %850 = dma.done [#allocation19], 2048
        $region140: #{tpu_custom_call.1} parent=99 // pred_fallthru
          _
        // Predicated region
        $region141: #{tpu_custom_call.1} parent=99 // pred_check
          %p851 = pneg %p494
        $region142: #{tpu_custom_call.1} parent=99 // pred_check_branch
          %853 = sbr.rel (%p851) target = $region144
        $region143: #{tpu_custom_call.1} parent=99 // pred_region
          %854 = dma.done [#allocation19], 2048
        $region144: #{tpu_custom_call.1} parent=99 // pred_fallthru
          _
        %s855 = sand.u32 %s68, 1
        %s856 = scalar_lea.sflag [#allocation4], %s855
        %s857 = sand.u32 %s68, 1
        %s858 = smul.addr %s857, 8
        %s859 = scalar_lea.vmem [#allocation3], %s858
        %p860 = pneg %p81
        %p861 = pneg %p78
        %s862 = sand.u32 %s48, 1
        %s863 = scalar_lea.sflag [#allocation7], %s862
        %s864 = sand.u32 %s94, 1
        %s865 = smul.addr %s864, 16
        %s866 = scalar_lea.vmem [#allocation6], %s865
        %p867 = pneg %p107
        %p868 = pneg %p104
        %p869 = pneg %p128
        %p870 = pneg %p125
        %p871 = pneg %p149
        %p872 = pneg %p146
        %p873 = pneg %p170
        %p874 = pneg %p167
        %p875 = pneg %p191
        %p876 = pneg %p188
        %p877 = pneg %p212
        %p878 = pneg %p209
        %p879 = pneg %p233
        %p880 = pneg %p230
        %s881 = sand.u32 %s48, 1
        %s882 = scalar_lea.sflag [#allocation13], %s881
        %s883 = sand.u32 %s246, 1
        %s884 = smul.addr %s883, 256
        %s885 = scalar_lea.vmem [#allocation12], %s884
        %p886 = pneg %p259
        %p887 = pneg %p256
        %p888 = scmp.lt.s32.totalorder %s53, 1
        %s889 = scalar_select %p888, %s53, 1
        %s890 = smul.addr %s889, 2
        %s891 = scalar_lea.vmem %s9, %s890
        %p892 = pneg %p285
        %p893 = pneg %p282
        %s894 = sand.u32 %s48, 1
        %s895 = scalar_lea.sflag [#allocation13], %s894
        %s896 = sand.u32 %s298, 1
        %s897 = smul.addr %s896, 256
        %s898 = scalar_lea.vmem [#allocation14], %s897
        %p899 = pneg %p311
        %p900 = pneg %p308
        %p901 = scmp.lt.s32.totalorder %s53, 1
        %s902 = scalar_select %p901, %s53, 1
        %s903 = smul.addr %s902, 2
        %s904 = scalar_lea.vmem %s11, %s903
        %p905 = pneg %p337
        %p906 = pneg %p334
        %s907 = sand.u32 %s48, 1
        %s908 = scalar_lea.sflag [#allocation16], %s907
        %s909 = sand.u32 %s350, 1
        %s910 = smul.addr %s909, 256
        %s911 = scalar_lea.vmem [#allocation15], %s910
        %p912 = pneg %p363
        %p913 = pneg %p360
        %p914 = scmp.lt.s32.totalorder %s53, 1
        %s915 = scalar_select %p914, %s53, 1
        %s916 = smul.addr %s915, 2
        %s917 = scalar_lea.vmem %s13, %s916
        %p918 = pneg %p389
        %p919 = pneg %p386
        %p920 = pneg %p410
        %p921 = pneg %p407
        %p922 = pneg %p431
        %p923 = pneg %p428
        %p924 = pneg %p452
        %p925 = pneg %p449
        %p926 = pneg %p473
        %p927 = pneg %p470
        %p928 = pneg %p494
        %p929 = pneg %p491
        %p930 = pneg %p515
        %p931 = pneg %p512
        %p932 = pneg %p541
        %p933 = pneg %p538
        %s934 = sand.u32 %s528, 1
        %s935 = scalar_lea.sflag [#allocation5], %s934
        %s936 = sand.u32 %s528, 1
        %s937 = smul.addr %s936, 8
        %s938 = scalar_lea.vmem [#allocation21], %s937
        %p939 = scmp.lt.s32.totalorder %s53, 1
        %s940 = scalar_select %p939, %s53, 1
        %s941 = smul.addr %s940, 2
        %s942 = scalar_lea.vmem %s9, %s941
        %p943 = scmp.lt.s32.totalorder %s53, 1
        %s944 = scalar_select %p943, %s53, 1
        %s945 = smul.addr %s944, 2
        %s946 = scalar_lea.vmem %s11, %s945
        %p947 = scmp.lt.s32.totalorder %s53, 1
        %s948 = scalar_select %p947, %s53, 1
        %s949 = smul.addr %s948, 2
        %s950 = scalar_lea.vmem %s13, %s949
        %p951 = scmp.eq.s32.totalorder %s53, 0
        // Predicated region
        $region145: #{tpu_custom_call.1} parent=99 // pred_check
          %p952 = pneg %p951
        $region146: #{tpu_custom_call.1} parent=99 // pred_check_branch
          %954 = sbr.rel (%p952) target = $region148
        $region147: #{tpu_custom_call.1} parent=99 // pred_region
          %v955 = vld [vmem:[%s790] sm:$0xff]
          %v956 = vld [vmem:[#allocation8] sm:$0xff]
          %v957 = vld [vmem:[#allocation8 + $0x8] sm:$0xff]
          %v958 = vld [vmem:[#allocation8 + $0x10] sm:$0xff]
          %v959 = vld [vmem:[#allocation8 + $0x18] sm:$0xff]
          %v960 = vld [vmem:[#allocation8 + $0x20] sm:$0xff]
          %v961 = vld [vmem:[#allocation8 + $0x28] sm:$0xff]
          %v962 = vld [vmem:[#allocation8 + $0x30] sm:$0xff]
          %v963 = vld [vmem:[#allocation8 + $0x38] sm:$0xff]
          %v964 = vld [vmem:[#allocation8 + $0x40] sm:$0xff]
          %v965 = vld [vmem:[#allocation8 + $0x48] sm:$0xff]
          %v966 = vld [vmem:[#allocation8 + $0x50] sm:$0xff]
          %v967 = vld [vmem:[#allocation8 + $0x58] sm:$0xff]
          %v968 = vld [vmem:[#allocation8 + $0x60] sm:$0xff]
          %v969 = vld [vmem:[#allocation8 + $0x68] sm:$0xff]
          %v970 = vld [vmem:[#allocation8 + $0x70] sm:$0xff]
          %v971 = vld [vmem:[#allocation8 + $0x78] sm:$0xff]
          %v972 = vld [vmem:[#allocation8 + $0x80] sm:$0xff]
          %v973 = vld [vmem:[#allocation8 + $0x88] sm:$0xff]
          %v974 = vld [vmem:[#allocation8 + $0x90] sm:$0xff]
          %v975 = vld [vmem:[#allocation8 + $0x98] sm:$0xff]
          %v976 = vld [vmem:[#allocation8 + $0xa0] sm:$0xff]
          %v977 = vld [vmem:[#allocation8 + $0xa8] sm:$0xff]
          %v978 = vld [vmem:[#allocation8 + $0xb0] sm:$0xff]
          %v979 = vld [vmem:[#allocation8 + $0xb8] sm:$0xff]
          %v980 = vld [vmem:[#allocation8 + $0xc0] sm:$0xff]
          %v981 = vld [vmem:[#allocation8 + $0xc8] sm:$0xff]
          %v982 = vld [vmem:[#allocation8 + $0xd0] sm:$0xff]
          %v983 = vld [vmem:[#allocation8 + $0xd8] sm:$0xff]
          %v984 = vld [vmem:[#allocation8 + $0xe0] sm:$0xff]
          %v985 = vld [vmem:[#allocation8 + $0xe8] sm:$0xff]
          %v986 = vld [vmem:[#allocation8 + $0xf0] sm:$0xff]
          %v987 = vld [vmem:[#allocation8 + $0xf8] sm:$0xff]
          %v988 = vld [vmem:[%s3] sm:$0x3]
          %v990 = vlaneseq
          %v991 = vshrl.u32 %v990, 7
          %v992 = vsub.s32 0, %v991
          %v993 = vrot.slane %v988, %v992
          %v994 = vlaneseq
          %v995 = vshrl.u32 %v994, 7
          %v996 = vsub.s32 1, %v995
          %v997 = vrot.slane %v988, %v996
          %1000 = vmatprep.subr.mxu0 %v957
          %1001 = vmatpush1.msra.mxu0 %v956
          %1002 = vmatprep.subr.mxu0 %v959
          %1003 = vmatpush1.msra.mxu0 %v958
          %1004 = vmatprep.subr.mxu0 %v961
          %1005 = vmatpush1.msra.mxu0 %v960
          %1006 = vmatprep.subr.mxu0 %v963
          %1007 = vmatpush1.msra.mxu0 %v962
          %1008 = vmatprep.subr.mxu0 %v965
          %1009 = vmatpush1.msra.mxu0 %v964
          %1010 = vmatprep.subr.mxu0 %v967
          %1011 = vmatpush1.msra.mxu0 %v966
          %1012 = vmatprep.subr.mxu0 %v969
          %1013 = vmatpush1.msra.mxu0 %v968
          %1014 = vmatprep.subr.mxu0 %v971
          %1015 = vmatpush1.msra.mxu0 %v970
          %1016 = vmatprep.subr.mxu0 %v973
          %1017 = vmatpush1.msra.mxu0 %v972
          %1018 = vmatprep.subr.mxu0 %v975
          %1019 = vmatpush1.msra.mxu0 %v974
          %1020 = vmatprep.subr.mxu0 %v977
          %1021 = vmatpush1.msra.mxu0 %v976
          %1022 = vmatprep.subr.mxu0 %v979
          %1023 = vmatpush1.msra.mxu0 %v978
          %1024 = vmatprep.subr.mxu0 %v981
          %1025 = vmatpush1.msra.mxu0 %v980
          %1026 = vmatprep.subr.mxu0 %v983
          %1027 = vmatpush1.msra.mxu0 %v982
          %1028 = vmatprep.subr.mxu0 %v985
          %1029 = vmatpush1.msra.mxu0 %v984
          %1030 = vmatprep.subr.mxu0 %v987
          %1031 = vmatpush1.msra.mxu0 %v986
          %1032 = vmatprep.subr.mxu0 0.0
          %1033 = vmatpush1.msra.mxu0 0.0
          %1034 = vmatprep.subr.mxu0 0.0
          %1035 = vmatpush1.msra.mxu0 0.0
          %1036 = vmatprep.subr.mxu0 0.0
          %1037 = vmatpush1.msra.mxu0 0.0
          %1038 = vmatprep.subr.mxu0 0.0
          %1039 = vmatpush1.msra.mxu0 0.0
          %1040 = vmatprep.subr.mxu0 0.0
          %1041 = vmatpush1.msra.mxu0 0.0
          %1042 = vmatprep.subr.mxu0 0.0
          %1043 = vmatpush1.msra.mxu0 0.0
          %1044 = vmatprep.subr.mxu0 0.0
          %1045 = vmatpush1.msra.mxu0 0.0
          %1046 = vmatprep.subr.mxu0 0.0
          %1047 = vmatpush1.msra.mxu0 0.0
          %1048 = vmatprep.subr.mxu0 0.0
          %1049 = vmatpush1.msra.mxu0 0.0
          %1050 = vmatprep.subr.mxu0 0.0
          %1051 = vmatpush1.msra.mxu0 0.0
          %1052 = vmatprep.subr.mxu0 0.0
          %1053 = vmatpush1.msra.mxu0 0.0
          %1054 = vmatprep.subr.mxu0 0.0
          %1055 = vmatpush1.msra.mxu0 0.0
          %1056 = vmatprep.subr.mxu0 0.0
          %1057 = vmatpush1.msra.mxu0 0.0
          %1058 = vmatprep.subr.mxu0 0.0
          %1059 = vmatpush1.msra.mxu0 0.0
          %1060 = vmatprep.subr.mxu0 0.0
          %1061 = vmatpush1.msra.mxu0 0.0
          %1062 = vmatprep.subr.mxu0 0.0
          %1063 = vmatpush1.msra.mxu0 0.0
          %1064 = vmatprep.mubr.f32.mxu0 0.0
          %1065 = vmatmul.mubr.f32.gmra.mrb[0].mxu0 %v955
          %v1066 = vpop.f32.mrb[0].mxu0
          %v1067 = vadd.f32 %v993, %v1066
          %v1068 = vpop.f32.mrb[0].mxu0
          %v1069 = vadd.f32 %v997, %v1068
          %1070 = vdwg.mxu0
          %vm1071 = vcmp.gt.f32.partialorder %v1067, 0.0
          %vm1072 = vcmp.gt.f32.partialorder %v1069, 0.0
          %v1073 = vmul.f32 %v1067, 0.01
          %v1074 = vmul.f32 %v1069, 0.01
          %v1075 = vsel %vm1071, %v1067, %v1073
          %v1076 = vsel %vm1072, %v1069, %v1074
          %v1077 = vld [vmem:[#allocation9] sm:$0xff]
          %v1078 = vld [vmem:[#allocation9 + $0x8] sm:$0xff]
          %v1079 = vld [vmem:[#allocation9 + $0x10] sm:$0xff]
          %v1080 = vld [vmem:[#allocation9 + $0x18] sm:$0xff]
          %v1081 = vld [vmem:[#allocation9 + $0x20] sm:$0xff]
          %v1082 = vld [vmem:[#allocation9 + $0x28] sm:$0xff]
          %v1083 = vld [vmem:[#allocation9 + $0x30] sm:$0xff]
          %v1084 = vld [vmem:[#allocation9 + $0x38] sm:$0xff]
          %v1085 = vld [vmem:[#allocation9 + $0x40] sm:$0xff]
          %v1086 = vld [vmem:[#allocation9 + $0x48] sm:$0xff]
          %v1087 = vld [vmem:[#allocation9 + $0x50] sm:$0xff]
          %v1088 = vld [vmem:[#allocation9 + $0x58] sm:$0xff]
          %v1089 = vld [vmem:[#allocation9 + $0x60] sm:$0xff]
          %v1090 = vld [vmem:[#allocation9 + $0x68] sm:$0xff]
          %v1091 = vld [vmem:[#allocation9 + $0x70] sm:$0xff]
          %v1092 = vld [vmem:[#allocation9 + $0x78] sm:$0xff]
          %v1093 = vld [vmem:[#allocation9 + $0x80] sm:$0xff]
          %v1094 = vld [vmem:[#allocation9 + $0x88] sm:$0xff]
          %v1095 = vld [vmem:[#allocation9 + $0x90] sm:$0xff]
          %v1096 = vld [vmem:[#allocation9 + $0x98] sm:$0xff]
          %v1097 = vld [vmem:[#allocation9 + $0xa0] sm:$0xff]
          %v1098 = vld [vmem:[#allocation9 + $0xa8] sm:$0xff]
          %v1099 = vld [vmem:[#allocation9 + $0xb0] sm:$0xff]
          %v1100 = vld [vmem:[#allocation9 + $0xb8] sm:$0xff]
          %v1101 = vld [vmem:[#allocation9 + $0xc0] sm:$0xff]
          %v1102 = vld [vmem:[#allocation9 + $0xc8] sm:$0xff]
          %v1103 = vld [vmem:[#allocation9 + $0xd0] sm:$0xff]
          %v1104 = vld [vmem:[#allocation9 + $0xd8] sm:$0xff]
          %v1105 = vld [vmem:[#allocation9 + $0xe0] sm:$0xff]
          %v1106 = vld [vmem:[#allocation9 + $0xe8] sm:$0xff]
          %v1107 = vld [vmem:[#allocation9 + $0xf0] sm:$0xff]
          %v1108 = vld [vmem:[#allocation9 + $0xf8] sm:$0xff]
          %v1109 = vld [vmem:[%s5] sm:$0x1]
          %v1110 = vld [vmem:[%s5 + $0x1] sm:$0x1]
          %v1112 = vlaneseq
          %v1113 = vshrl.u32 %v1112, 7
          %v1114 = vsub.s32 0, %v1113
          %v1115 = vrot.slane %v1109, %v1114
          %1117 = vmatprep.subr.mxu0 0.0
          %1118 = vmatpush1.msra.mxu0 %v1077
          %1119 = vmatprep.subr.mxu0 0.0
          %1120 = vmatpush1.msra.mxu0 %v1078
          %1121 = vmatprep.subr.mxu0 0.0
          %1122 = vmatpush1.msra.mxu0 %v1079
          %1123 = vmatprep.subr.mxu0 0.0
          %1124 = vmatpush1.msra.mxu0 %v1080
          %1125 = vmatprep.subr.mxu0 0.0
          %1126 = vmatpush1.msra.mxu0 %v1081
          %1127 = vmatprep.subr.mxu0 0.0
          %1128 = vmatpush1.msra.mxu0 %v1082
          %1129 = vmatprep.subr.mxu0 0.0
          %1130 = vmatpush1.msra.mxu0 %v1083
          %1131 = vmatprep.subr.mxu0 0.0
          %1132 = vmatpush1.msra.mxu0 %v1084
          %1133 = vmatprep.subr.mxu0 0.0
          %1134 = vmatpush1.msra.mxu0 %v1085
          %1135 = vmatprep.subr.mxu0 0.0
          %1136 = vmatpush1.msra.mxu0 %v1086
          %1137 = vmatprep.subr.mxu0 0.0
          %1138 = vmatpush1.msra.mxu0 %v1087
          %1139 = vmatprep.subr.mxu0 0.0
          %1140 = vmatpush1.msra.mxu0 %v1088
          %1141 = vmatprep.subr.mxu0 0.0
          %1142 = vmatpush1.msra.mxu0 %v1089
          %1143 = vmatprep.subr.mxu0 0.0
          %1144 = vmatpush1.msra.mxu0 %v1090
          %1145 = vmatprep.subr.mxu0 0.0
          %1146 = vmatpush1.msra.mxu0 %v1091
          %1147 = vmatprep.subr.mxu0 0.0
          %1148 = vmatpush1.msra.mxu0 %v1092
          %1149 = vmatprep.subr.mxu0 0.0
          %1150 = vmatpush1.msra.mxu0 0.0
          %1151 = vmatprep.subr.mxu0 0.0
          %1152 = vmatpush1.msra.mxu0 0.0
          %1153 = vmatprep.subr.mxu0 0.0
          %1154 = vmatpush1.msra.mxu0 0.0
          %1155 = vmatprep.subr.mxu0 0.0
          %1156 = vmatpush1.msra.mxu0 0.0
          %1157 = vmatprep.subr.mxu0 0.0
          %1158 = vmatpush1.msra.mxu0 0.0
          %1159 = vmatprep.subr.mxu0 0.0
          %1160 = vmatpush1.msra.mxu0 0.0
          %1161 = vmatprep.subr.mxu0 0.0
          %1162 = vmatpush1.msra.mxu0 0.0
          %1163 = vmatprep.subr.mxu0 0.0
          %1164 = vmatpush1.msra.mxu0 0.0
          %1165 = vmatprep.subr.mxu0 0.0
          %1166 = vmatpush1.msra.mxu0 0.0
          %1167 = vmatprep.subr.mxu0 0.0
          %1168 = vmatpush1.msra.mxu0 0.0
          %1169 = vmatprep.subr.mxu0 0.0
          %1170 = vmatpush1.msra.mxu0 0.0
          %1171 = vmatprep.subr.mxu0 0.0
          %1172 = vmatpush1.msra.mxu0 0.0
          %1173 = vmatprep.subr.mxu0 0.0
          %1174 = vmatpush1.msra.mxu0 0.0
          %1175 = vmatprep.subr.mxu0 0.0
          %1176 = vmatpush1.msra.mxu0 0.0
          %1177 = vmatprep.subr.mxu0 0.0
          %1178 = vmatpush1.msra.mxu0 0.0
          %1179 = vmatprep.subr.mxu0 0.0
          %1180 = vmatpush1.msra.mxu0 0.0
          %1181 = vmatprep.mubr.f32.mxu0 0.0
          %1182 = vmatmul.mubr.f32.gmra.mrb[0].mxu0 %v1075
          %v1183 = vpop.f32.mrb[0].mxu0
          %v1184 = vadd.f32 %v1115, %v1183
          %v1185 = vpop.f32.mrb[0].mxu0
          %1186 = vdwg.mxu0
          %vm1187 = vcmp.gt.f32.partialorder %v1184, 0.0
          %v1188 = vmul.f32 %v1184, 0.01
          %v1189 = vsel %vm1187, %v1184, %v1188
          %v1191 = vlaneseq
          %v1192 = vshrl.u32 %v1191, 7
          %v1193 = vsub.s32 0, %v1192
          %v1194 = vrot.slane %v1110, %v1193
          %1196 = vmatprep.subr.mxu0 0.0
          %1197 = vmatpush1.msra.mxu0 %v1093
          %1198 = vmatprep.subr.mxu0 0.0
          %1199 = vmatpush1.msra.mxu0 %v1094
          %1200 = vmatprep.subr.mxu0 0.0
          %1201 = vmatpush1.msra.mxu0 %v1095
          %1202 = vmatprep.subr.mxu0 0.0
          %1203 = vmatpush1.msra.mxu0 %v1096
          %1204 = vmatprep.subr.mxu0 0.0
          %1205 = vmatpush1.msra.mxu0 %v1097
          %1206 = vmatprep.subr.mxu0 0.0
          %1207 = vmatpush1.msra.mxu0 %v1098
          %1208 = vmatprep.subr.mxu0 0.0
          %1209 = vmatpush1.msra.mxu0 %v1099
          %1210 = vmatprep.subr.mxu0 0.0
          %1211 = vmatpush1.msra.mxu0 %v1100
          %1212 = vmatprep.subr.mxu0 0.0
          %1213 = vmatpush1.msra.mxu0 %v1101
          %1214 = vmatprep.subr.mxu0 0.0
          %1215 = vmatpush1.msra.mxu0 %v1102
          %1216 = vmatprep.subr.mxu0 0.0
          %1217 = vmatpush1.msra.mxu0 %v1103
          %1218 = vmatprep.subr.mxu0 0.0
          %1219 = vmatpush1.msra.mxu0 %v1104
          %1220 = vmatprep.subr.mxu0 0.0
          %1221 = vmatpush1.msra.mxu0 %v1105
          %1222 = vmatprep.subr.mxu0 0.0
          %1223 = vmatpush1.msra.mxu0 %v1106
          %1224 = vmatprep.subr.mxu0 0.0
          %1225 = vmatpush1.msra.mxu0 %v1107
          %1226 = vmatprep.subr.mxu0 0.0
          %1227 = vmatpush1.msra.mxu0 %v1108
          %1228 = vmatprep.subr.mxu0 0.0
          %1229 = vmatpush1.msra.mxu0 0.0
          %1230 = vmatprep.subr.mxu0 0.0
          %1231 = vmatpush1.msra.mxu0 0.0
          %1232 = vmatprep.subr.mxu0 0.0
          %1233 = vmatpush1.msra.mxu0 0.0
          %1234 = vmatprep.subr.mxu0 0.0
          %1235 = vmatpush1.msra.mxu0 0.0
          %1236 = vmatprep.subr.mxu0 0.0
          %1237 = vmatpush1.msra.mxu0 0.0
          %1238 = vmatprep.subr.mxu0 0.0
          %1239 = vmatpush1.msra.mxu0 0.0
          %1240 = vmatprep.subr.mxu0 0.0
          %1241 = vmatpush1.msra.mxu0 0.0
          %1242 = vmatprep.subr.mxu0 0.0
          %1243 = vmatpush1.msra.mxu0 0.0
          %1244 = vmatprep.subr.mxu0 0.0
          %1245 = vmatpush1.msra.mxu0 0.0
          %1246 = vmatprep.subr.mxu0 0.0
          %1247 = vmatpush1.msra.mxu0 0.0
          %1248 = vmatprep.subr.mxu0 0.0
          %1249 = vmatpush1.msra.mxu0 0.0
          %1250 = vmatprep.subr.mxu0 0.0
          %1251 = vmatpush1.msra.mxu0 0.0
          %1252 = vmatprep.subr.mxu0 0.0
          %1253 = vmatpush1.msra.mxu0 0.0
          %1254 = vmatprep.subr.mxu0 0.0
          %1255 = vmatpush1.msra.mxu0 0.0
          %1256 = vmatprep.subr.mxu0 0.0
          %1257 = vmatpush1.msra.mxu0 0.0
          %1258 = vmatprep.subr.mxu0 0.0
          %1259 = vmatpush1.msra.mxu0 0.0
          %1260 = vmatprep.mubr.f32.mxu0 0.0
          %1261 = vmatmul.mubr.f32.gmra.mrb[0].mxu0 %v1076
          %v1262 = vpop.f32.mrb[0].mxu0
          %v1263 = vadd.f32 %v1194, %v1262
          %v1264 = vpop.f32.mrb[0].mxu0
          %1265 = vdwg.mxu0
          %vm1266 = vcmp.gt.f32.partialorder %v1263, 0.0
          %v1267 = vmul.f32 %v1263, 0.01
          %v1268 = vsel %vm1266, %v1263, %v1267
          %v1269 = vld [vmem:[#allocation11] sm:$0xff]
          %v1270 = vld [vmem:[#allocation11 + $0x8] sm:$0xff]
          %v1271 = vld [vmem:[#allocation11 + $0x10] sm:$0xff]
          %v1272 = vld [vmem:[#allocation11 + $0x18] sm:$0xff]
          %v1273 = vld [vmem:[#allocation11 + $0x20] sm:$0xff]
          %v1274 = vld [vmem:[#allocation11 + $0x28] sm:$0xff]
          %v1275 = vld [vmem:[#allocation11 + $0x30] sm:$0xff]
          %v1276 = vld [vmem:[#allocation11 + $0x38] sm:$0xff]
          %v1277 = vld [vmem:[#allocation11 + $0x40] sm:$0xff]
          %v1278 = vld [vmem:[#allocation11 + $0x48] sm:$0xff]
          %v1279 = vld [vmem:[#allocation11 + $0x50] sm:$0xff]
          %v1280 = vld [vmem:[#allocation11 + $0x58] sm:$0xff]
          %v1281 = vld [vmem:[#allocation11 + $0x60] sm:$0xff]
          %v1282 = vld [vmem:[#allocation11 + $0x68] sm:$0xff]
          %v1283 = vld [vmem:[#allocation11 + $0x70] sm:$0xff]
          %v1284 = vld [vmem:[#allocation11 + $0x78] sm:$0xff]
          %v1285 = vld [vmem:[#allocation11 + $0x80] sm:$0xff]
          %v1286 = vld [vmem:[#allocation11 + $0x88] sm:$0xff]
          %v1287 = vld [vmem:[#allocation11 + $0x90] sm:$0xff]
          %v1288 = vld [vmem:[#allocation11 + $0x98] sm:$0xff]
          %v1289 = vld [vmem:[#allocation11 + $0xa0] sm:$0xff]
          %v1290 = vld [vmem:[#allocation11 + $0xa8] sm:$0xff]
          %v1291 = vld [vmem:[#allocation11 + $0xb0] sm:$0xff]
          %v1292 = vld [vmem:[#allocation11 + $0xb8] sm:$0xff]
          %v1293 = vld [vmem:[#allocation11 + $0xc0] sm:$0xff]
          %v1294 = vld [vmem:[#allocation11 + $0xc8] sm:$0xff]
          %v1295 = vld [vmem:[#allocation11 + $0xd0] sm:$0xff]
          %v1296 = vld [vmem:[#allocation11 + $0xd8] sm:$0xff]
          %v1297 = vld [vmem:[#allocation11 + $0xe0] sm:$0xff]
          %v1298 = vld [vmem:[#allocation11 + $0xe8] sm:$0xff]
          %v1299 = vld [vmem:[#allocation11 + $0xf0] sm:$0xff]
          %v1300 = vld [vmem:[#allocation11 + $0xf8] sm:$0xff]
          %v1301 = vld [vmem:[%s7] sm:$0x1]
          %v1303 = vlaneseq
          %v1304 = vshrl.u32 %v1303, 7
          %v1305 = vsub.s32 0, %v1304
          %v1306 = vrot.slane %v1301, %v1305
          %1308 = vmatprep.subr.mxu0 0.0
          %1309 = vmatpush1.msra.mxu0 %v1269
          %1310 = vmatprep.subr.mxu0 0.0
          %1311 = vmatpush1.msra.mxu0 %v1270
          %1312 = vmatprep.subr.mxu0 0.0
          %1313 = vmatpush1.msra.mxu0 %v1271
          %1314 = vmatprep.subr.mxu0 0.0
          %1315 = vmatpush1.msra.mxu0 %v1272
          %1316 = vmatprep.subr.mxu0 0.0
          %1317 = vmatpush1.msra.mxu0 %v1273
          %1318 = vmatprep.subr.mxu0 0.0
          %1319 = vmatpush1.msra.mxu0 %v1274
          %1320 = vmatprep.subr.mxu0 0.0
          %1321 = vmatpush1.msra.mxu0 %v1275
          %1322 = vmatprep.subr.mxu0 0.0
          %1323 = vmatpush1.msra.mxu0 %v1276
          %1324 = vmatprep.subr.mxu0 0.0
          %1325 = vmatpush1.msra.mxu0 %v1277
          %1326 = vmatprep.subr.mxu0 0.0
          %1327 = vmatpush1.msra.mxu0 %v1278
          %1328 = vmatprep.subr.mxu0 0.0
          %1329 = vmatpush1.msra.mxu0 %v1279
          %1330 = vmatprep.subr.mxu0 0.0
          %1331 = vmatpush1.msra.mxu0 %v1280
          %1332 = vmatprep.subr.mxu0 0.0
          %1333 = vmatpush1.msra.mxu0 %v1281
          %1334 = vmatprep.subr.mxu0 0.0
          %1335 = vmatpush1.msra.mxu0 %v1282
          %1336 = vmatprep.subr.mxu0 0.0
          %1337 = vmatpush1.msra.mxu0 %v1283
          %1338 = vmatprep.subr.mxu0 0.0
          %1339 = vmatpush1.msra.mxu0 %v1284
          %1340 = vmatprep.subr.mxu0 0.0
          %1341 = vmatpush1.msra.mxu0 0.0
          %1342 = vmatprep.subr.mxu0 0.0
          %1343 = vmatpush1.msra.mxu0 0.0
          %1344 = vmatprep.subr.mxu0 0.0
          %1345 = vmatpush1.msra.mxu0 0.0
          %1346 = vmatprep.subr.mxu0 0.0
          %1347 = vmatpush1.msra.mxu0 0.0
          %1348 = vmatprep.subr.mxu0 0.0
          %1349 = vmatpush1.msra.mxu0 0.0
          %1350 = vmatprep.subr.mxu0 0.0
          %1351 = vmatpush1.msra.mxu0 0.0
          %1352 = vmatprep.subr.mxu0 0.0
          %1353 = vmatpush1.msra.mxu0 0.0
          %1354 = vmatprep.subr.mxu0 0.0
          %1355 = vmatpush1.msra.mxu0 0.0
          %1356 = vmatprep.subr.mxu0 0.0
          %1357 = vmatpush1.msra.mxu0 0.0
          %1358 = vmatprep.subr.mxu0 0.0
          %1359 = vmatpush1.msra.mxu0 0.0
          %1360 = vmatprep.subr.mxu0 0.0
          %1361 = vmatpush1.msra.mxu0 0.0
          %1362 = vmatprep.subr.mxu0 0.0
          %1363 = vmatpush1.msra.mxu0 0.0
          %1364 = vmatprep.subr.mxu0 0.0
          %1365 = vmatpush1.msra.mxu0 0.0
          %1366 = vmatprep.subr.mxu0 0.0
          %1367 = vmatpush1.msra.mxu0 0.0
          %1368 = vmatprep.subr.mxu0 0.0
          %1369 = vmatpush1.msra.mxu0 0.0
          %1370 = vmatprep.subr.mxu0 0.0
          %1371 = vmatpush1.msra.mxu0 0.0
          %1372 = vmatprep.mubr.f32.mxu0 0.0
          %1373 = vmatmul.mubr.f32.gmra.mrb[0].mxu0 %v1189
          %v1374 = vpop.f32.mrb[0].mxu0
          %v1375 = vadd.f32 %v1306, %v1374
          %v1376 = vpop.f32.mrb[0].mxu0
          %1377 = vdwg.mxu0
          %1378 = vmatprep.subr.mxu0 0.0
          %1379 = vmatpush1.msra.mxu0 %v1285
          %1380 = vmatprep.subr.mxu0 0.0
          %1381 = vmatpush1.msra.mxu0 %v1286
          %1382 = vmatprep.subr.mxu0 0.0
          %1383 = vmatpush1.msra.mxu0 %v1287
          %1384 = vmatprep.subr.mxu0 0.0
          %1385 = vmatpush1.msra.mxu0 %v1288
          %1386 = vmatprep.subr.mxu0 0.0
          %1387 = vmatpush1.msra.mxu0 %v1289
          %1388 = vmatprep.subr.mxu0 0.0
          %1389 = vmatpush1.msra.mxu0 %v1290
          %1390 = vmatprep.subr.mxu0 0.0
          %1391 = vmatpush1.msra.mxu0 %v1291
          %1392 = vmatprep.subr.mxu0 0.0
          %1393 = vmatpush1.msra.mxu0 %v1292
          %1394 = vmatprep.subr.mxu0 0.0
          %1395 = vmatpush1.msra.mxu0 %v1293
          %1396 = vmatprep.subr.mxu0 0.0
          %1397 = vmatpush1.msra.mxu0 %v1294
          %1398 = vmatprep.subr.mxu0 0.0
          %1399 = vmatpush1.msra.mxu0 %v1295
          %1400 = vmatprep.subr.mxu0 0.0
          %1401 = vmatpush1.msra.mxu0 %v1296
          %1402 = vmatprep.subr.mxu0 0.0
          %1403 = vmatpush1.msra.mxu0 %v1297
          %1404 = vmatprep.subr.mxu0 0.0
          %1405 = vmatpush1.msra.mxu0 %v1298
          %1406 = vmatprep.subr.mxu0 0.0
          %1407 = vmatpush1.msra.mxu0 %v1299
          %1408 = vmatprep.subr.mxu0 0.0
          %1409 = vmatpush1.msra.mxu0 %v1300
          %1410 = vmatprep.subr.mxu0 0.0
          %1411 = vmatpush1.msra.mxu0 0.0
          %1412 = vmatprep.subr.mxu0 0.0
          %1413 = vmatpush1.msra.mxu0 0.0
          %1414 = vmatprep.subr.mxu0 0.0
          %1415 = vmatpush1.msra.mxu0 0.0
          %1416 = vmatprep.subr.mxu0 0.0
          %1417 = vmatpush1.msra.mxu0 0.0
          %1418 = vmatprep.subr.mxu0 0.0
          %1419 = vmatpush1.msra.mxu0 0.0
          %1420 = vmatprep.subr.mxu0 0.0
          %1421 = vmatpush1.msra.mxu0 0.0
          %1422 = vmatprep.subr.mxu0 0.0
          %1423 = vmatpush1.msra.mxu0 0.0
          %1424 = vmatprep.subr.mxu0 0.0
          %1425 = vmatpush1.msra.mxu0 0.0
          %1426 = vmatprep.subr.mxu0 0.0
          %1427 = vmatpush1.msra.mxu0 0.0
          %1428 = vmatprep.subr.mxu0 0.0
          %1429 = vmatpush1.msra.mxu0 0.0
          %1430 = vmatprep.subr.mxu0 0.0
          %1431 = vmatpush1.msra.mxu0 0.0
          %1432 = vmatprep.subr.mxu0 0.0
          %1433 = vmatpush1.msra.mxu0 0.0
          %1434 = vmatprep.subr.mxu0 0.0
          %1435 = vmatpush1.msra.mxu0 0.0
          %1436 = vmatprep.subr.mxu0 0.0
          %1437 = vmatpush1.msra.mxu0 0.0
          %1438 = vmatprep.subr.mxu0 0.0
          %1439 = vmatpush1.msra.mxu0 0.0
          %1440 = vmatprep.subr.mxu0 0.0
          %1441 = vmatpush1.msra.mxu0 0.0
          %1442 = vmatprep.mubr.f32.mxu0 0.0
          %1443 = vmatmul.mubr.f32.gmra.mrb[0].mxu0 %v1268
          %v1444 = vpop.f32.mrb[0].mxu0
          %v1445 = vadd.f32 0.0, %v1444
          %v1446 = vpop.f32.mrb[0].mxu0
          %1447 = vdwg.mxu0
          %v1448 = vadd.f32 %v1375, %v1445
          %1449 = vst [vmem:[#allocation2] sm:$0xff] %v1448
        $region148: #{tpu_custom_call.1} parent=99 // pred_fallthru
          _
        %v1450 = vld [vmem:[#allocation2] sm:$0xff]
        %v1451 = vld [vmem:[%s799] sm:$0xff]
        %v1452 = vld [vmem:[%s799 + $0x8] sm:$0xff]
        %v1453 = vld [vmem:[%s820] sm:$0xff]
        %v1454 = vld [vmem:[%s820 + $0x8] sm:$0xff]
        %v1455 = vld [vmem:[%s820 + $0x10] sm:$0xff]
        %v1456 = vld [vmem:[%s820 + $0x18] sm:$0xff]
        %v1457 = vld [vmem:[%s820 + $0x20] sm:$0xff]
        %v1458 = vld [vmem:[%s820 + $0x28] sm:$0xff]
        %v1459 = vld [vmem:[%s820 + $0x30] sm:$0xff]
        %v1460 = vld [vmem:[%s820 + $0x38] sm:$0xff]
        %v1461 = vld [vmem:[%s820 + $0x40] sm:$0xff]
        %v1462 = vld [vmem:[%s820 + $0x48] sm:$0xff]
        %v1463 = vld [vmem:[%s820 + $0x50] sm:$0xff]
        %v1464 = vld [vmem:[%s820 + $0x58] sm:$0xff]
        %v1465 = vld [vmem:[%s820 + $0x60] sm:$0xff]
        %v1466 = vld [vmem:[%s820 + $0x68] sm:$0xff]
        %v1467 = vld [vmem:[%s820 + $0x70] sm:$0xff]
        %v1468 = vld [vmem:[%s820 + $0x78] sm:$0xff]
        %v1469 = vld [vmem:[%s820 + $0x80] sm:$0xff]
        %v1470 = vld [vmem:[%s820 + $0x88] sm:$0xff]
        %v1471 = vld [vmem:[%s820 + $0x90] sm:$0xff]
        %v1472 = vld [vmem:[%s820 + $0x98] sm:$0xff]
        %v1473 = vld [vmem:[%s820 + $0xa0] sm:$0xff]
        %v1474 = vld [vmem:[%s820 + $0xa8] sm:$0xff]
        %v1475 = vld [vmem:[%s820 + $0xb0] sm:$0xff]
        %v1476 = vld [vmem:[%s820 + $0xb8] sm:$0xff]
        %v1477 = vld [vmem:[%s820 + $0xc0] sm:$0xff]
        %v1478 = vld [vmem:[%s820 + $0xc8] sm:$0xff]
        %v1479 = vld [vmem:[%s820 + $0xd0] sm:$0xff]
        %v1480 = vld [vmem:[%s820 + $0xd8] sm:$0xff]
        %v1481 = vld [vmem:[%s820 + $0xe0] sm:$0xff]
        %v1482 = vld [vmem:[%s820 + $0xe8] sm:$0xff]
        %v1483 = vld [vmem:[%s820 + $0xf0] sm:$0xff]
        %v1484 = vld [vmem:[%s820 + $0xf8] sm:$0xff]
        %v1485 = vld [vmem:[%s942] sm:$0x3]
        %v1487 = vlaneseq
        %v1488 = vshrl.u32 %v1487, 7
        %v1489 = vsub.s32 0, %v1488
        %v1490 = vrot.slane %v1485, %v1489
        %v1491 = vlaneseq
        %v1492 = vshrl.u32 %v1491, 7
        %v1493 = vsub.s32 1, %v1492
        %v1494 = vrot.slane %v1485, %v1493
        %1497 = vmatprep.subr.mxu0 %v1454
        %1498 = vmatpush1.msra.mxu0 %v1453
        %1499 = vmatprep.subr.mxu0 %v1456
        %1500 = vmatpush1.msra.mxu0 %v1455
        %1501 = vmatprep.subr.mxu0 %v1458
        %1502 = vmatpush1.msra.mxu0 %v1457
        %1503 = vmatprep.subr.mxu0 %v1460
        %1504 = vmatpush1.msra.mxu0 %v1459
        %1505 = vmatprep.subr.mxu0 %v1462
        %1506 = vmatpush1.msra.mxu0 %v1461
        %1507 = vmatprep.subr.mxu0 %v1464
        %1508 = vmatpush1.msra.mxu0 %v1463
        %1509 = vmatprep.subr.mxu0 %v1466
        %1510 = vmatpush1.msra.mxu0 %v1465
        %1511 = vmatprep.subr.mxu0 %v1468
        %1512 = vmatpush1.msra.mxu0 %v1467
        %1513 = vmatprep.subr.mxu0 %v1470
        %1514 = vmatpush1.msra.mxu0 %v1469
        %1515 = vmatprep.subr.mxu0 %v1472
        %1516 = vmatpush1.msra.mxu0 %v1471
        %1517 = vmatprep.subr.mxu0 %v1474
        %1518 = vmatpush1.msra.mxu0 %v1473
        %1519 = vmatprep.subr.mxu0 %v1476
        %1520 = vmatpush1.msra.mxu0 %v1475
        %1521 = vmatprep.subr.mxu0 %v1478
        %1522 = vmatpush1.msra.mxu0 %v1477
        %1523 = vmatprep.subr.mxu0 %v1480
        %1524 = vmatpush1.msra.mxu0 %v1479
        %1525 = vmatprep.subr.mxu0 %v1482
        %1526 = vmatpush1.msra.mxu0 %v1481
        %1527 = vmatprep.subr.mxu0 %v1484
        %1528 = vmatpush1.msra.mxu0 %v1483
        %1529 = vmatprep.subr.mxu0 0.0
        %1530 = vmatpush1.msra.mxu0 0.0
        %1531 = vmatprep.subr.mxu0 0.0
        %1532 = vmatpush1.msra.mxu0 0.0
        %1533 = vmatprep.subr.mxu0 0.0
        %1534 = vmatpush1.msra.mxu0 0.0
        %1535 = vmatprep.subr.mxu0 0.0
        %1536 = vmatpush1.msra.mxu0 0.0
        %1537 = vmatprep.subr.mxu0 0.0
        %1538 = vmatpush1.msra.mxu0 0.0
        %1539 = vmatprep.subr.mxu0 0.0
        %1540 = vmatpush1.msra.mxu0 0.0
        %1541 = vmatprep.subr.mxu0 0.0
        %1542 = vmatpush1.msra.mxu0 0.0
        %1543 = vmatprep.subr.mxu0 0.0
        %1544 = vmatpush1.msra.mxu0 0.0
        %1545 = vmatprep.subr.mxu0 0.0
        %1546 = vmatpush1.msra.mxu0 0.0
        %1547 = vmatprep.subr.mxu0 0.0
        %1548 = vmatpush1.msra.mxu0 0.0
        %1549 = vmatprep.subr.mxu0 0.0
        %1550 = vmatpush1.msra.mxu0 0.0
        %1551 = vmatprep.subr.mxu0 0.0
        %1552 = vmatpush1.msra.mxu0 0.0
        %1553 = vmatprep.subr.mxu0 0.0
        %1554 = vmatpush1.msra.mxu0 0.0
        %1555 = vmatprep.subr.mxu0 0.0
        %1556 = vmatpush1.msra.mxu0 0.0
        %1557 = vmatprep.subr.mxu0 0.0
        %1558 = vmatpush1.msra.mxu0 0.0
        %1559 = vmatprep.subr.mxu0 0.0
        %1560 = vmatpush1.msra.mxu0 0.0
        %1561 = vmatprep.mubr.f32.mxu0 0.0
        %1562 = vmatmul.mubr.f32.gmra.mrb[0].mxu0 %v1450
        %v1563 = vpop.f32.mrb[0].mxu0
        %v1564 = vadd.f32 %v1490, %v1563
        %v1565 = vpop.f32.mrb[0].mxu0
        %v1566 = vadd.f32 %v1494, %v1565
        %1567 = vdwg.mxu0
        %vm1568 = vcmp.gt.f32.partialorder %v1564, 0.0
        %vm1569 = vcmp.gt.f32.partialorder %v1566, 0.0
        %v1570 = vmul.f32 %v1564, 0.01
        %v1571 = vmul.f32 %v1566, 0.01
        %v1572 = vsel %vm1568, %v1564, %v1570
        %v1573 = vsel %vm1569, %v1566, %v1571
        %v1574 = vld [vmem:[%s829] sm:$0xff]
        %v1575 = vld [vmem:[%s829 + $0x8] sm:$0xff]
        %v1576 = vld [vmem:[%s829 + $0x10] sm:$0xff]
        %v1577 = vld [vmem:[%s829 + $0x18] sm:$0xff]
        %v1578 = vld [vmem:[%s829 + $0x20] sm:$0xff]
        %v1579 = vld [vmem:[%s829 + $0x28] sm:$0xff]
        %v1580 = vld [vmem:[%s829 + $0x30] sm:$0xff]
        %v1581 = vld [vmem:[%s829 + $0x38] sm:$0xff]
        %v1582 = vld [vmem:[%s829 + $0x40] sm:$0xff]
        %v1583 = vld [vmem:[%s829 + $0x48] sm:$0xff]
        %v1584 = vld [vmem:[%s829 + $0x50] sm:$0xff]
        %v1585 = vld [vmem:[%s829 + $0x58] sm:$0xff]
        %v1586 = vld [vmem:[%s829 + $0x60] sm:$0xff]
        %v1587 = vld [vmem:[%s829 + $0x68] sm:$0xff]
        %v1588 = vld [vmem:[%s829 + $0x70] sm:$0xff]
        %v1589 = vld [vmem:[%s829 + $0x78] sm:$0xff]
        %v1590 = vld [vmem:[%s829 + $0x80] sm:$0xff]
        %v1591 = vld [vmem:[%s829 + $0x88] sm:$0xff]
        %v1592 = vld [vmem:[%s829 + $0x90] sm:$0xff]
        %v1593 = vld [vmem:[%s829 + $0x98] sm:$0xff]
        %v1594 = vld [vmem:[%s829 + $0xa0] sm:$0xff]
        %v1595 = vld [vmem:[%s829 + $0xa8] sm:$0xff]
        %v1596 = vld [vmem:[%s829 + $0xb0] sm:$0xff]
        %v1597 = vld [vmem:[%s829 + $0xb8] sm:$0xff]
        %v1598 = vld [vmem:[%s829 + $0xc0] sm:$0xff]
        %v1599 = vld [vmem:[%s829 + $0xc8] sm:$0xff]
        %v1600 = vld [vmem:[%s829 + $0xd0] sm:$0xff]
        %v1601 = vld [vmem:[%s829 + $0xd8] sm:$0xff]
        %v1602 = vld [vmem:[%s829 + $0xe0] sm:$0xff]
        %v1603 = vld [vmem:[%s829 + $0xe8] sm:$0xff]
        %v1604 = vld [vmem:[%s829 + $0xf0] sm:$0xff]
        %v1605 = vld [vmem:[%s829 + $0xf8] sm:$0xff]
        %v1606 = vld [vmem:[%s946] sm:$0x1]
        %v1607 = vld [vmem:[%s946 + $0x1] sm:$0x1]
        %v1609 = vlaneseq
        %v1610 = vshrl.u32 %v1609, 7
        %v1611 = vsub.s32 0, %v1610
        %v1612 = vrot.slane %v1606, %v1611
        %1614 = vmatprep.subr.mxu0 0.0
        %1615 = vmatpush1.msra.mxu0 %v1574
        %1616 = vmatprep.subr.mxu0 0.0
        %1617 = vmatpush1.msra.mxu0 %v1575
        %1618 = vmatprep.subr.mxu0 0.0
        %1619 = vmatpush1.msra.mxu0 %v1576
        %1620 = vmatprep.subr.mxu0 0.0
        %1621 = vmatpush1.msra.mxu0 %v1577
        %1622 = vmatprep.subr.mxu0 0.0
        %1623 = vmatpush1.msra.mxu0 %v1578
        %1624 = vmatprep.subr.mxu0 0.0
        %1625 = vmatpush1.msra.mxu0 %v1579
        %1626 = vmatprep.subr.mxu0 0.0
        %1627 = vmatpush1.msra.mxu0 %v1580
        %1628 = vmatprep.subr.mxu0 0.0
        %1629 = vmatpush1.msra.mxu0 %v1581
        %1630 = vmatprep.subr.mxu0 0.0
        %1631 = vmatpush1.msra.mxu0 %v1582
        %1632 = vmatprep.subr.mxu0 0.0
        %1633 = vmatpush1.msra.mxu0 %v1583
        %1634 = vmatprep.subr.mxu0 0.0
        %1635 = vmatpush1.msra.mxu0 %v1584
        %1636 = vmatprep.subr.mxu0 0.0
        %1637 = vmatpush1.msra.mxu0 %v1585
        %1638 = vmatprep.subr.mxu0 0.0
        %1639 = vmatpush1.msra.mxu0 %v1586
        %1640 = vmatprep.subr.mxu0 0.0
        %1641 = vmatpush1.msra.mxu0 %v1587
        %1642 = vmatprep.subr.mxu0 0.0
        %1643 = vmatpush1.msra.mxu0 %v1588
        %1644 = vmatprep.subr.mxu0 0.0
        %1645 = vmatpush1.msra.mxu0 %v1589
        %1646 = vmatprep.subr.mxu0 0.0
        %1647 = vmatpush1.msra.mxu0 0.0
        %1648 = vmatprep.subr.mxu0 0.0
        %1649 = vmatpush1.msra.mxu0 0.0
        %1650 = vmatprep.subr.mxu0 0.0
        %1651 = vmatpush1.msra.mxu0 0.0
        %1652 = vmatprep.subr.mxu0 0.0
        %1653 = vmatpush1.msra.mxu0 0.0
        %1654 = vmatprep.subr.mxu0 0.0
        %1655 = vmatpush1.msra.mxu0 0.0
        %1656 = vmatprep.subr.mxu0 0.0
        %1657 = vmatpush1.msra.mxu0 0.0
        %1658 = vmatprep.subr.mxu0 0.0
        %1659 = vmatpush1.msra.mxu0 0.0
        %1660 = vmatprep.subr.mxu0 0.0
        %1661 = vmatpush1.msra.mxu0 0.0
        %1662 = vmatprep.subr.mxu0 0.0
        %1663 = vmatpush1.msra.mxu0 0.0
        %1664 = vmatprep.subr.mxu0 0.0
        %1665 = vmatpush1.msra.mxu0 0.0
        %1666 = vmatprep.subr.mxu0 0.0
        %1667 = vmatpush1.msra.mxu0 0.0
        %1668 = vmatprep.subr.mxu0 0.0
        %1669 = vmatpush1.msra.mxu0 0.0
        %1670 = vmatprep.subr.mxu0 0.0
        %1671 = vmatpush1.msra.mxu0 0.0
        %1672 = vmatprep.subr.mxu0 0.0
        %1673 = vmatpush1.msra.mxu0 0.0
        %1674 = vmatprep.subr.mxu0 0.0
        %1675 = vmatpush1.msra.mxu0 0.0
        %1676 = vmatprep.subr.mxu0 0.0
        %1677 = vmatpush1.msra.mxu0 0.0
        %1678 = vmatprep.mubr.f32.mxu0 0.0
        %1679 = vmatmul.mubr.f32.gmra.mrb[0].mxu0 %v1572
        %v1680 = vpop.f32.mrb[0].mxu0
        %v1681 = vadd.f32 %v1612, %v1680
        %v1682 = vpop.f32.mrb[0].mxu0
        %1683 = vdwg.mxu0
        %vm1684 = vcmp.gt.f32.partialorder %v1681, 0.0
        %v1685 = vmul.f32 %v1681, 0.01
        %v1686 = vsel %vm1684, %v1681, %v1685
        %v1688 = vlaneseq
        %v1689 = vshrl.u32 %v1688, 7
        %v1690 = vsub.s32 0, %v1689
        %v1691 = vrot.slane %v1607, %v1690
        %1693 = vmatprep.subr.mxu0 0.0
        %1694 = vmatpush1.msra.mxu0 %v1590
        %1695 = vmatprep.subr.mxu0 0.0
        %1696 = vmatpush1.msra.mxu0 %v1591
        %1697 = vmatprep.subr.mxu0 0.0
        %1698 = vmatpush1.msra.mxu0 %v1592
        %1699 = vmatprep.subr.mxu0 0.0
        %1700 = vmatpush1.msra.mxu0 %v1593
        %1701 = vmatprep.subr.mxu0 0.0
        %1702 = vmatpush1.msra.mxu0 %v1594
        %1703 = vmatprep.subr.mxu0 0.0
        %1704 = vmatpush1.msra.mxu0 %v1595
        %1705 = vmatprep.subr.mxu0 0.0
        %1706 = vmatpush1.msra.mxu0 %v1596
        %1707 = vmatprep.subr.mxu0 0.0
        %1708 = vmatpush1.msra.mxu0 %v1597
        %1709 = vmatprep.subr.mxu0 0.0
        %1710 = vmatpush1.msra.mxu0 %v1598
        %1711 = vmatprep.subr.mxu0 0.0
        %1712 = vmatpush1.msra.mxu0 %v1599
        %1713 = vmatprep.subr.mxu0 0.0
        %1714 = vmatpush1.msra.mxu0 %v1600
        %1715 = vmatprep.subr.mxu0 0.0
        %1716 = vmatpush1.msra.mxu0 %v1601
        %1717 = vmatprep.subr.mxu0 0.0
        %1718 = vmatpush1.msra.mxu0 %v1602
        %1719 = vmatprep.subr.mxu0 0.0
        %1720 = vmatpush1.msra.mxu0 %v1603
        %1721 = vmatprep.subr.mxu0 0.0
        %1722 = vmatpush1.msra.mxu0 %v1604
        %1723 = vmatprep.subr.mxu0 0.0
        %1724 = vmatpush1.msra.mxu0 %v1605
        %1725 = vmatprep.subr.mxu0 0.0
        %1726 = vmatpush1.msra.mxu0 0.0
        %1727 = vmatprep.subr.mxu0 0.0
        %1728 = vmatpush1.msra.mxu0 0.0
        %1729 = vmatprep.subr.mxu0 0.0
        %1730 = vmatpush1.msra.mxu0 0.0
        %1731 = vmatprep.subr.mxu0 0.0
        %1732 = vmatpush1.msra.mxu0 0.0
        %1733 = vmatprep.subr.mxu0 0.0
        %1734 = vmatpush1.msra.mxu0 0.0
        %1735 = vmatprep.subr.mxu0 0.0
        %1736 = vmatpush1.msra.mxu0 0.0
        %1737 = vmatprep.subr.mxu0 0.0
        %1738 = vmatpush1.msra.mxu0 0.0
        %1739 = vmatprep.subr.mxu0 0.0
        %1740 = vmatpush1.msra.mxu0 0.0
        %1741 = vmatprep.subr.mxu0 0.0
        %1742 = vmatpush1.msra.mxu0 0.0
        %1743 = vmatprep.subr.mxu0 0.0
        %1744 = vmatpush1.msra.mxu0 0.0
        %1745 = vmatprep.subr.mxu0 0.0
        %1746 = vmatpush1.msra.mxu0 0.0
        %1747 = vmatprep.subr.mxu0 0.0
        %1748 = vmatpush1.msra.mxu0 0.0
        %1749 = vmatprep.subr.mxu0 0.0
        %1750 = vmatpush1.msra.mxu0 0.0
        %1751 = vmatprep.subr.mxu0 0.0
        %1752 = vmatpush1.msra.mxu0 0.0
        %1753 = vmatprep.subr.mxu0 0.0
        %1754 = vmatpush1.msra.mxu0 0.0
        %1755 = vmatprep.subr.mxu0 0.0
        %1756 = vmatpush1.msra.mxu0 0.0
        %1757 = vmatprep.mubr.f32.mxu0 0.0
        %1758 = vmatmul.mubr.f32.gmra.mrb[0].mxu0 %v1573
        %v1759 = vpop.f32.mrb[0].mxu0
        %v1760 = vadd.f32 %v1691, %v1759
        %v1761 = vpop.f32.mrb[0].mxu0
        %1762 = vdwg.mxu0
        %vm1763 = vcmp.gt.f32.partialorder %v1760, 0.0
        %v1764 = vmul.f32 %v1760, 0.01
        %v1765 = vsel %vm1763, %v1760, %v1764
        %v1766 = vld [vmem:[%s838] sm:$0xff]
        %v1767 = vld [vmem:[%s838 + $0x8] sm:$0xff]
        %v1768 = vld [vmem:[%s838 + $0x10] sm:$0xff]
        %v1769 = vld [vmem:[%s838 + $0x18] sm:$0xff]
        %v1770 = vld [vmem:[%s838 + $0x20] sm:$0xff]
        %v1771 = vld [vmem:[%s838 + $0x28] sm:$0xff]
        %v1772 = vld [vmem:[%s838 + $0x30] sm:$0xff]
        %v1773 = vld [vmem:[%s838 + $0x38] sm:$0xff]
        %v1774 = vld [vmem:[%s838 + $0x40] sm:$0xff]
        %v1775 = vld [vmem:[%s838 + $0x48] sm:$0xff]
        %v1776 = vld [vmem:[%s838 + $0x50] sm:$0xff]
        %v1777 = vld [vmem:[%s838 + $0x58] sm:$0xff]
        %v1778 = vld [vmem:[%s838 + $0x60] sm:$0xff]
        %v1779 = vld [vmem:[%s838 + $0x68] sm:$0xff]
        %v1780 = vld [vmem:[%s838 + $0x70] sm:$0xff]
        %v1781 = vld [vmem:[%s838 + $0x78] sm:$0xff]
        %v1782 = vld [vmem:[%s838 + $0x80] sm:$0xff]
        %v1783 = vld [vmem:[%s838 + $0x88] sm:$0xff]
        %v1784 = vld [vmem:[%s838 + $0x90] sm:$0xff]
        %v1785 = vld [vmem:[%s838 + $0x98] sm:$0xff]
        %v1786 = vld [vmem:[%s838 + $0xa0] sm:$0xff]
        %v1787 = vld [vmem:[%s838 + $0xa8] sm:$0xff]
        %v1788 = vld [vmem:[%s838 + $0xb0] sm:$0xff]
        %v1789 = vld [vmem:[%s838 + $0xb8] sm:$0xff]
        %v1790 = vld [vmem:[%s838 + $0xc0] sm:$0xff]
        %v1791 = vld [vmem:[%s838 + $0xc8] sm:$0xff]
        %v1792 = vld [vmem:[%s838 + $0xd0] sm:$0xff]
        %v1793 = vld [vmem:[%s838 + $0xd8] sm:$0xff]
        %v1794 = vld [vmem:[%s838 + $0xe0] sm:$0xff]
        %v1795 = vld [vmem:[%s838 + $0xe8] sm:$0xff]
        %v1796 = vld [vmem:[%s838 + $0xf0] sm:$0xff]
        %v1797 = vld [vmem:[%s838 + $0xf8] sm:$0xff]
        %v1798 = vld [vmem:[%s950] sm:$0x1]
        %v1799 = vld [vmem:[%s950 + $0x1] sm:$0x1]
        %v1801 = vlaneseq
        %v1802 = vshrl.u32 %v1801, 7
        %v1803 = vsub.s32 0, %v1802
        %v1804 = vrot.slane %v1798, %v1803
        %1806 = vmatprep.subr.mxu0 0.0
        %1807 = vmatpush1.msra.mxu0 %v1766
        %1808 = vmatprep.subr.mxu0 0.0
        %1809 = vmatpush1.msra.mxu0 %v1767
        %1810 = vmatprep.subr.mxu0 0.0
        %1811 = vmatpush1.msra.mxu0 %v1768
        %1812 = vmatprep.subr.mxu0 0.0
        %1813 = vmatpush1.msra.mxu0 %v1769
        %1814 = vmatprep.subr.mxu0 0.0
        %1815 = vmatpush1.msra.mxu0 %v1770
        %1816 = vmatprep.subr.mxu0 0.0
        %1817 = vmatpush1.msra.mxu0 %v1771
        %1818 = vmatprep.subr.mxu0 0.0
        %1819 = vmatpush1.msra.mxu0 %v1772
        %1820 = vmatprep.subr.mxu0 0.0
        %1821 = vmatpush1.msra.mxu0 %v1773
        %1822 = vmatprep.subr.mxu0 0.0
        %1823 = vmatpush1.msra.mxu0 %v1774
        %1824 = vmatprep.subr.mxu0 0.0
        %1825 = vmatpush1.msra.mxu0 %v1775
        %1826 = vmatprep.subr.mxu0 0.0
        %1827 = vmatpush1.msra.mxu0 %v1776
        %1828 = vmatprep.subr.mxu0 0.0
        %1829 = vmatpush1.msra.mxu0 %v1777
        %1830 = vmatprep.subr.mxu0 0.0
        %1831 = vmatpush1.msra.mxu0 %v1778
        %1832 = vmatprep.subr.mxu0 0.0
        %1833 = vmatpush1.msra.mxu0 %v1779
        %1834 = vmatprep.subr.mxu0 0.0
        %1835 = vmatpush1.msra.mxu0 %v1780
        %1836 = vmatprep.subr.mxu0 0.0
        %1837 = vmatpush1.msra.mxu0 %v1781
        %1838 = vmatprep.subr.mxu0 0.0
        %1839 = vmatpush1.msra.mxu0 0.0
        %1840 = vmatprep.subr.mxu0 0.0
        %1841 = vmatpush1.msra.mxu0 0.0
        %1842 = vmatprep.subr.mxu0 0.0
        %1843 = vmatpush1.msra.mxu0 0.0
        %1844 = vmatprep.subr.mxu0 0.0
        %1845 = vmatpush1.msra.mxu0 0.0
        %1846 = vmatprep.subr.mxu0 0.0
        %1847 = vmatpush1.msra.mxu0 0.0
        %1848 = vmatprep.subr.mxu0 0.0
        %1849 = vmatpush1.msra.mxu0 0.0
        %1850 = vmatprep.subr.mxu0 0.0
        %1851 = vmatpush1.msra.mxu0 0.0
        %1852 = vmatprep.subr.mxu0 0.0
        %1853 = vmatpush1.msra.mxu0 0.0
        %1854 = vmatprep.subr.mxu0 0.0
        %1855 = vmatpush1.msra.mxu0 0.0
        %1856 = vmatprep.subr.mxu0 0.0
        %1857 = vmatpush1.msra.mxu0 0.0
        %1858 = vmatprep.subr.mxu0 0.0
        %1859 = vmatpush1.msra.mxu0 0.0
        %1860 = vmatprep.subr.mxu0 0.0
        %1861 = vmatpush1.msra.mxu0 0.0
        %1862 = vmatprep.subr.mxu0 0.0
        %1863 = vmatpush1.msra.mxu0 0.0
        %1864 = vmatprep.subr.mxu0 0.0
        %1865 = vmatpush1.msra.mxu0 0.0
        %1866 = vmatprep.subr.mxu0 0.0
        %1867 = vmatpush1.msra.mxu0 0.0
        %1868 = vmatprep.subr.mxu0 0.0
        %1869 = vmatpush1.msra.mxu0 0.0
        %1870 = vmatprep.mubr.f32.mxu0 0.0
        %1871 = vmatmul.mubr.f32.gmra.mrb[0].mxu0 %v1686
        %v1872 = vpop.f32.mrb[0].mxu0
        %v1873 = vadd.f32 %v1804, %v1872
        %v1874 = vpop.f32.mrb[0].mxu0
        %1875 = vdwg.mxu0
        %vm1876 = vcmask 64512
        %v1878 = vsel %vm1876, %v1451, 0
        %1880 = vmatprep.subr.mxu0 0.0
        %1881 = vmatpush1.msra.mxu0 %v1873
        %1882 = vmatprep.subr.mxu0 0.0
        %1883 = vmatpush1.msra.mxu0 0.0
        %1884 = vmatprep.subr.mxu0 0.0
        %1885 = vmatpush1.msra.mxu0 0.0
        %1886 = vmatprep.subr.mxu0 0.0
        %1887 = vmatpush1.msra.mxu0 0.0
        %1888 = vmatprep.subr.mxu0 0.0
        %1889 = vmatpush1.msra.mxu0 0.0
        %1890 = vmatprep.subr.mxu0 0.0
        %1891 = vmatpush1.msra.mxu0 0.0
        %1892 = vmatprep.subr.mxu0 0.0
        %1893 = vmatpush1.msra.mxu0 0.0
        %1894 = vmatprep.subr.mxu0 0.0
        %1895 = vmatpush1.msra.mxu0 0.0
        %1896 = vmatprep.subr.mxu0 0.0
        %1897 = vmatpush1.msra.mxu0 0.0
        %1898 = vmatprep.subr.mxu0 0.0
        %1899 = vmatpush1.msra.mxu0 0.0
        %1900 = vmatprep.subr.mxu0 0.0
        %1901 = vmatpush1.msra.mxu0 0.0
        %1902 = vmatprep.subr.mxu0 0.0
        %1903 = vmatpush1.msra.mxu0 0.0
        %1904 = vmatprep.subr.mxu0 0.0
        %1905 = vmatpush1.msra.mxu0 0.0
        %1906 = vmatprep.subr.mxu0 0.0
        %1907 = vmatpush1.msra.mxu0 0.0
        %1908 = vmatprep.subr.mxu0 0.0
        %1909 = vmatpush1.msra.mxu0 0.0
        %1910 = vmatprep.subr.mxu0 0.0
        %1911 = vmatpush1.msra.mxu0 0.0
        %1912 = vmatprep.subr.mxu0 0.0
        %1913 = vmatpush1.msra.mxu0 0.0
        %1914 = vmatprep.subr.mxu0 0.0
        %1915 = vmatpush1.msra.mxu0 0.0
        %1916 = vmatprep.subr.mxu0 0.0
        %1917 = vmatpush1.msra.mxu0 0.0
        %1918 = vmatprep.subr.mxu0 0.0
        %1919 = vmatpush1.msra.mxu0 0.0
        %1920 = vmatprep.subr.mxu0 0.0
        %1921 = vmatpush1.msra.mxu0 0.0
        %1922 = vmatprep.subr.mxu0 0.0
        %1923 = vmatpush1.msra.mxu0 0.0
        %1924 = vmatprep.subr.mxu0 0.0
        %1925 = vmatpush1.msra.mxu0 0.0
        %1926 = vmatprep.subr.mxu0 0.0
        %1927 = vmatpush1.msra.mxu0 0.0
        %1928 = vmatprep.subr.mxu0 0.0
        %1929 = vmatpush1.msra.mxu0 0.0
        %1930 = vmatprep.subr.mxu0 0.0
        %1931 = vmatpush1.msra.mxu0 0.0
        %1932 = vmatprep.subr.mxu0 0.0
        %1933 = vmatpush1.msra.mxu0 0.0
        %1934 = vmatprep.subr.mxu0 0.0
        %1935 = vmatpush1.msra.mxu0 0.0
        %1936 = vmatprep.subr.mxu0 0.0
        %1937 = vmatpush1.msra.mxu0 0.0
        %1938 = vmatprep.subr.mxu0 0.0
        %1939 = vmatpush1.msra.mxu0 0.0
        %1940 = vmatprep.subr.mxu0 0.0
        %1941 = vmatpush1.msra.mxu0 0.0
        %1942 = vmatprep.subr.mxu0 0.0
        %1943 = vmatpush1.msra.mxu0 0.0
        %1944 = vmatprep.mubr.f32.mxu0 0.0
        %1945 = vmatmul.mubr.f32.gmra.mrb[0].mxu0 %v1878
        %v1946 = vpop.f32.mrb[0].mxu0
        %v1947 = vadd.f32 0.0, %v1946
        %v1948 = vpop.f32.mrb[0].mxu0
        %1949 = vdwg.mxu0
        %v1950 = vadd.f32 %v1450, %v1947
        %v1952 = vlaneseq
        %v1953 = vshrl.u32 %v1952, 7
        %v1954 = vsub.s32 0, %v1953
        %v1955 = vrot.slane %v1799, %v1954
        %1957 = vmatprep.subr.mxu0 0.0
        %1958 = vmatpush1.msra.mxu0 %v1782
        %1959 = vmatprep.subr.mxu0 0.0
        %1960 = vmatpush1.msra.mxu0 %v1783
        %1961 = vmatprep.subr.mxu0 0.0
        %1962 = vmatpush1.msra.mxu0 %v1784
        %1963 = vmatprep.subr.mxu0 0.0
        %1964 = vmatpush1.msra.mxu0 %v1785
        %1965 = vmatprep.subr.mxu0 0.0
        %1966 = vmatpush1.msra.mxu0 %v1786
        %1967 = vmatprep.subr.mxu0 0.0
        %1968 = vmatpush1.msra.mxu0 %v1787
        %1969 = vmatprep.subr.mxu0 0.0
        %1970 = vmatpush1.msra.mxu0 %v1788
        %1971 = vmatprep.subr.mxu0 0.0
        %1972 = vmatpush1.msra.mxu0 %v1789
        %1973 = vmatprep.subr.mxu0 0.0
        %1974 = vmatpush1.msra.mxu0 %v1790
        %1975 = vmatprep.subr.mxu0 0.0
        %1976 = vmatpush1.msra.mxu0 %v1791
        %1977 = vmatprep.subr.mxu0 0.0
        %1978 = vmatpush1.msra.mxu0 %v1792
        %1979 = vmatprep.subr.mxu0 0.0
        %1980 = vmatpush1.msra.mxu0 %v1793
        %1981 = vmatprep.subr.mxu0 0.0
        %1982 = vmatpush1.msra.mxu0 %v1794
        %1983 = vmatprep.subr.mxu0 0.0
        %1984 = vmatpush1.msra.mxu0 %v1795
        %1985 = vmatprep.subr.mxu0 0.0
        %1986 = vmatpush1.msra.mxu0 %v1796
        %1987 = vmatprep.subr.mxu0 0.0
        %1988 = vmatpush1.msra.mxu0 %v1797
        %1989 = vmatprep.subr.mxu0 0.0
        %1990 = vmatpush1.msra.mxu0 0.0
        %1991 = vmatprep.subr.mxu0 0.0
        %1992 = vmatpush1.msra.mxu0 0.0
        %1993 = vmatprep.subr.mxu0 0.0
        %1994 = vmatpush1.msra.mxu0 0.0
        %1995 = vmatprep.subr.mxu0 0.0
        %1996 = vmatpush1.msra.mxu0 0.0
        %1997 = vmatprep.subr.mxu0 0.0
        %1998 = vmatpush1.msra.mxu0 0.0
        %1999 = vmatprep.subr.mxu0 0.0
        %2000 = vmatpush1.msra.mxu0 0.0
        %2001 = vmatprep.subr.mxu0 0.0
        %2002 = vmatpush1.msra.mxu0 0.0
        %2003 = vmatprep.subr.mxu0 0.0
        %2004 = vmatpush1.msra.mxu0 0.0
        %2005 = vmatprep.subr.mxu0 0.0
        %2006 = vmatpush1.msra.mxu0 0.0
        %2007 = vmatprep.subr.mxu0 0.0
        %2008 = vmatpush1.msra.mxu0 0.0
        %2009 = vmatprep.subr.mxu0 0.0
        %2010 = vmatpush1.msra.mxu0 0.0
        %2011 = vmatprep.subr.mxu0 0.0
        %2012 = vmatpush1.msra.mxu0 0.0
        %2013 = vmatprep.subr.mxu0 0.0
        %2014 = vmatpush1.msra.mxu0 0.0
        %2015 = vmatprep.subr.mxu0 0.0
        %2016 = vmatpush1.msra.mxu0 0.0
        %2017 = vmatprep.subr.mxu0 0.0
        %2018 = vmatpush1.msra.mxu0 0.0
        %2019 = vmatprep.subr.mxu0 0.0
        %2020 = vmatpush1.msra.mxu0 0.0
        %2021 = vmatprep.mubr.f32.mxu0 0.0
        %2022 = vmatmul.mubr.f32.gmra.mrb[0].mxu0 %v1765
        %v2023 = vpop.f32.mrb[0].mxu0
        %v2024 = vadd.f32 %v1955, %v2023
        %v2025 = vpop.f32.mrb[0].mxu0
        %2026 = vdwg.mxu0
        %v2028 = vsel %vm1876, %v1452, 0
        %2030 = vmatprep.subr.mxu0 0.0
        %2031 = vmatpush1.msra.mxu0 %v2024
        %2032 = vmatprep.subr.mxu0 0.0
        %2033 = vmatpush1.msra.mxu0 0.0
        %2034 = vmatprep.subr.mxu0 0.0
        %2035 = vmatpush1.msra.mxu0 0.0
        %2036 = vmatprep.subr.mxu0 0.0
        %2037 = vmatpush1.msra.mxu0 0.0
        %2038 = vmatprep.subr.mxu0 0.0
        %2039 = vmatpush1.msra.mxu0 0.0
        %2040 = vmatprep.subr.mxu0 0.0
        %2041 = vmatpush1.msra.mxu0 0.0
        %2042 = vmatprep.subr.mxu0 0.0
        %2043 = vmatpush1.msra.mxu0 0.0
        %2044 = vmatprep.subr.mxu0 0.0
        %2045 = vmatpush1.msra.mxu0 0.0
        %2046 = vmatprep.subr.mxu0 0.0
        %2047 = vmatpush1.msra.mxu0 0.0
        %2048 = vmatprep.subr.mxu0 0.0
        %2049 = vmatpush1.msra.mxu0 0.0
        %2050 = vmatprep.subr.mxu0 0.0
        %2051 = vmatpush1.msra.mxu0 0.0
        %2052 = vmatprep.subr.mxu0 0.0
        %2053 = vmatpush1.msra.mxu0 0.0
        %2054 = vmatprep.subr.mxu0 0.0
        %2055 = vmatpush1.msra.mxu0 0.0
        %2056 = vmatprep.subr.mxu0 0.0
        %2057 = vmatpush1.msra.mxu0 0.0
        %2058 = vmatprep.subr.mxu0 0.0
        %2059 = vmatpush1.msra.mxu0 0.0
        %2060 = vmatprep.subr.mxu0 0.0
        %2061 = vmatpush1.msra.mxu0 0.0
        %2062 = vmatprep.subr.mxu0 0.0
        %2063 = vmatpush1.msra.mxu0 0.0
        %2064 = vmatprep.subr.mxu0 0.0
        %2065 = vmatpush1.msra.mxu0 0.0
        %2066 = vmatprep.subr.mxu0 0.0
        %2067 = vmatpush1.msra.mxu0 0.0
        %2068 = vmatprep.subr.mxu0 0.0
        %2069 = vmatpush1.msra.mxu0 0.0
        %2070 = vmatprep.subr.mxu0 0.0
        %2071 = vmatpush1.msra.mxu0 0.0
        %2072 = vmatprep.subr.mxu0 0.0
        %2073 = vmatpush1.msra.mxu0 0.0
        %2074 = vmatprep.subr.mxu0 0.0
        %2075 = vmatpush1.msra.mxu0 0.0
        %2076 = vmatprep.subr.mxu0 0.0
        %2077 = vmatpush1.msra.mxu0 0.0
        %2078 = vmatprep.subr.mxu0 0.0
        %2079 = vmatpush1.msra.mxu0 0.0
        %2080 = vmatprep.subr.mxu0 0.0
        %2081 = vmatpush1.msra.mxu0 0.0
        %2082 = vmatprep.subr.mxu0 0.0
        %2083 = vmatpush1.msra.mxu0 0.0
        %2084 = vmatprep.subr.mxu0 0.0
        %2085 = vmatpush1.msra.mxu0 0.0
        %2086 = vmatprep.subr.mxu0 0.0
        %2087 = vmatpush1.msra.mxu0 0.0
        %2088 = vmatprep.subr.mxu0 0.0
        %2089 = vmatpush1.msra.mxu0 0.0
        %2090 = vmatprep.subr.mxu0 0.0
        %2091 = vmatpush1.msra.mxu0 0.0
        %2092 = vmatprep.subr.mxu0 0.0
        %2093 = vmatpush1.msra.mxu0 0.0
        %2094 = vmatprep.mubr.f32.mxu0 0.0
        %2095 = vmatmul.mubr.f32.gmra.mrb[0].mxu0 %v2028
        %v2096 = vpop.f32.mrb[0].mxu0
        %v2097 = vadd.f32 0.0, %v2096
        %v2098 = vpop.f32.mrb[0].mxu0
        %2099 = vdwg.mxu0
        %v2100 = vadd.f32 %v1950, %v2097
        %2101 = vst [vmem:[#allocation2] sm:$0xff] %v2100
        %p2102 = scmp.eq.s32.totalorder %s53, 1
        // Predicated region
        $region149: #{tpu_custom_call.1} parent=99 // pred_check
          %p2103 = pneg %p2102
        $region150: #{tpu_custom_call.1} parent=99 // pred_check_branch
          %2105 = sbr.rel (%p2103) target = $region152
        $region151: #{tpu_custom_call.1} parent=99 // pred_region
          %v2106 = vld [vmem:[#allocation2] sm:$0xff]
          %v2107 = vld [vmem:[#allocation17] sm:$0xff]
          %v2108 = vld [vmem:[#allocation17 + $0x8] sm:$0xff]
          %v2109 = vld [vmem:[#allocation17 + $0x10] sm:$0xff]
          %v2110 = vld [vmem:[#allocation17 + $0x18] sm:$0xff]
          %v2111 = vld [vmem:[#allocation17 + $0x20] sm:$0xff]
          %v2112 = vld [vmem:[#allocation17 + $0x28] sm:$0xff]
          %v2113 = vld [vmem:[#allocation17 + $0x30] sm:$0xff]
          %v2114 = vld [vmem:[#allocation17 + $0x38] sm:$0xff]
          %v2115 = vld [vmem:[#allocation17 + $0x40] sm:$0xff]
          %v2116 = vld [vmem:[#allocation17 + $0x48] sm:$0xff]
          %v2117 = vld [vmem:[#allocation17 + $0x50] sm:$0xff]
          %v2118 = vld [vmem:[#allocation17 + $0x58] sm:$0xff]
          %v2119 = vld [vmem:[#allocation17 + $0x60] sm:$0xff]
          %v2120 = vld [vmem:[#allocation17 + $0x68] sm:$0xff]
          %v2121 = vld [vmem:[#allocation17 + $0x70] sm:$0xff]
          %v2122 = vld [vmem:[#allocation17 + $0x78] sm:$0xff]
          %v2123 = vld [vmem:[%s15] sm:$0x1]
          %v2125 = vlaneseq
          %v2126 = vshrl.u32 %v2125, 7
          %v2127 = vsub.s32 0, %v2126
          %v2128 = vrot.slane %v2123, %v2127
          %2130 = vmatprep.subr.mxu0 0.0
          %2131 = vmatpush1.msra.mxu0 %v2107
          %2132 = vmatprep.subr.mxu0 0.0
          %2133 = vmatpush1.msra.mxu0 %v2108
          %2134 = vmatprep.subr.mxu0 0.0
          %2135 = vmatpush1.msra.mxu0 %v2109
          %2136 = vmatprep.subr.mxu0 0.0
          %2137 = vmatpush1.msra.mxu0 %v2110
          %2138 = vmatprep.subr.mxu0 0.0
          %2139 = vmatpush1.msra.mxu0 %v2111
          %2140 = vmatprep.subr.mxu0 0.0
          %2141 = vmatpush1.msra.mxu0 %v2112
          %2142 = vmatprep.subr.mxu0 0.0
          %2143 = vmatpush1.msra.mxu0 %v2113
          %2144 = vmatprep.subr.mxu0 0.0
          %2145 = vmatpush1.msra.mxu0 %v2114
          %2146 = vmatprep.subr.mxu0 0.0
          %2147 = vmatpush1.msra.mxu0 %v2115
          %2148 = vmatprep.subr.mxu0 0.0
          %2149 = vmatpush1.msra.mxu0 %v2116
          %2150 = vmatprep.subr.mxu0 0.0
          %2151 = vmatpush1.msra.mxu0 %v2117
          %2152 = vmatprep.subr.mxu0 0.0
          %2153 = vmatpush1.msra.mxu0 %v2118
          %2154 = vmatprep.subr.mxu0 0.0
          %2155 = vmatpush1.msra.mxu0 %v2119
          %2156 = vmatprep.subr.mxu0 0.0
          %2157 = vmatpush1.msra.mxu0 %v2120
          %2158 = vmatprep.subr.mxu0 0.0
          %2159 = vmatpush1.msra.mxu0 %v2121
          %2160 = vmatprep.subr.mxu0 0.0
          %2161 = vmatpush1.msra.mxu0 %v2122
          %2162 = vmatprep.subr.mxu0 0.0
          %2163 = vmatpush1.msra.mxu0 0.0
          %2164 = vmatprep.subr.mxu0 0.0
          %2165 = vmatpush1.msra.mxu0 0.0
          %2166 = vmatprep.subr.mxu0 0.0
          %2167 = vmatpush1.msra.mxu0 0.0
          %2168 = vmatprep.subr.mxu0 0.0
          %2169 = vmatpush1.msra.mxu0 0.0
          %2170 = vmatprep.subr.mxu0 0.0
          %2171 = vmatpush1.msra.mxu0 0.0
          %2172 = vmatprep.subr.mxu0 0.0
          %2173 = vmatpush1.msra.mxu0 0.0
          %2174 = vmatprep.subr.mxu0 0.0
          %2175 = vmatpush1.msra.mxu0 0.0
          %2176 = vmatprep.subr.mxu0 0.0
          %2177 = vmatpush1.msra.mxu0 0.0
          %2178 = vmatprep.subr.mxu0 0.0
          %2179 = vmatpush1.msra.mxu0 0.0
          %2180 = vmatprep.subr.mxu0 0.0
          %2181 = vmatpush1.msra.mxu0 0.0
          %2182 = vmatprep.subr.mxu0 0.0
          %2183 = vmatpush1.msra.mxu0 0.0
          %2184 = vmatprep.subr.mxu0 0.0
          %2185 = vmatpush1.msra.mxu0 0.0
          %2186 = vmatprep.subr.mxu0 0.0
          %2187 = vmatpush1.msra.mxu0 0.0
          %2188 = vmatprep.subr.mxu0 0.0
          %2189 = vmatpush1.msra.mxu0 0.0
          %2190 = vmatprep.subr.mxu0 0.0
          %2191 = vmatpush1.msra.mxu0 0.0
          %2192 = vmatprep.subr.mxu0 0.0
          %2193 = vmatpush1.msra.mxu0 0.0
          %2194 = vmatprep.mubr.f32.mxu0 0.0
          %2195 = vmatmul.mubr.f32.gmra.mrb[0].mxu0 %v2106
          %v2196 = vpop.f32.mrb[0].mxu0
          %v2197 = vadd.f32 %v2128, %v2196
          %v2198 = vpop.f32.mrb[0].mxu0
          %2199 = vdwg.mxu0
          %vm2200 = vcmp.gt.f32.partialorder %v2197, 0.0
          %v2201 = vmul.f32 %v2197, 0.01
          %v2202 = vsel %vm2200, %v2197, %v2201
          %v2203 = vld [vmem:[#allocation18] sm:$0xff]
          %v2204 = vld [vmem:[#allocation18 + $0x8] sm:$0xff]
          %v2205 = vld [vmem:[#allocation18 + $0x10] sm:$0xff]
          %v2206 = vld [vmem:[#allocation18 + $0x18] sm:$0xff]
          %v2207 = vld [vmem:[#allocation18 + $0x20] sm:$0xff]
          %v2208 = vld [vmem:[#allocation18 + $0x28] sm:$0xff]
          %v2209 = vld [vmem:[#allocation18 + $0x30] sm:$0xff]
          %v2210 = vld [vmem:[#allocation18 + $0x38] sm:$0xff]
          %v2211 = vld [vmem:[#allocation18 + $0x40] sm:$0xff]
          %v2212 = vld [vmem:[#allocation18 + $0x48] sm:$0xff]
          %v2213 = vld [vmem:[#allocation18 + $0x50] sm:$0xff]
          %v2214 = vld [vmem:[#allocation18 + $0x58] sm:$0xff]
          %v2215 = vld [vmem:[#allocation18 + $0x60] sm:$0xff]
          %v2216 = vld [vmem:[#allocation18 + $0x68] sm:$0xff]
          %v2217 = vld [vmem:[#allocation18 + $0x70] sm:$0xff]
          %v2218 = vld [vmem:[#allocation18 + $0x78] sm:$0xff]
          %v2219 = vld [vmem:[%s17] sm:$0x1]
          %v2221 = vlaneseq
          %v2222 = vshrl.u32 %v2221, 7
          %v2223 = vsub.s32 0, %v2222
          %v2224 = vrot.slane %v2219, %v2223
          %2226 = vmatprep.subr.mxu0 0.0
          %2227 = vmatpush1.msra.mxu0 %v2203
          %2228 = vmatprep.subr.mxu0 0.0
          %2229 = vmatpush1.msra.mxu0 %v2204
          %2230 = vmatprep.subr.mxu0 0.0
          %2231 = vmatpush1.msra.mxu0 %v2205
          %2232 = vmatprep.subr.mxu0 0.0
          %2233 = vmatpush1.msra.mxu0 %v2206
          %2234 = vmatprep.subr.mxu0 0.0
          %2235 = vmatpush1.msra.mxu0 %v2207
          %2236 = vmatprep.subr.mxu0 0.0
          %2237 = vmatpush1.msra.mxu0 %v2208
          %2238 = vmatprep.subr.mxu0 0.0
          %2239 = vmatpush1.msra.mxu0 %v2209
          %2240 = vmatprep.subr.mxu0 0.0
          %2241 = vmatpush1.msra.mxu0 %v2210
          %2242 = vmatprep.subr.mxu0 0.0
          %2243 = vmatpush1.msra.mxu0 %v2211
          %2244 = vmatprep.subr.mxu0 0.0
          %2245 = vmatpush1.msra.mxu0 %v2212
          %2246 = vmatprep.subr.mxu0 0.0
          %2247 = vmatpush1.msra.mxu0 %v2213
          %2248 = vmatprep.subr.mxu0 0.0
          %2249 = vmatpush1.msra.mxu0 %v2214
          %2250 = vmatprep.subr.mxu0 0.0
          %2251 = vmatpush1.msra.mxu0 %v2215
          %2252 = vmatprep.subr.mxu0 0.0
          %2253 = vmatpush1.msra.mxu0 %v2216
          %2254 = vmatprep.subr.mxu0 0.0
          %2255 = vmatpush1.msra.mxu0 %v2217
          %2256 = vmatprep.subr.mxu0 0.0
          %2257 = vmatpush1.msra.mxu0 %v2218
          %2258 = vmatprep.subr.mxu0 0.0
          %2259 = vmatpush1.msra.mxu0 0.0
          %2260 = vmatprep.subr.mxu0 0.0
          %2261 = vmatpush1.msra.mxu0 0.0
          %2262 = vmatprep.subr.mxu0 0.0
          %2263 = vmatpush1.msra.mxu0 0.0
          %2264 = vmatprep.subr.mxu0 0.0
          %2265 = vmatpush1.msra.mxu0 0.0
          %2266 = vmatprep.subr.mxu0 0.0
          %2267 = vmatpush1.msra.mxu0 0.0
          %2268 = vmatprep.subr.mxu0 0.0
          %2269 = vmatpush1.msra.mxu0 0.0
          %2270 = vmatprep.subr.mxu0 0.0
          %2271 = vmatpush1.msra.mxu0 0.0
          %2272 = vmatprep.subr.mxu0 0.0
          %2273 = vmatpush1.msra.mxu0 0.0
          %2274 = vmatprep.subr.mxu0 0.0
          %2275 = vmatpush1.msra.mxu0 0.0
          %2276 = vmatprep.subr.mxu0 0.0
          %2277 = vmatpush1.msra.mxu0 0.0
          %2278 = vmatprep.subr.mxu0 0.0
          %2279 = vmatpush1.msra.mxu0 0.0
          %2280 = vmatprep.subr.mxu0 0.0
          %2281 = vmatpush1.msra.mxu0 0.0
          %2282 = vmatprep.subr.mxu0 0.0
          %2283 = vmatpush1.msra.mxu0 0.0
          %2284 = vmatprep.subr.mxu0 0.0
          %2285 = vmatpush1.msra.mxu0 0.0
          %2286 = vmatprep.subr.mxu0 0.0
          %2287 = vmatpush1.msra.mxu0 0.0
          %2288 = vmatprep.subr.mxu0 0.0
          %2289 = vmatpush1.msra.mxu0 0.0
          %2290 = vmatprep.mubr.f32.mxu0 0.0
          %2291 = vmatmul.mubr.f32.gmra.mrb[0].mxu0 %v2202
          %v2292 = vpop.f32.mrb[0].mxu0
          %v2293 = vadd.f32 %v2224, %v2292
          %v2294 = vpop.f32.mrb[0].mxu0
          %2295 = vdwg.mxu0
          %vm2296 = vcmp.gt.f32.partialorder %v2293, 0.0
          %v2297 = vmul.f32 %v2293, 0.01
          %v2298 = vsel %vm2296, %v2293, %v2297
          %v2299 = vld [vmem:[#allocation20] sm:$0xff]
          %v2300 = vld [vmem:[#allocation20 + $0x8] sm:$0xff]
          %v2301 = vld [vmem:[#allocation20 + $0x10] sm:$0xff]
          %v2302 = vld [vmem:[#allocation20 + $0x18] sm:$0xff]
          %v2303 = vld [vmem:[#allocation20 + $0x20] sm:$0xff]
          %v2304 = vld [vmem:[#allocation20 + $0x28] sm:$0xff]
          %v2305 = vld [vmem:[#allocation20 + $0x30] sm:$0xff]
          %v2306 = vld [vmem:[#allocation20 + $0x38] sm:$0xff]
          %v2307 = vld [vmem:[#allocation20 + $0x40] sm:$0xff]
          %v2308 = vld [vmem:[#allocation20 + $0x48] sm:$0xff]
          %v2309 = vld [vmem:[#allocation20 + $0x50] sm:$0xff]
          %v2310 = vld [vmem:[#allocation20 + $0x58] sm:$0xff]
          %v2311 = vld [vmem:[#allocation20 + $0x60] sm:$0xff]
          %v2312 = vld [vmem:[#allocation20 + $0x68] sm:$0xff]
          %v2313 = vld [vmem:[#allocation20 + $0x70] sm:$0xff]
          %v2314 = vld [vmem:[#allocation20 + $0x78] sm:$0xff]
          %v2315 = vld [vmem:[%s19] sm:$0x1]
          %v2317 = vlaneseq
          %v2318 = vshrl.u32 %v2317, 7
          %v2319 = vsub.s32 0, %v2318
          %v2320 = vrot.slane %v2315, %v2319
          %2322 = vmatprep.subr.mxu0 0.0
          %2323 = vmatpush1.msra.mxu0 %v2299
          %2324 = vmatprep.subr.mxu0 0.0
          %2325 = vmatpush1.msra.mxu0 %v2300
          %2326 = vmatprep.subr.mxu0 0.0
          %2327 = vmatpush1.msra.mxu0 %v2301
          %2328 = vmatprep.subr.mxu0 0.0
          %2329 = vmatpush1.msra.mxu0 %v2302
          %2330 = vmatprep.subr.mxu0 0.0
          %2331 = vmatpush1.msra.mxu0 %v2303
          %2332 = vmatprep.subr.mxu0 0.0
          %2333 = vmatpush1.msra.mxu0 %v2304
          %2334 = vmatprep.subr.mxu0 0.0
          %2335 = vmatpush1.msra.mxu0 %v2305
          %2336 = vmatprep.subr.mxu0 0.0
          %2337 = vmatpush1.msra.mxu0 %v2306
          %2338 = vmatprep.subr.mxu0 0.0
          %2339 = vmatpush1.msra.mxu0 %v2307
          %2340 = vmatprep.subr.mxu0 0.0
          %2341 = vmatpush1.msra.mxu0 %v2308
          %2342 = vmatprep.subr.mxu0 0.0
          %2343 = vmatpush1.msra.mxu0 %v2309
          %2344 = vmatprep.subr.mxu0 0.0
          %2345 = vmatpush1.msra.mxu0 %v2310
          %2346 = vmatprep.subr.mxu0 0.0
          %2347 = vmatpush1.msra.mxu0 %v2311
          %2348 = vmatprep.subr.mxu0 0.0
          %2349 = vmatpush1.msra.mxu0 %v2312
          %2350 = vmatprep.subr.mxu0 0.0
          %2351 = vmatpush1.msra.mxu0 %v2313
          %2352 = vmatprep.subr.mxu0 0.0
          %2353 = vmatpush1.msra.mxu0 %v2314
          %2354 = vmatprep.subr.mxu0 0.0
          %2355 = vmatpush1.msra.mxu0 0.0
          %2356 = vmatprep.subr.mxu0 0.0
          %2357 = vmatpush1.msra.mxu0 0.0
          %2358 = vmatprep.subr.mxu0 0.0
          %2359 = vmatpush1.msra.mxu0 0.0
          %2360 = vmatprep.subr.mxu0 0.0
          %2361 = vmatpush1.msra.mxu0 0.0
          %2362 = vmatprep.subr.mxu0 0.0
          %2363 = vmatpush1.msra.mxu0 0.0
          %2364 = vmatprep.subr.mxu0 0.0
          %2365 = vmatpush1.msra.mxu0 0.0
          %2366 = vmatprep.subr.mxu0 0.0
          %2367 = vmatpush1.msra.mxu0 0.0
          %2368 = vmatprep.subr.mxu0 0.0
          %2369 = vmatpush1.msra.mxu0 0.0
          %2370 = vmatprep.subr.mxu0 0.0
          %2371 = vmatpush1.msra.mxu0 0.0
          %2372 = vmatprep.subr.mxu0 0.0
          %2373 = vmatpush1.msra.mxu0 0.0
          %2374 = vmatprep.subr.mxu0 0.0
          %2375 = vmatpush1.msra.mxu0 0.0
          %2376 = vmatprep.subr.mxu0 0.0
          %2377 = vmatpush1.msra.mxu0 0.0
          %2378 = vmatprep.subr.mxu0 0.0
          %2379 = vmatpush1.msra.mxu0 0.0
          %2380 = vmatprep.subr.mxu0 0.0
          %2381 = vmatpush1.msra.mxu0 0.0
          %2382 = vmatprep.subr.mxu0 0.0
          %2383 = vmatpush1.msra.mxu0 0.0
          %2384 = vmatprep.subr.mxu0 0.0
          %2385 = vmatpush1.msra.mxu0 0.0
          %2386 = vmatprep.mubr.f32.mxu0 0.0
          %2387 = vmatmul.mubr.f32.gmra.mrb[0].mxu0 %v2298
          %v2388 = vpop.f32.mrb[0].mxu0
          %v2389 = vadd.f32 %v2320, %v2388
          %v2390 = vpop.f32.mrb[0].mxu0
          %2391 = vdwg.mxu0
          %2392 = vst [vmem:[%s938] sm:$0xff] %v2389
        $region152: #{tpu_custom_call.1} parent=99 // pred_fallthru
          _
        %s2393 = sand.u32 %s528, 1
        %s2394 = scalar_lea.sflag [#allocation5], %s2393
        %s2395 = sand.u32 %s528, 1
        %s2396 = smul.addr %s2395, 8
        %s2397 = scalar_lea.vmem [#allocation21], %s2396
        // Predicated region
        $region153: #{tpu_custom_call.1} parent=99 // pred_check
          %p2398 = pneg %p538
        $region154: #{tpu_custom_call.1} parent=99 // pred_check_branch
          %2400 = sbr.rel (%p2398) target = $region156
        $region155: #{tpu_custom_call.1} parent=99 // pred_region
          %s2402 = ssub.s32 128, 128
          %2403 = vsyncadd %s2394, %s2402
          %s2404 = smul.addr %s52, 128
          %s2405 = scalar_lea.hbm %s20, %s2404
          %s2407 = sshll.u32 %s2397, 4
          %s2408 = int_to_ptr.vmem [resolvable:$true] %s2407
          %2410 = dma.vmem_to_hbm [thread:$0]  %s2408, 128, %s2405, %s2394
        $region156: #{tpu_custom_call.1} parent=99 // pred_fallthru
          _
      $region100: #{tpu_custom_call.1} parent=5 // pred_fallthru
        _
      %p2411 = scmp.le.s32.totalorder 2, %s43
      // Predicated region
      $region157: #{tpu_custom_call.1} parent=5 // pred_check
        %p2412 = pneg %p2411
      $region158: #{tpu_custom_call.1} parent=5 // pred_check_branch
        %2414 = sbr.rel (%p2412) target = $region160
      $region159: #{tpu_custom_call.1} parent=5 // pred_region
        %s2415 = ssub.s32 %s43, 2
        // Predicated region
        $region161: #{tpu_custom_call.1} parent=159 // pred_check
          %p2416 = pneg %p544
        $region162: #{tpu_custom_call.1} parent=159 // pred_check_branch
          %2418 = sbr.rel (%p2416) target = $region164
        $region163: #{tpu_custom_call.1} parent=159 // pred_region
          %s2419 = sand.u32 %s529, 1
          %s2420 = scalar_lea.sflag [#allocation5], %s2419
          %s2421 = sand.u32 %s529, 1
          %s2422 = smul.addr %s2421, 8
          %s2423 = scalar_lea.vmem [#allocation21], %s2422
          %2424 = dma.done %s2420, 128
        $region164: #{tpu_custom_call.1} parent=159 // pred_fallthru
          _
      $region160: #{tpu_custom_call.1} parent=5 // pred_fallthru
        _
    $region6: #{tpu_custom_call.1} parent=1 // loop_footer
      %s47 = sadd.s32 1, %s43
    $region7: #{tpu_custom_call.1} parent=1 // loop_footer_branch
      %42 = sbr.rel target = $region3
    $region8: #{tpu_custom_call.1} parent=1 // loop_exit
      _
    %2425 = vsyncpa [#allocation4], 1
    %s2426 = scalar_lea.sflag [#allocation4], 1
    %2427 = vsyncpa %s2426, 1
    %2428 = vsyncpa [#allocation7], 1
    %s2429 = scalar_lea.sflag [#allocation7], 1
    %2430 = vsyncpa %s2429, 1
    %2431 = vsyncpa [#allocation10], 1
    %2432 = vsyncpa [#allocation13], 1
    %s2433 = scalar_lea.sflag [#allocation13], 1
    %2434 = vsyncpa %s2433, 1
    %2435 = vsyncpa [#allocation16], 1
    %s2436 = scalar_lea.sflag [#allocation16], 1
    %2437 = vsyncpa %s2436, 1
    %2438 = vsyncpa [#allocation19], 1
    %2439 = vsyncpa [#allocation5], 1
    %s2440 = scalar_lea.sflag [#allocation5], 1
    %2441 = vsyncpa %s2440, 1

</llo_original>
